<compile_context>
chip_gen: v7x
topology: tpu7x:2x2x1
jax: 0.10.0
libtpu: 0.0.40
codegen_flags: <defaults>
</compile_context>

<pallas_src>
import math
import functools

import jax
import jax.numpy as jnp
from jax.experimental import pallas as pl
from jax.experimental.pallas import tpu as pltpu


def _encoder_layer_kernel(
    x_ref, wq_ref, bq_ref, wk_ref, bk_ref, wv_ref, bv_ref, wo_ref, bo_ref,
    w1_ref, b1_ref, w2_ref, b2_ref, g1_ref, be1_ref, g2_ref, be2_ref,
    cos_ref, sinn_ref, sinp_ref, o_ref,
    *, tile_b, seq_len, d_model, nhead, eps
):
    hd = d_model // nhead            # head dim
    h2 = hd // 2                     # rotary half
    rows = tile_b * seq_len          # flattened M dimension for the dense matmuls

    x = x_ref[...].astype(jnp.float32).reshape(rows, d_model)       # (R, D) f32
    x_bf = x.astype(jnp.bfloat16)

    # ---- QKV projections, M = TB*S rows, bf16 inputs / f32 accumulation ----
    q = jnp.dot(x_bf, wq_ref[...], preferred_element_type=jnp.float32) + bq_ref[...]
    k = jnp.dot(x_bf, wk_ref[...], preferred_element_type=jnp.float32) + bk_ref[...]
    v = jnp.dot(x_bf, wv_ref[...], preferred_element_type=jnp.float32) + bv_ref[...]

    # ---- full-width rotary (rotate_half convention) ----
    # cos_f:  cos tiled to every column of every head
    # sinn_f: -sin on the first half of each head, 0 elsewhere (pairs with roll(+h2))
    # sinp_f: +sin on the second half of each head, 0 elsewhere (pairs with roll(-h2))
    cos_f = cos_ref[...]
    sin_n = sinn_ref[...]
    sin_p = sinp_ref[...]

    def rope(t):
        fwd = jnp.roll(t, h2, axis=-1)    # fwd[:, j] = t[:, j - h2]  (x1 at 2nd-half cols)
        bwd = jnp.roll(t, -h2, axis=-1)   # bwd[:, j] = t[:, j + h2]  (x2 at 1st-half cols)
        return t * cos_f + bwd * sin_n + fwd * sin_p

    q_rot = rope(q).astype(jnp.bfloat16)  # 1/sqrt(hd) already folded into Wq / bq
    k_rot = rope(k).astype(jnp.bfloat16)
    v_bf = v.astype(jnp.bfloat16)

    # ---- attention: one K=hd score dot per (batch row, head); ctx concatenated so the
    #      output projection is a single (R,D)@(D,D) matmul ----
    dn = (((1,), (1,)), ((), ()))         # q @ k^T without materializing a transpose
    ctx_rows = []
    for b in range(tile_b):
        r0 = b * seq_len
        head_ctx = []
        for h in range(nhead):
            c0 = h * hd
            qh = q_rot[r0:r0 + seq_len, c0:c0 + hd]
            kh = k_rot[r0:r0 + seq_len, c0:c0 + hd]
            vh = v_bf[r0:r0 + seq_len, c0:c0 + hd]
            s = jax.lax.dot_general(qh, kh, dn, preferred_element_type=jnp.float32)
            s = s - jnp.max(s, axis=-1, keepdims=True)
            p = jnp.exp(s)
            p = p * pl.reciprocal(jnp.sum(p, axis=-1, keepdims=True), approx=True)
            head_ctx.append(
                jnp.dot(p.astype(jnp.bfloat16), vh, preferred_element_type=jnp.float32))
        ctx_rows.append(jnp.concatenate(head_ctx, axis=-1))          # (S, D)
    ctx = jnp.concatenate(ctx_rows, axis=0).astype(jnp.bfloat16)     # (R, D)

    attn = jnp.dot(ctx, wo_ref[...], preferred_element_type=jnp.float32) + bo_ref[...]

    # ---- residual + LayerNorm1 (f32) ----
    h1 = x + attn
    mu = jnp.mean(h1, axis=-1, keepdims=True)
    var = jnp.mean(jnp.square(h1 - mu), axis=-1, keepdims=True)
    h1 = (h1 - mu) * jax.lax.rsqrt(var + eps) * g1_ref[...] + be1_ref[...]

    # ---- feedforward (relu; dropout = identity at inference) ----
    ff = jnp.dot(h1.astype(jnp.bfloat16), w1_ref[...],
                 preferred_element_type=jnp.float32) + b1_ref[...]
    ff = jnp.maximum(ff, 0.0)
    ff = jnp.dot(ff.astype(jnp.bfloat16), w2_ref[...],
                 preferred_element_type=jnp.float32) + b2_ref[...]

    # ---- residual + LayerNorm2 (f32) ----
    h2o = h1 + ff
    mu2 = jnp.mean(h2o, axis=-1, keepdims=True)
    var2 = jnp.mean(jnp.square(h2o - mu2), axis=-1, keepdims=True)
    out = (h2o - mu2) * jax.lax.rsqrt(var2 + eps) * g2_ref[...] + be2_ref[...]

    o_ref[...] = out.reshape(tile_b, seq_len, d_model).astype(o_ref.dtype)


def _vmem_limit_bytes(d_model, dff, seq_len, tile_b, nhead):
    weights = 2 * (4 * d_model * d_model + 2 * d_model * dff)      # bf16 weights
    tables = 4 * 3 * tile_b * seq_len * d_model                    # f32 rope tables
    io = 4 * 2 * tile_b * seq_len * d_model                        # src + out blocks
    acts = 4 * tile_b * seq_len * (6 * d_model + 2 * dff) + 4 * nhead * seq_len * seq_len
    total = 2 * (weights + tables + io) + 2 * acts + (8 << 20)     # double-buffer + slack
    return int(min(max(total, 32 << 20), 100 << 20))


def rotary_transformer_encoder_layer(src, params, *, nhead, tile_b=1, eps=1e-5):
    """src: (B, S, D) float32. params: dict of f32 weights, Linear weights stored
    (in, out) so the kernel computes x @ W + b; biases (1, out); LN params (1, D)."""
    B, S, D = src.shape
    assert B % tile_b == 0 and D % nhead == 0 and (D // nhead) % 2 == 0
    dff = params["w1"].shape[1]
    hd = D // nhead
    h2 = hd // 2
    scale = 1.0 / math.sqrt(hd)

    # rotary tables, pre-tiled to full width (TB*S, D) so the in-kernel rotation is a
    # handful of full-vreg elementwise ops.
    pos = jnp.arange(S, dtype=jnp.float32)
    inv_freq = 1.0 / (10000.0 ** (jnp.arange(0, hd, 2, dtype=jnp.float32) / hd))
    freqs = pos[:, None] * inv_freq[None, :]                        # (S, h2)
    sin = jnp.sin(freqs)
    cos = jnp.cos(freqs)
    cos_head = jnp.concatenate([cos, cos], axis=-1)                 # (S, hd)
    sin_head = jnp.concatenate([sin, sin], axis=-1)
    first_half = (jnp.arange(hd) < h2)[None, :]
    sin_neg_head = jnp.where(first_half, -sin_head, 0.0)
    sin_pos_head = jnp.where(first_half, 0.0, sin_head)

    def full_tbl(t):                                                # (S, hd) -> (TB*S, D)
        return jnp.tile(jnp.tile(t, (1, nhead)), (tile_b, 1))

    cos_t = full_tbl(cos_head)
    sinn_t = full_tbl(sin_neg_head)
    sinp_t = full_tbl(sin_pos_head)

    # bf16 weights for the MXU; fold 1/sqrt(hd) into the Q projection (rotary is linear).
    bf = lambda w: w.astype(jnp.bfloat16)
    wq = bf(params["wq"] * scale)
    bq = params["bq"] * scale
    wk, wv, wo = bf(params["wk"]), bf(params["wv"]), bf(params["wo"])
    w1, w2 = bf(params["w1"]), bf(params["w2"])

    kernel = functools.partial(
        _encoder_layer_kernel,
        tile_b=tile_b, seq_len=S, d_model=D, nhead=nhead, eps=eps)

    def rep(shape):
        # grid-invariant (replicated) block. For production d_model these specs should be
        # single-buffered (pipeline_mode=pl.Buffered(1)) and/or dff tiled by a grid axis.
        return pl.BlockSpec(shape, lambda b: tuple(0 for _ in shape))

    in_specs = [
        pl.BlockSpec((tile_b, S, D), lambda b: (b, 0, 0)),          # src batch tile
        rep((D, D)), rep((1, D)),                                   # Wq, bq (pre-scaled)
        rep((D, D)), rep((1, D)),                                   # Wk, bk
        rep((D, D)), rep((1, D)),                                   # Wv, bv
        rep((D, D)), rep((1, D)),                                   # Wo, bo
        rep((D, dff)), rep((1, dff)),                               # W1, b1
        rep((dff, D)), rep((1, D)),                                 # W2, b2
        rep((1, D)), rep((1, D)),                                   # LN1 gamma, beta
        rep((1, D)), rep((1, D)),                                   # LN2 gamma, beta
        rep((tile_b * S, D)), rep((tile_b * S, D)), rep((tile_b * S, D)),  # cos, -sin, +sin
    ]

    return pl.pallas_call(
        kernel,
        out_shape=jax.ShapeDtypeStruct((B, S, D), src.dtype),
        grid=(B // tile_b,),
        in_specs=in_specs,
        out_specs=pl.BlockSpec((tile_b, S, D), lambda b: (b, 0, 0)),
        compiler_params=pltpu.CompilerParams(
            dimension_semantics=("parallel",),
            vmem_limit_bytes=_vmem_limit_bytes(D, dff, S, tile_b, nhead)),
    )(
        src,
        wq, bq, wk, params["bk"], wv, params["bv"], wo, params["bo"],
        w1, params["b1"], w2, params["b2"],
        params["g1"], params["beta1"], params["g2"], params["beta2"],
        cos_t, sinn_t, sinp_t,
    )


# ----------------------------- pure-JAX reference -----------------------------
def reference_forward(src, params, nhead, eps=1e-5):
    B, S, D = src.shape
    hd = D // nhead
    h2 = hd // 2
    pos = jnp.arange(S, dtype=jnp.float32)
    inv_freq = 1.0 / (10000.0 ** (jnp.arange(0, hd, 2, dtype=jnp.float32) / hd))
    fr = pos[:, None] * inv_freq[None, :]
    sin = jnp.sin(fr)[None, :, None, :]
    cos = jnp.cos(fr)[None, :, None, :]

    def rope(x):                                   # (B, S, H, hd), rotate_half convention
        x1, x2 = x[..., :h2], x[..., h2:]
        return jnp.concatenate([x1 * cos - x2 * sin, x2 * cos + x1 * sin], axis=-1)

    q = (src @ params["wq"] + params["bq"]).reshape(B, S, nhead, hd)
    k = (src @ params["wk"] + params["bk"]).reshape(B, S, nhead, hd)
    v = (src @ params["wv"] + params["bv"]).reshape(B, S, nhead, hd)
    s = jnp.einsum("bqhd,bkhd->bhqk", rope(q), rope(k)) / math.sqrt(hd)
    p = jax.nn.softmax(s, axis=-1)
    ctx = jnp.einsum("bhqk,bkhd->bqhd", p, v).reshape(B, S, D)
    attn = ctx @ params["wo"] + params["bo"]

    def ln(x, g, b):
        mu = jnp.mean(x, -1, keepdims=True)
        var = jnp.mean((x - mu) ** 2, -1, keepdims=True)
        return (x - mu) * jax.lax.rsqrt(var + eps) * g + b

    h1 = ln(src + attn, params["g1"], params["beta1"])
    ff = jnp.maximum(h1 @ params["w1"] + params["b1"], 0.0) @ params["w2"] + params["b2"]
    return ln(h1 + ff, params["g2"], params["beta2"])


def _xavier_uniform(key, fan_in, fan_out, gain=1.0):
    limit = gain * math.sqrt(6.0 / (fan_in + fan_out))
    return jax.random.uniform(key, (fan_in, fan_out), jnp.float32, -limit, limit)


def make_params(key, d_model, nhead, dim_feedforward):
    ks = jax.random.split(key, 8)
    relu_gain = math.sqrt(2.0)
    z = lambda n: jnp.zeros((1, n), jnp.float32)
    return {
        "wq": _xavier_uniform(ks[0], d_model, d_model), "bq": z(d_model),
        "wk": _xavier_uniform(ks[1], d_model, d_model), "bk": z(d_model),
        "wv": _xavier_uniform(ks[2], d_model, d_model), "bv": z(d_model),
        "wo": _xavier_uniform(ks[3], d_model, d_model), "bo": z(d_model),
        "w1": _xavier_uniform(ks[4], d_model, dim_feedforward, gain=relu_gain),
        "b1": z(dim_feedforward),
        "w2": _xavier_uniform(ks[5], dim_feedforward, d_model),
        "b2": z(d_model),
        "g1": jnp.ones((1, d_model), jnp.float32), "beta1": z(d_model),
        "g2": jnp.ones((1, d_model), jnp.float32), "beta2": z(d_model),
    }


if __name__ == "__main__":
    B, S, D = 4, 8, 32
    NHEAD = 4
    DFF = 64

    key = jax.random.PRNGKey(0)
    k_src, k_par = jax.random.split(key)
    src = jax.random.normal(k_src, (B, S, D), jnp.float32)
    params = make_params(k_par, D, NHEAD, DFF)

    # tile_b=2: grid has 2 parallel steps (v7x megacore) and the dense matmuls see M=16.
    out = rotary_transformer_encoder_layer(src, params, nhead=NHEAD, tile_b=2)
    out = jax.block_until_ready(out)

    assert out.shape == (B, S, D), out.shape
    assert bool(jnp.all(jnp.isfinite(out)))

    # loose tolerance: kernel uses bf16 MXU inputs, reference is pure f32
    ref = reference_forward(src, params, NHEAD)
    max_err = float(jnp.max(jnp.abs(out - ref)))
    assert max_err < 0.2, max_err

    # TODO(synk): training-mode dropout (RNG) of the PyTorch module is not reproduced
    # (inference: dropout = identity); rotary assumed rotate_half (GPT-NeoX) pairing.
    print("KERNEL_OK")
</pallas_src>

<mosaic_0001>
module attributes {stable_mosaic.version = 11 : i64} {
  func.func @_encoder_layer_kernel(%arg0: i32, %arg1: memref<2x8x32xf32, #tpu.memory_space<vmem>>, %arg2: memref<32x32xbf16, #tpu.memory_space<vmem>>, %arg3: memref<1x32xf32, #tpu.memory_space<vmem>>, %arg4: memref<32x32xbf16, #tpu.memory_space<vmem>>, %arg5: memref<1x32xf32, #tpu.memory_space<vmem>>, %arg6: memref<32x32xbf16, #tpu.memory_space<vmem>>, %arg7: memref<1x32xf32, #tpu.memory_space<vmem>>, %arg8: memref<32x32xbf16, #tpu.memory_space<vmem>>, %arg9: memref<1x32xf32, #tpu.memory_space<vmem>>, %arg10: memref<32x64xbf16, #tpu.memory_space<vmem>>, %arg11: memref<1x64xf32, #tpu.memory_space<vmem>>, %arg12: memref<64x32xbf16, #tpu.memory_space<vmem>>, %arg13: memref<1x32xf32, #tpu.memory_space<vmem>>, %arg14: memref<1x32xf32, #tpu.memory_space<vmem>>, %arg15: memref<1x32xf32, #tpu.memory_space<vmem>>, %arg16: memref<1x32xf32, #tpu.memory_space<vmem>>, %arg17: memref<1x32xf32, #tpu.memory_space<vmem>>, %arg18: memref<16x32xf32, #tpu.memory_space<vmem>>, %arg19: memref<16x32xf32, #tpu.memory_space<vmem>>, %arg20: memref<16x32xf32, #tpu.memory_space<vmem>>, %arg21: memref<2x8x32xf32, #tpu.memory_space<vmem>>) attributes {dimension_semantics = [#tpu.dimension_semantics<parallel>], iteration_bounds = array<i64: 2>, scalar_prefetch = 0 : i64, scratch_operands = 0 : i64, tpu.core_type = #tpu.core_type<tc>, window_params = [{transform_indices = @transform_0, window_bounds = array<i64: 2, 8, 32>}, {pipeline_mode = #tpu.pipeline_mode<synchronous>, transform_indices = @transform_1, window_bounds = array<i64: 32, 32>}, {pipeline_mode = #tpu.pipeline_mode<synchronous>, transform_indices = @transform_2, window_bounds = array<i64: 1, 32>}, {pipeline_mode = #tpu.pipeline_mode<synchronous>, transform_indices = @transform_3, window_bounds = array<i64: 32, 32>}, {pipeline_mode = #tpu.pipeline_mode<synchronous>, transform_indices = @transform_4, window_bounds = array<i64: 1, 32>}, {pipeline_mode = #tpu.pipeline_mode<synchronous>, transform_indices = @transform_5, window_bounds = array<i64: 32, 32>}, {pipeline_mode = #tpu.pipeline_mode<synchronous>, transform_indices = @transform_6, window_bounds = array<i64: 1, 32>}, {pipeline_mode = #tpu.pipeline_mode<synchronous>, transform_indices = @transform_7, window_bounds = array<i64: 32, 32>}, {pipeline_mode = #tpu.pipeline_mode<synchronous>, transform_indices = @transform_8, window_bounds = array<i64: 1, 32>}, {pipeline_mode = #tpu.pipeline_mode<synchronous>, transform_indices = @transform_9, window_bounds = array<i64: 32, 64>}, {pipeline_mode = #tpu.pipeline_mode<synchronous>, transform_indices = @transform_10, window_bounds = array<i64: 1, 64>}, {pipeline_mode = #tpu.pipeline_mode<synchronous>, transform_indices = @transform_11, window_bounds = array<i64: 64, 32>}, {pipeline_mode = #tpu.pipeline_mode<synchronous>, transform_indices = @transform_12, window_bounds = array<i64: 1, 32>}, {pipeline_mode = #tpu.pipeline_mode<synchronous>, transform_indices = @transform_13, window_bounds = array<i64: 1, 32>}, {pipeline_mode = #tpu.pipeline_mode<synchronous>, transform_indices = @transform_14, window_bounds = array<i64: 1, 32>}, {pipeline_mode = #tpu.pipeline_mode<synchronous>, transform_indices = @transform_15, window_bounds = array<i64: 1, 32>}, {pipeline_mode = #tpu.pipeline_mode<synchronous>, transform_indices = @transform_16, window_bounds = array<i64: 1, 32>}, {pipeline_mode = #tpu.pipeline_mode<synchronous>, transform_indices = @transform_17, window_bounds = array<i64: 16, 32>}, {pipeline_mode = #tpu.pipeline_mode<synchronous>, transform_indices = @transform_18, window_bounds = array<i64: 16, 32>}, {pipeline_mode = #tpu.pipeline_mode<synchronous>, transform_indices = @transform_19, window_bounds = array<i64: 16, 32>}, {transform_indices = @transform_20, window_bounds = array<i64: 2, 8, 32>}]} {
    %c0 = arith.constant 0 : index
    %c0_0 = arith.constant 0 : index
    %c0_1 = arith.constant 0 : index
    %0 = vector.load %arg1[%c0, %c0_0, %c0_1] : memref<2x8x32xf32, #tpu.memory_space<vmem>>, vector<2x8x32xf32>
    %1 = vector.shape_cast %0 : vector<2x8x32xf32> to vector<16x32xf32>
    %2 = arith.truncf %1 : vector<16x32xf32> to vector<16x32xbf16>
    %c0_2 = arith.constant 0 : index
    %c0_3 = arith.constant 0 : index
    %3 = vector.load %arg2[%c0_2, %c0_3] : memref<32x32xbf16, #tpu.memory_space<vmem>>, vector<32x32xbf16>
    %cst = arith.constant dense<0.000000e+00> : vector<16x32xf32>
    %4 = tpu.matmul %2, %3, %cst {dimension_numbers = #tpu.dot_dimension_numbers<[1], [0], [0], [1], [0, 0, 1, 1], [], []>} : vector<16x32xbf16>, vector<32x32xbf16>, vector<16x32xf32> -> vector<16x32xf32>
    %c0_4 = arith.constant 0 : index
    %c0_5 = arith.constant 0 : index
    %5 = vector.load %arg3[%c0_4, %c0_5] : memref<1x32xf32, #tpu.memory_space<vmem>>, vector<1x32xf32>
    %6 = vector.broadcast %5 : vector<1x32xf32> to vector<16x32xf32>
    %7 = arith.addf %4, %6 : vector<16x32xf32>
    %c0_6 = arith.constant 0 : index
    %c0_7 = arith.constant 0 : index
    %8 = vector.load %arg4[%c0_6, %c0_7] : memref<32x32xbf16, #tpu.memory_space<vmem>>, vector<32x32xbf16>
    %cst_8 = arith.constant dense<0.000000e+00> : vector<16x32xf32>
    %9 = tpu.matmul %2, %8, %cst_8 {dimension_numbers = #tpu.dot_dimension_numbers<[1], [0], [0], [1], [0, 0, 1, 1], [], []>} : vector<16x32xbf16>, vector<32x32xbf16>, vector<16x32xf32> -> vector<16x32xf32>
    %c0_9 = arith.constant 0 : index
    %c0_10 = arith.constant 0 : index
    %10 = vector.load %arg5[%c0_9, %c0_10] : memref<1x32xf32, #tpu.memory_space<vmem>>, vector<1x32xf32>
    %11 = vector.broadcast %10 : vector<1x32xf32> to vector<16x32xf32>
    %12 = arith.addf %9, %11 : vector<16x32xf32>
    %c0_11 = arith.constant 0 : index
    %c0_12 = arith.constant 0 : index
    %13 = vector.load %arg6[%c0_11, %c0_12] : memref<32x32xbf16, #tpu.memory_space<vmem>>, vector<32x32xbf16>
    %cst_13 = arith.constant dense<0.000000e+00> : vector<16x32xf32>
    %14 = tpu.matmul %2, %13, %cst_13 {dimension_numbers = #tpu.dot_dimension_numbers<[1], [0], [0], [1], [0, 0, 1, 1], [], []>} : vector<16x32xbf16>, vector<32x32xbf16>, vector<16x32xf32> -> vector<16x32xf32>
    %c0_14 = arith.constant 0 : index
    %c0_15 = arith.constant 0 : index
    %15 = vector.load %arg7[%c0_14, %c0_15] : memref<1x32xf32, #tpu.memory_space<vmem>>, vector<1x32xf32>
    %16 = vector.broadcast %15 : vector<1x32xf32> to vector<16x32xf32>
    %17 = arith.addf %14, %16 : vector<16x32xf32>
    %c0_16 = arith.constant 0 : index
    %c0_17 = arith.constant 0 : index
    %18 = vector.load %arg18[%c0_16, %c0_17] : memref<16x32xf32, #tpu.memory_space<vmem>>, vector<16x32xf32>
    %c0_18 = arith.constant 0 : index
    %c0_19 = arith.constant 0 : index
    %19 = vector.load %arg19[%c0_18, %c0_19] : memref<16x32xf32, #tpu.memory_space<vmem>>, vector<16x32xf32>
    %c0_20 = arith.constant 0 : index
    %c0_21 = arith.constant 0 : index
    %20 = vector.load %arg20[%c0_20, %c0_21] : memref<16x32xf32, #tpu.memory_space<vmem>>, vector<16x32xf32>
    %21 = vector.extract_strided_slice %7 {offsets = [0, 28], sizes = [16, 4], strides = [1, 1]} : vector<16x32xf32> to vector<16x4xf32>
    %22 = vector.extract_strided_slice %7 {offsets = [0, 0], sizes = [16, 28], strides = [1, 1]} : vector<16x32xf32> to vector<16x28xf32>
    %23 = tpu.concatenate %21, %22 in 1 : vector<16x4xf32>, vector<16x28xf32> -> vector<16x32xf32>
    %24 = vector.extract_strided_slice %7 {offsets = [0, 4], sizes = [16, 28], strides = [1, 1]} : vector<16x32xf32> to vector<16x28xf32>
    %25 = vector.extract_strided_slice %7 {offsets = [0, 0], sizes = [16, 4], strides = [1, 1]} : vector<16x32xf32> to vector<16x4xf32>
    %26 = tpu.concatenate %24, %25 in 1 : vector<16x28xf32>, vector<16x4xf32> -> vector<16x32xf32>
    %27 = arith.mulf %7, %18 : vector<16x32xf32>
    %28 = arith.mulf %26, %19 : vector<16x32xf32>
    %29 = arith.addf %27, %28 : vector<16x32xf32>
    %30 = arith.mulf %23, %20 : vector<16x32xf32>
    %31 = arith.addf %29, %30 : vector<16x32xf32>
    %32 = arith.truncf %31 : vector<16x32xf32> to vector<16x32xbf16>
    %33 = vector.extract_strided_slice %12 {offsets = [0, 28], sizes = [16, 4], strides = [1, 1]} : vector<16x32xf32> to vector<16x4xf32>
    %34 = vector.extract_strided_slice %12 {offsets = [0, 0], sizes = [16, 28], strides = [1, 1]} : vector<16x32xf32> to vector<16x28xf32>
    %35 = tpu.concatenate %33, %34 in 1 : vector<16x4xf32>, vector<16x28xf32> -> vector<16x32xf32>
    %36 = vector.extract_strided_slice %12 {offsets = [0, 4], sizes = [16, 28], strides = [1, 1]} : vector<16x32xf32> to vector<16x28xf32>
    %37 = vector.extract_strided_slice %12 {offsets = [0, 0], sizes = [16, 4], strides = [1, 1]} : vector<16x32xf32> to vector<16x4xf32>
    %38 = tpu.concatenate %36, %37 in 1 : vector<16x28xf32>, vector<16x4xf32> -> vector<16x32xf32>
    %39 = arith.mulf %12, %18 : vector<16x32xf32>
    %40 = arith.mulf %38, %19 : vector<16x32xf32>
    %41 = arith.addf %39, %40 : vector<16x32xf32>
    %42 = arith.mulf %35, %20 : vector<16x32xf32>
    %43 = arith.addf %41, %42 : vector<16x32xf32>
    %44 = arith.truncf %43 : vector<16x32xf32> to vector<16x32xbf16>
    %45 = arith.truncf %17 : vector<16x32xf32> to vector<16x32xbf16>
    %46 = vector.extract_strided_slice %32 {offsets = [0, 0], sizes = [8, 8], strides = [1, 1]} : vector<16x32xbf16> to vector<8x8xbf16>
    %47 = vector.extract_strided_slice %44 {offsets = [0, 0], sizes = [8, 8], strides = [1, 1]} : vector<16x32xbf16> to vector<8x8xbf16>
    %48 = vector.extract_strided_slice %45 {offsets = [0, 0], sizes = [8, 8], strides = [1, 1]} : vector<16x32xbf16> to vector<8x8xbf16>
    %cst_22 = arith.constant dense<0.000000e+00> : vector<8x8xf32>
    %49 = tpu.matmul %46, %47, %cst_22 {dimension_numbers = #tpu.dot_dimension_numbers<[1], [1], [0], [0], [0, 0, 1, 0], [], []>} : vector<8x8xbf16>, vector<8x8xbf16>, vector<8x8xf32> -> vector<8x8xf32>
    %cst_23 = arith.constant dense<0xFF800000> : vector<8xf32>
    %50 = vector.multi_reduction <maximumf>, %49, %cst_23 [1] : vector<8x8xf32> to vector<8xf32>
    %51 = vector.shape_cast %50 : vector<8xf32> to vector<8x1xf32>
    %52 = vector.broadcast %51 : vector<8x1xf32> to vector<8x8xf32>
    %53 = arith.subf %49, %52 : vector<8x8xf32>
    %54 = math.exp %53 : vector<8x8xf32>
    %cst_24 = arith.constant dense<0.000000e+00> : vector<8xf32>
    %55 = vector.multi_reduction <add>, %54, %cst_24 [1] : vector<8x8xf32> to vector<8xf32>
    %56 = vector.shape_cast %55 : vector<8xf32> to vector<8x1xf32>
    %57 = tpu.reciprocal %56 {approx = true} : vector<8x1xf32> -> vector<8x1xf32>
    %58 = vector.broadcast %57 : vector<8x1xf32> to vector<8x8xf32>
    %59 = arith.mulf %54, %58 : vector<8x8xf32>
    %60 = arith.truncf %59 : vector<8x8xf32> to vector<8x8xbf16>
    %cst_25 = arith.constant dense<0.000000e+00> : vector<8x8xf32>
    %61 = tpu.matmul %60, %48, %cst_25 {dimension_numbers = #tpu.dot_dimension_numbers<[1], [0], [0], [1], [0, 0, 1, 1], [], []>} : vector<8x8xbf16>, vector<8x8xbf16>, vector<8x8xf32> -> vector<8x8xf32>
    %62 = vector.extract_strided_slice %32 {offsets = [0, 8], sizes = [8, 8], strides = [1, 1]} : vector<16x32xbf16> to vector<8x8xbf16>
    %63 = vector.extract_strided_slice %44 {offsets = [0, 8], sizes = [8, 8], strides = [1, 1]} : vector<16x32xbf16> to vector<8x8xbf16>
    %64 = vector.extract_strided_slice %45 {offsets = [0, 8], sizes = [8, 8], strides = [1, 1]} : vector<16x32xbf16> to vector<8x8xbf16>
    %cst_26 = arith.constant dense<0.000000e+00> : vector<8x8xf32>
    %65 = tpu.matmul %62, %63, %cst_26 {dimension_numbers = #tpu.dot_dimension_numbers<[1], [1], [0], [0], [0, 0, 1, 0], [], []>} : vector<8x8xbf16>, vector<8x8xbf16>, vector<8x8xf32> -> vector<8x8xf32>
    %cst_27 = arith.constant dense<0xFF800000> : vector<8xf32>
    %66 = vector.multi_reduction <maximumf>, %65, %cst_27 [1] : vector<8x8xf32> to vector<8xf32>
    %67 = vector.shape_cast %66 : vector<8xf32> to vector<8x1xf32>
    %68 = vector.broadcast %67 : vector<8x1xf32> to vector<8x8xf32>
    %69 = arith.subf %65, %68 : vector<8x8xf32>
    %70 = math.exp %69 : vector<8x8xf32>
    %cst_28 = arith.constant dense<0.000000e+00> : vector<8xf32>
    %71 = vector.multi_reduction <add>, %70, %cst_28 [1] : vector<8x8xf32> to vector<8xf32>
    %72 = vector.shape_cast %71 : vector<8xf32> to vector<8x1xf32>
    %73 = tpu.reciprocal %72 {approx = true} : vector<8x1xf32> -> vector<8x1xf32>
    %74 = vector.broadcast %73 : vector<8x1xf32> to vector<8x8xf32>
    %75 = arith.mulf %70, %74 : vector<8x8xf32>
    %76 = arith.truncf %75 : vector<8x8xf32> to vector<8x8xbf16>
    %cst_29 = arith.constant dense<0.000000e+00> : vector<8x8xf32>
    %77 = tpu.matmul %76, %64, %cst_29 {dimension_numbers = #tpu.dot_dimension_numbers<[1], [0], [0], [1], [0, 0, 1, 1], [], []>} : vector<8x8xbf16>, vector<8x8xbf16>, vector<8x8xf32> -> vector<8x8xf32>
    %78 = vector.extract_strided_slice %32 {offsets = [0, 16], sizes = [8, 8], strides = [1, 1]} : vector<16x32xbf16> to vector<8x8xbf16>
    %79 = vector.extract_strided_slice %44 {offsets = [0, 16], sizes = [8, 8], strides = [1, 1]} : vector<16x32xbf16> to vector<8x8xbf16>
    %80 = vector.extract_strided_slice %45 {offsets = [0, 16], sizes = [8, 8], strides = [1, 1]} : vector<16x32xbf16> to vector<8x8xbf16>
    %cst_30 = arith.constant dense<0.000000e+00> : vector<8x8xf32>
    %81 = tpu.matmul %78, %79, %cst_30 {dimension_numbers = #tpu.dot_dimension_numbers<[1], [1], [0], [0], [0, 0, 1, 0], [], []>} : vector<8x8xbf16>, vector<8x8xbf16>, vector<8x8xf32> -> vector<8x8xf32>
    %cst_31 = arith.constant dense<0xFF800000> : vector<8xf32>
    %82 = vector.multi_reduction <maximumf>, %81, %cst_31 [1] : vector<8x8xf32> to vector<8xf32>
    %83 = vector.shape_cast %82 : vector<8xf32> to vector<8x1xf32>
    %84 = vector.broadcast %83 : vector<8x1xf32> to vector<8x8xf32>
    %85 = arith.subf %81, %84 : vector<8x8xf32>
    %86 = math.exp %85 : vector<8x8xf32>
    %cst_32 = arith.constant dense<0.000000e+00> : vector<8xf32>
    %87 = vector.multi_reduction <add>, %86, %cst_32 [1] : vector<8x8xf32> to vector<8xf32>
    %88 = vector.shape_cast %87 : vector<8xf32> to vector<8x1xf32>
    %89 = tpu.reciprocal %88 {approx = true} : vector<8x1xf32> -> vector<8x1xf32>
    %90 = vector.broadcast %89 : vector<8x1xf32> to vector<8x8xf32>
    %91 = arith.mulf %86, %90 : vector<8x8xf32>
    %92 = arith.truncf %91 : vector<8x8xf32> to vector<8x8xbf16>
    %cst_33 = arith.constant dense<0.000000e+00> : vector<8x8xf32>
    %93 = tpu.matmul %92, %80, %cst_33 {dimension_numbers = #tpu.dot_dimension_numbers<[1], [0], [0], [1], [0, 0, 1, 1], [], []>} : vector<8x8xbf16>, vector<8x8xbf16>, vector<8x8xf32> -> vector<8x8xf32>
    %94 = vector.extract_strided_slice %32 {offsets = [0, 24], sizes = [8, 8], strides = [1, 1]} : vector<16x32xbf16> to vector<8x8xbf16>
    %95 = vector.extract_strided_slice %44 {offsets = [0, 24], sizes = [8, 8], strides = [1, 1]} : vector<16x32xbf16> to vector<8x8xbf16>
    %96 = vector.extract_strided_slice %45 {offsets = [0, 24], sizes = [8, 8], strides = [1, 1]} : vector<16x32xbf16> to vector<8x8xbf16>
    %cst_34 = arith.constant dense<0.000000e+00> : vector<8x8xf32>
    %97 = tpu.matmul %94, %95, %cst_34 {dimension_numbers = #tpu.dot_dimension_numbers<[1], [1], [0], [0], [0, 0, 1, 0], [], []>} : vector<8x8xbf16>, vector<8x8xbf16>, vector<8x8xf32> -> vector<8x8xf32>
    %cst_35 = arith.constant dense<0xFF800000> : vector<8xf32>
    %98 = vector.multi_reduction <maximumf>, %97, %cst_35 [1] : vector<8x8xf32> to vector<8xf32>
    %99 = vector.shape_cast %98 : vector<8xf32> to vector<8x1xf32>
    %100 = vector.broadcast %99 : vector<8x1xf32> to vector<8x8xf32>
    %101 = arith.subf %97, %100 : vector<8x8xf32>
    %102 = math.exp %101 : vector<8x8xf32>
    %cst_36 = arith.constant dense<0.000000e+00> : vector<8xf32>
    %103 = vector.multi_reduction <add>, %102, %cst_36 [1] : vector<8x8xf32> to vector<8xf32>
    %104 = vector.shape_cast %103 : vector<8xf32> to vector<8x1xf32>
    %105 = tpu.reciprocal %104 {approx = true} : vector<8x1xf32> -> vector<8x1xf32>
    %106 = vector.broadcast %105 : vector<8x1xf32> to vector<8x8xf32>
    %107 = arith.mulf %102, %106 : vector<8x8xf32>
    %108 = arith.truncf %107 : vector<8x8xf32> to vector<8x8xbf16>
    %cst_37 = arith.constant dense<0.000000e+00> : vector<8x8xf32>
    %109 = tpu.matmul %108, %96, %cst_37 {dimension_numbers = #tpu.dot_dimension_numbers<[1], [0], [0], [1], [0, 0, 1, 1], [], []>} : vector<8x8xbf16>, vector<8x8xbf16>, vector<8x8xf32> -> vector<8x8xf32>
    %110 = tpu.concatenate %61, %77, %93, %109 in 1 : vector<8x8xf32>, vector<8x8xf32>, vector<8x8xf32>, vector<8x8xf32> -> vector<8x32xf32>
    %111 = vector.extract_strided_slice %32 {offsets = [8, 0], sizes = [8, 8], strides = [1, 1]} : vector<16x32xbf16> to vector<8x8xbf16>
    %112 = vector.extract_strided_slice %44 {offsets = [8, 0], sizes = [8, 8], strides = [1, 1]} : vector<16x32xbf16> to vector<8x8xbf16>
    %113 = vector.extract_strided_slice %45 {offsets = [8, 0], sizes = [8, 8], strides = [1, 1]} : vector<16x32xbf16> to vector<8x8xbf16>
    %cst_38 = arith.constant dense<0.000000e+00> : vector<8x8xf32>
    %114 = tpu.matmul %111, %112, %cst_38 {dimension_numbers = #tpu.dot_dimension_numbers<[1], [1], [0], [0], [0, 0, 1, 0], [], []>} : vector<8x8xbf16>, vector<8x8xbf16>, vector<8x8xf32> -> vector<8x8xf32>
    %cst_39 = arith.constant dense<0xFF800000> : vector<8xf32>
    %115 = vector.multi_reduction <maximumf>, %114, %cst_39 [1] : vector<8x8xf32> to vector<8xf32>
    %116 = vector.shape_cast %115 : vector<8xf32> to vector<8x1xf32>
    %117 = vector.broadcast %116 : vector<8x1xf32> to vector<8x8xf32>
    %118 = arith.subf %114, %117 : vector<8x8xf32>
    %119 = math.exp %118 : vector<8x8xf32>
    %cst_40 = arith.constant dense<0.000000e+00> : vector<8xf32>
    %120 = vector.multi_reduction <add>, %119, %cst_40 [1] : vector<8x8xf32> to vector<8xf32>
    %121 = vector.shape_cast %120 : vector<8xf32> to vector<8x1xf32>
    %122 = tpu.reciprocal %121 {approx = true} : vector<8x1xf32> -> vector<8x1xf32>
    %123 = vector.broadcast %122 : vector<8x1xf32> to vector<8x8xf32>
    %124 = arith.mulf %119, %123 : vector<8x8xf32>
    %125 = arith.truncf %124 : vector<8x8xf32> to vector<8x8xbf16>
    %cst_41 = arith.constant dense<0.000000e+00> : vector<8x8xf32>
    %126 = tpu.matmul %125, %113, %cst_41 {dimension_numbers = #tpu.dot_dimension_numbers<[1], [0], [0], [1], [0, 0, 1, 1], [], []>} : vector<8x8xbf16>, vector<8x8xbf16>, vector<8x8xf32> -> vector<8x8xf32>
    %127 = vector.extract_strided_slice %32 {offsets = [8, 8], sizes = [8, 8], strides = [1, 1]} : vector<16x32xbf16> to vector<8x8xbf16>
    %128 = vector.extract_strided_slice %44 {offsets = [8, 8], sizes = [8, 8], strides = [1, 1]} : vector<16x32xbf16> to vector<8x8xbf16>
    %129 = vector.extract_strided_slice %45 {offsets = [8, 8], sizes = [8, 8], strides = [1, 1]} : vector<16x32xbf16> to vector<8x8xbf16>
    %cst_42 = arith.constant dense<0.000000e+00> : vector<8x8xf32>
    %130 = tpu.matmul %127, %128, %cst_42 {dimension_numbers = #tpu.dot_dimension_numbers<[1], [1], [0], [0], [0, 0, 1, 0], [], []>} : vector<8x8xbf16>, vector<8x8xbf16>, vector<8x8xf32> -> vector<8x8xf32>
    %cst_43 = arith.constant dense<0xFF800000> : vector<8xf32>
    %131 = vector.multi_reduction <maximumf>, %130, %cst_43 [1] : vector<8x8xf32> to vector<8xf32>
    %132 = vector.shape_cast %131 : vector<8xf32> to vector<8x1xf32>
    %133 = vector.broadcast %132 : vector<8x1xf32> to vector<8x8xf32>
    %134 = arith.subf %130, %133 : vector<8x8xf32>
    %135 = math.exp %134 : vector<8x8xf32>
    %cst_44 = arith.constant dense<0.000000e+00> : vector<8xf32>
    %136 = vector.multi_reduction <add>, %135, %cst_44 [1] : vector<8x8xf32> to vector<8xf32>
    %137 = vector.shape_cast %136 : vector<8xf32> to vector<8x1xf32>
    %138 = tpu.reciprocal %137 {approx = true} : vector<8x1xf32> -> vector<8x1xf32>
    %139 = vector.broadcast %138 : vector<8x1xf32> to vector<8x8xf32>
    %140 = arith.mulf %135, %139 : vector<8x8xf32>
    %141 = arith.truncf %140 : vector<8x8xf32> to vector<8x8xbf16>
    %cst_45 = arith.constant dense<0.000000e+00> : vector<8x8xf32>
    %142 = tpu.matmul %141, %129, %cst_45 {dimension_numbers = #tpu.dot_dimension_numbers<[1], [0], [0], [1], [0, 0, 1, 1], [], []>} : vector<8x8xbf16>, vector<8x8xbf16>, vector<8x8xf32> -> vector<8x8xf32>
    %143 = vector.extract_strided_slice %32 {offsets = [8, 16], sizes = [8, 8], strides = [1, 1]} : vector<16x32xbf16> to vector<8x8xbf16>
    %144 = vector.extract_strided_slice %44 {offsets = [8, 16], sizes = [8, 8], strides = [1, 1]} : vector<16x32xbf16> to vector<8x8xbf16>
    %145 = vector.extract_strided_slice %45 {offsets = [8, 16], sizes = [8, 8], strides = [1, 1]} : vector<16x32xbf16> to vector<8x8xbf16>
    %cst_46 = arith.constant dense<0.000000e+00> : vector<8x8xf32>
    %146 = tpu.matmul %143, %144, %cst_46 {dimension_numbers = #tpu.dot_dimension_numbers<[1], [1], [0], [0], [0, 0, 1, 0], [], []>} : vector<8x8xbf16>, vector<8x8xbf16>, vector<8x8xf32> -> vector<8x8xf32>
    %cst_47 = arith.constant dense<0xFF800000> : vector<8xf32>
    %147 = vector.multi_reduction <maximumf>, %146, %cst_47 [1] : vector<8x8xf32> to vector<8xf32>
    %148 = vector.shape_cast %147 : vector<8xf32> to vector<8x1xf32>
    %149 = vector.broadcast %148 : vector<8x1xf32> to vector<8x8xf32>
    %150 = arith.subf %146, %149 : vector<8x8xf32>
    %151 = math.exp %150 : vector<8x8xf32>
    %cst_48 = arith.constant dense<0.000000e+00> : vector<8xf32>
    %152 = vector.multi_reduction <add>, %151, %cst_48 [1] : vector<8x8xf32> to vector<8xf32>
    %153 = vector.shape_cast %152 : vector<8xf32> to vector<8x1xf32>
    %154 = tpu.reciprocal %153 {approx = true} : vector<8x1xf32> -> vector<8x1xf32>
    %155 = vector.broadcast %154 : vector<8x1xf32> to vector<8x8xf32>
    %156 = arith.mulf %151, %155 : vector<8x8xf32>
    %157 = arith.truncf %156 : vector<8x8xf32> to vector<8x8xbf16>
    %cst_49 = arith.constant dense<0.000000e+00> : vector<8x8xf32>
    %158 = tpu.matmul %157, %145, %cst_49 {dimension_numbers = #tpu.dot_dimension_numbers<[1], [0], [0], [1], [0, 0, 1, 1], [], []>} : vector<8x8xbf16>, vector<8x8xbf16>, vector<8x8xf32> -> vector<8x8xf32>
    %159 = vector.extract_strided_slice %32 {offsets = [8, 24], sizes = [8, 8], strides = [1, 1]} : vector<16x32xbf16> to vector<8x8xbf16>
    %160 = vector.extract_strided_slice %44 {offsets = [8, 24], sizes = [8, 8], strides = [1, 1]} : vector<16x32xbf16> to vector<8x8xbf16>
    %161 = vector.extract_strided_slice %45 {offsets = [8, 24], sizes = [8, 8], strides = [1, 1]} : vector<16x32xbf16> to vector<8x8xbf16>
    %cst_50 = arith.constant dense<0.000000e+00> : vector<8x8xf32>
    %162 = tpu.matmul %159, %160, %cst_50 {dimension_numbers = #tpu.dot_dimension_numbers<[1], [1], [0], [0], [0, 0, 1, 0], [], []>} : vector<8x8xbf16>, vector<8x8xbf16>, vector<8x8xf32> -> vector<8x8xf32>
    %cst_51 = arith.constant dense<0xFF800000> : vector<8xf32>
    %163 = vector.multi_reduction <maximumf>, %162, %cst_51 [1] : vector<8x8xf32> to vector<8xf32>
    %164 = vector.shape_cast %163 : vector<8xf32> to vector<8x1xf32>
    %165 = vector.broadcast %164 : vector<8x1xf32> to vector<8x8xf32>
    %166 = arith.subf %162, %165 : vector<8x8xf32>
    %167 = math.exp %166 : vector<8x8xf32>
    %cst_52 = arith.constant dense<0.000000e+00> : vector<8xf32>
    %168 = vector.multi_reduction <add>, %167, %cst_52 [1] : vector<8x8xf32> to vector<8xf32>
    %169 = vector.shape_cast %168 : vector<8xf32> to vector<8x1xf32>
    %170 = tpu.reciprocal %169 {approx = true} : vector<8x1xf32> -> vector<8x1xf32>
    %171 = vector.broadcast %170 : vector<8x1xf32> to vector<8x8xf32>
    %172 = arith.mulf %167, %171 : vector<8x8xf32>
    %173 = arith.truncf %172 : vector<8x8xf32> to vector<8x8xbf16>
    %cst_53 = arith.constant dense<0.000000e+00> : vector<8x8xf32>
    %174 = tpu.matmul %173, %161, %cst_53 {dimension_numbers = #tpu.dot_dimension_numbers<[1], [0], [0], [1], [0, 0, 1, 1], [], []>} : vector<8x8xbf16>, vector<8x8xbf16>, vector<8x8xf32> -> vector<8x8xf32>
    %175 = tpu.concatenate %126, %142, %158, %174 in 1 : vector<8x8xf32>, vector<8x8xf32>, vector<8x8xf32>, vector<8x8xf32> -> vector<8x32xf32>
    %176 = tpu.concatenate %110, %175 in 0 : vector<8x32xf32>, vector<8x32xf32> -> vector<16x32xf32>
    %177 = arith.truncf %176 : vector<16x32xf32> to vector<16x32xbf16>
    %c0_54 = arith.constant 0 : index
    %c0_55 = arith.constant 0 : index
    %178 = vector.load %arg8[%c0_54, %c0_55] : memref<32x32xbf16, #tpu.memory_space<vmem>>, vector<32x32xbf16>
    %cst_56 = arith.constant dense<0.000000e+00> : vector<16x32xf32>
    %179 = tpu.matmul %177, %178, %cst_56 {dimension_numbers = #tpu.dot_dimension_numbers<[1], [0], [0], [1], [0, 0, 1, 1], [], []>} : vector<16x32xbf16>, vector<32x32xbf16>, vector<16x32xf32> -> vector<16x32xf32>
    %c0_57 = arith.constant 0 : index
    %c0_58 = arith.constant 0 : index
    %180 = vector.load %arg9[%c0_57, %c0_58] : memref<1x32xf32, #tpu.memory_space<vmem>>, vector<1x32xf32>
    %181 = vector.broadcast %180 : vector<1x32xf32> to vector<16x32xf32>
    %182 = arith.addf %179, %181 : vector<16x32xf32>
    %183 = arith.addf %1, %182 : vector<16x32xf32>
    %cst_59 = arith.constant dense<0.000000e+00> : vector<16xf32>
    %184 = vector.multi_reduction <add>, %183, %cst_59 [1] : vector<16x32xf32> to vector<16xf32>
    %185 = vector.shape_cast %184 : vector<16xf32> to vector<16x1xf32>
    %cst_60 = arith.constant 3.200000e+01 : f32
    %186 = vector.broadcast %cst_60 : f32 to vector<16x1xf32>
    %187 = arith.divf %185, %186 : vector<16x1xf32>
    %188 = vector.broadcast %187 : vector<16x1xf32> to vector<16x32xf32>
    %189 = arith.subf %183, %188 : vector<16x32xf32>
    %190 = arith.mulf %189, %189 : vector<16x32xf32>
    %cst_61 = arith.constant dense<0.000000e+00> : vector<16xf32>
    %191 = vector.multi_reduction <add>, %190, %cst_61 [1] : vector<16x32xf32> to vector<16xf32>
    %192 = vector.shape_cast %191 : vector<16xf32> to vector<16x1xf32>
    %cst_62 = arith.constant 3.200000e+01 : f32
    %193 = vector.broadcast %cst_62 : f32 to vector<16x1xf32>
    %194 = arith.divf %192, %193 : vector<16x1xf32>
    %195 = vector.broadcast %187 : vector<16x1xf32> to vector<16x32xf32>
    %196 = arith.subf %183, %195 : vector<16x32xf32>
    %cst_63 = arith.constant 9.99999974E-6 : f32
    %197 = vector.broadcast %cst_63 : f32 to vector<16x1xf32>
    %198 = arith.addf %194, %197 : vector<16x1xf32>
    %199 = math.rsqrt %198 : vector<16x1xf32>
    %200 = vector.broadcast %199 : vector<16x1xf32> to vector<16x32xf32>
    %201 = arith.mulf %196, %200 : vector<16x32xf32>
    %c0_64 = arith.constant 0 : index
    %c0_65 = arith.constant 0 : index
    %202 = vector.load %arg14[%c0_64, %c0_65] : memref<1x32xf32, #tpu.memory_space<vmem>>, vector<1x32xf32>
    %203 = vector.broadcast %202 : vector<1x32xf32> to vector<16x32xf32>
    %204 = arith.mulf %201, %203 : vector<16x32xf32>
    %c0_66 = arith.constant 0 : index
    %c0_67 = arith.constant 0 : index
    %205 = vector.load %arg15[%c0_66, %c0_67] : memref<1x32xf32, #tpu.memory_space<vmem>>, vector<1x32xf32>
    %206 = vector.broadcast %205 : vector<1x32xf32> to vector<16x32xf32>
    %207 = arith.addf %204, %206 : vector<16x32xf32>
    %208 = arith.truncf %207 : vector<16x32xf32> to vector<16x32xbf16>
    %c0_68 = arith.constant 0 : index
    %c0_69 = arith.constant 0 : index
    %209 = vector.load %arg10[%c0_68, %c0_69] : memref<32x64xbf16, #tpu.memory_space<vmem>>, vector<32x64xbf16>
    %cst_70 = arith.constant dense<0.000000e+00> : vector<16x64xf32>
    %210 = tpu.matmul %208, %209, %cst_70 {dimension_numbers = #tpu.dot_dimension_numbers<[1], [0], [0], [1], [0, 0, 1, 1], [], []>} : vector<16x32xbf16>, vector<32x64xbf16>, vector<16x64xf32> -> vector<16x64xf32>
    %c0_71 = arith.constant 0 : index
    %c0_72 = arith.constant 0 : index
    %211 = vector.load %arg11[%c0_71, %c0_72] : memref<1x64xf32, #tpu.memory_space<vmem>>, vector<1x64xf32>
    %212 = vector.broadcast %211 : vector<1x64xf32> to vector<16x64xf32>
    %213 = arith.addf %210, %212 : vector<16x64xf32>
    %cst_73 = arith.constant 0.000000e+00 : f32
    %214 = vector.broadcast %cst_73 : f32 to vector<16x64xf32>
    %215 = arith.maximumf %213, %214 : vector<16x64xf32>
    %216 = arith.truncf %215 : vector<16x64xf32> to vector<16x64xbf16>
    %c0_74 = arith.constant 0 : index
    %c0_75 = arith.constant 0 : index
    %217 = vector.load %arg12[%c0_74, %c0_75] : memref<64x32xbf16, #tpu.memory_space<vmem>>, vector<64x32xbf16>
    %cst_76 = arith.constant dense<0.000000e+00> : vector<16x32xf32>
    %218 = tpu.matmul %216, %217, %cst_76 {dimension_numbers = #tpu.dot_dimension_numbers<[1], [0], [0], [1], [0, 0, 1, 1], [], []>} : vector<16x64xbf16>, vector<64x32xbf16>, vector<16x32xf32> -> vector<16x32xf32>
    %c0_77 = arith.constant 0 : index
    %c0_78 = arith.constant 0 : index
    %219 = vector.load %arg13[%c0_77, %c0_78] : memref<1x32xf32, #tpu.memory_space<vmem>>, vector<1x32xf32>
    %220 = vector.broadcast %219 : vector<1x32xf32> to vector<16x32xf32>
    %221 = arith.addf %218, %220 : vector<16x32xf32>
    %222 = arith.addf %207, %221 : vector<16x32xf32>
    %cst_79 = arith.constant dense<0.000000e+00> : vector<16xf32>
    %223 = vector.multi_reduction <add>, %222, %cst_79 [1] : vector<16x32xf32> to vector<16xf32>
    %224 = vector.shape_cast %223 : vector<16xf32> to vector<16x1xf32>
    %cst_80 = arith.constant 3.200000e+01 : f32
    %225 = vector.broadcast %cst_80 : f32 to vector<16x1xf32>
    %226 = arith.divf %224, %225 : vector<16x1xf32>
    %227 = vector.broadcast %226 : vector<16x1xf32> to vector<16x32xf32>
    %228 = arith.subf %222, %227 : vector<16x32xf32>
    %229 = arith.mulf %228, %228 : vector<16x32xf32>
    %cst_81 = arith.constant dense<0.000000e+00> : vector<16xf32>
    %230 = vector.multi_reduction <add>, %229, %cst_81 [1] : vector<16x32xf32> to vector<16xf32>
    %231 = vector.shape_cast %230 : vector<16xf32> to vector<16x1xf32>
    %cst_82 = arith.constant 3.200000e+01 : f32
    %232 = vector.broadcast %cst_82 : f32 to vector<16x1xf32>
    %233 = arith.divf %231, %232 : vector<16x1xf32>
    %234 = vector.broadcast %226 : vector<16x1xf32> to vector<16x32xf32>
    %235 = arith.subf %222, %234 : vector<16x32xf32>
    %cst_83 = arith.constant 9.99999974E-6 : f32
    %236 = vector.broadcast %cst_83 : f32 to vector<16x1xf32>
    %237 = arith.addf %233, %236 : vector<16x1xf32>
    %238 = math.rsqrt %237 : vector<16x1xf32>
    %239 = vector.broadcast %238 : vector<16x1xf32> to vector<16x32xf32>
    %240 = arith.mulf %235, %239 : vector<16x32xf32>
    %c0_84 = arith.constant 0 : index
    %c0_85 = arith.constant 0 : index
    %241 = vector.load %arg16[%c0_84, %c0_85] : memref<1x32xf32, #tpu.memory_space<vmem>>, vector<1x32xf32>
    %242 = vector.broadcast %241 : vector<1x32xf32> to vector<16x32xf32>
    %243 = arith.mulf %240, %242 : vector<16x32xf32>
    %c0_86 = arith.constant 0 : index
    %c0_87 = arith.constant 0 : index
    %244 = vector.load %arg17[%c0_86, %c0_87] : memref<1x32xf32, #tpu.memory_space<vmem>>, vector<1x32xf32>
    %245 = vector.broadcast %244 : vector<1x32xf32> to vector<16x32xf32>
    %246 = arith.addf %243, %245 : vector<16x32xf32>
    %247 = vector.shape_cast %246 : vector<16x32xf32> to vector<2x8x32xf32>
    %c0_88 = arith.constant 0 : index
    %c0_89 = arith.constant 0 : index
    %c0_90 = arith.constant 0 : index
    %248 = vector.load %arg21[%c0_88, %c0_89, %c0_90] : memref<2x8x32xf32, #tpu.memory_space<vmem>>, vector<2x8x32xf32>
    tpu.vector_store %arg21[%c0_88, %c0_89, %c0_90], %247 {strides = array<i32>} : memref<2x8x32xf32, #tpu.memory_space<vmem>>, vector<2x8x32xf32>,
    return
  }
  func.func @transform_0(%arg0: i32) -> (i32, i32, i32) {
    %c0_i32 = arith.constant 0 : i32
    %c0_i32_0 = arith.constant 0 : i32
    %c0_i32_1 = arith.constant 0 : i32
    return %arg0, %c0_i32, %c0_i32_0 : i32, i32, i32
  }
  func.func @transform_1(%arg0: i32) -> (i32, i32) {
    %c0_i32 = arith.constant 0 : i32
    %c0_i32_0 = arith.constant 0 : i32
    %c0_i32_1 = arith.constant 0 : i32
    return %c0_i32, %c0_i32_0 : i32, i32
  }
  func.func @transform_2(%arg0: i32) -> (i32, i32) {
    %c0_i32 = arith.constant 0 : i32
    %c0_i32_0 = arith.constant 0 : i32
    %c0_i32_1 = arith.constant 0 : i32
    return %c0_i32, %c0_i32_0 : i32, i32
  }
  func.func @transform_3(%arg0: i32) -> (i32, i32) {
    %c0_i32 = arith.constant 0 : i32
    %c0_i32_0 = arith.constant 0 : i32
    %c0_i32_1 = arith.constant 0 : i32
    return %c0_i32, %c0_i32_0 : i32, i32
  }
  func.func @transform_4(%arg0: i32) -> (i32, i32) {
    %c0_i32 = arith.constant 0 : i32
    %c0_i32_0 = arith.constant 0 : i32
    %c0_i32_1 = arith.constant 0 : i32
    return %c0_i32, %c0_i32_0 : i32, i32
  }
  func.func @transform_5(%arg0: i32) -> (i32, i32) {
    %c0_i32 = arith.constant 0 : i32
    %c0_i32_0 = arith.constant 0 : i32
    %c0_i32_1 = arith.constant 0 : i32
    return %c0_i32, %c0_i32_0 : i32, i32
  }
  func.func @transform_6(%arg0: i32) -> (i32, i32) {
    %c0_i32 = arith.constant 0 : i32
    %c0_i32_0 = arith.constant 0 : i32
    %c0_i32_1 = arith.constant 0 : i32
    return %c0_i32, %c0_i32_0 : i32, i32
  }
  func.func @transform_7(%arg0: i32) -> (i32, i32) {
    %c0_i32 = arith.constant 0 : i32
    %c0_i32_0 = arith.constant 0 : i32
    %c0_i32_1 = arith.constant 0 : i32
    return %c0_i32, %c0_i32_0 : i32, i32
  }
  func.func @transform_8(%arg0: i32) -> (i32, i32) {
    %c0_i32 = arith.constant 0 : i32
    %c0_i32_0 = arith.constant 0 : i32
    %c0_i32_1 = arith.constant 0 : i32
    return %c0_i32, %c0_i32_0 : i32, i32
  }
  func.func @transform_9(%arg0: i32) -> (i32, i32) {
    %c0_i32 = arith.constant 0 : i32
    %c0_i32_0 = arith.constant 0 : i32
    %c0_i32_1 = arith.constant 0 : i32
    return %c0_i32, %c0_i32_0 : i32, i32
  }
  func.func @transform_10(%arg0: i32) -> (i32, i32) {
    %c0_i32 = arith.constant 0 : i32
    %c0_i32_0 = arith.constant 0 : i32
    %c0_i32_1 = arith.constant 0 : i32
    return %c0_i32, %c0_i32_0 : i32, i32
  }
  func.func @transform_11(%arg0: i32) -> (i32, i32) {
    %c0_i32 = arith.constant 0 : i32
    %c0_i32_0 = arith.constant 0 : i32
    %c0_i32_1 = arith.constant 0 : i32
    return %c0_i32, %c0_i32_0 : i32, i32
  }
  func.func @transform_12(%arg0: i32) -> (i32, i32) {
    %c0_i32 = arith.constant 0 : i32
    %c0_i32_0 = arith.constant 0 : i32
    %c0_i32_1 = arith.constant 0 : i32
    return %c0_i32, %c0_i32_0 : i32, i32
  }
  func.func @transform_13(%arg0: i32) -> (i32, i32) {
    %c0_i32 = arith.constant 0 : i32
    %c0_i32_0 = arith.constant 0 : i32
    %c0_i32_1 = arith.constant 0 : i32
    return %c0_i32, %c0_i32_0 : i32, i32
  }
  func.func @transform_14(%arg0: i32) -> (i32, i32) {
    %c0_i32 = arith.constant 0 : i32
    %c0_i32_0 = arith.constant 0 : i32
    %c0_i32_1 = arith.constant 0 : i32
    return %c0_i32, %c0_i32_0 : i32, i32
  }
  func.func @transform_15(%arg0: i32) -> (i32, i32) {
    %c0_i32 = arith.constant 0 : i32
    %c0_i32_0 = arith.constant 0 : i32
    %c0_i32_1 = arith.constant 0 : i32
    return %c0_i32, %c0_i32_0 : i32, i32
  }
  func.func @transform_16(%arg0: i32) -> (i32, i32) {
    %c0_i32 = arith.constant 0 : i32
    %c0_i32_0 = arith.constant 0 : i32
    %c0_i32_1 = arith.constant 0 : i32
    return %c0_i32, %c0_i32_0 : i32, i32
  }
  func.func @transform_17(%arg0: i32) -> (i32, i32) {
    %c0_i32 = arith.constant 0 : i32
    %c0_i32_0 = arith.constant 0 : i32
    %c0_i32_1 = arith.constant 0 : i32
    return %c0_i32, %c0_i32_0 : i32, i32
  }
  func.func @transform_18(%arg0: i32) -> (i32, i32) {
    %c0_i32 = arith.constant 0 : i32
    %c0_i32_0 = arith.constant 0 : i32
    %c0_i32_1 = arith.constant 0 : i32
    return %c0_i32, %c0_i32_0 : i32, i32
  }
  func.func @transform_19(%arg0: i32) -> (i32, i32) {
    %c0_i32 = arith.constant 0 : i32
    %c0_i32_0 = arith.constant 0 : i32
    %c0_i32_1 = arith.constant 0 : i32
    return %c0_i32, %c0_i32_0 : i32, i32
  }
  func.func @transform_20(%arg0: i32) -> (i32, i32, i32) {
    %c0_i32 = arith.constant 0 : i32
    %c0_i32_0 = arith.constant 0 : i32
    %c0_i32_1 = arith.constant 0 : i32
    return %arg0, %c0_i32, %c0_i32_0 : i32, i32, i32
  }
}

</mosaic_0001>

<llo_original>
// kernel: tpu_custom_call.1
$region0: #{tpu_custom_call.1}
  #allocation0 [shape = 'u32[]', space=smem, size = 0x4, offset = 0x4, fixed_abs, tag = 'smem constant byte address 0x4 - core index']
  #allocation1 [shape = 'u32[144,128]{1,0:T(1,128)}', space=vmem, size = 0x12000, scoped, tag = 'internal scratch']
  %s0 = inlined_call_operand.vmem [shape: f32[4,8,32], index: 0, kind: input, shape index: {}]
  %s1 = inlined_call_operand.vmem [shape: bf16[32,32], index: 1, kind: input, shape index: {}]
  %s2 = inlined_call_operand.hbm [shape: f32[1,32], index: 2, kind: input, shape index: {}]
  %s3 = inlined_call_operand.hbm [shape: bf16[32,32], index: 3, kind: input, shape index: {}]
  %s4 = inlined_call_operand.hbm [shape: f32[1,32], index: 4, kind: input, shape index: {}]
  %s5 = inlined_call_operand.hbm [shape: bf16[32,32], index: 5, kind: input, shape index: {}]
  %s6 = inlined_call_operand.hbm [shape: f32[1,32], index: 6, kind: input, shape index: {}]
  %s7 = inlined_call_operand.hbm [shape: bf16[32,32], index: 7, kind: input, shape index: {}]
  %s8 = inlined_call_operand.hbm [shape: f32[1,32], index: 8, kind: input, shape index: {}]
  %s9 = inlined_call_operand.vmem [shape: bf16[32,64], index: 9, kind: input, shape index: {}]
  %s10 = inlined_call_operand.hbm [shape: f32[1,64], index: 10, kind: input, shape index: {}]
  %s11 = inlined_call_operand.vmem [shape: bf16[64,32], index: 11, kind: input, shape index: {}]
  %s12 = inlined_call_operand.hbm [shape: f32[1,32], index: 12, kind: input, shape index: {}]
  %s13 = inlined_call_operand.hbm [shape: f32[1,32], index: 13, kind: input, shape index: {}]
  %s14 = inlined_call_operand.hbm [shape: f32[1,32], index: 14, kind: input, shape index: {}]
  %s15 = inlined_call_operand.hbm [shape: f32[1,32], index: 15, kind: input, shape index: {}]
  %s16 = inlined_call_operand.hbm [shape: f32[1,32], index: 16, kind: input, shape index: {}]
  %s17 = inlined_call_operand.vmem [shape: f32[16,32], index: 17, kind: input, shape index: {}]
  %s18 = inlined_call_operand.vmem [shape: f32[16,32], index: 18, kind: input, shape index: {}]
  %s19 = inlined_call_operand.hbm [shape: f32[16,32], index: 19, kind: input, shape index: {}]
  %s20 = inlined_call_operand.hbm [shape: f32[4,8,32], index: 20, kind: output, shape index: {}]
  %s21 = sld [smem:[#allocation0]]
  $region169: #{tpu_custom_call.1} parent=0
    _
  %s23 = ssub.s32 1, %s21
  %s24 = scalar_select 0, %s23, %s21
  $region1: #{tpu_custom_call.1} parent=0
    #allocation2 [shape = 'u8[512]{0}', space=vmem, size = 0x400, scoped, tag = 'input window, operand 2, single buffered']
    #allocation3 [shape = 's32[2]{0}', space=sflag, size = 0x8, scoped, tag = 'scoped memory for tpu_custom_call.1']
    #allocation4 [shape = 's32[2]{0}', space=sflag, size = 0x8, scoped, tag = 'scoped memory for tpu_custom_call.1']
    #allocation5 [shape = 'u8[8192]{0}', space=vmem, size = 0x2000, scoped, tag = 'input window, operand 3, single buffered']
    #allocation6 [shape = 's32[1]{0}', space=sflag, size = 0x4, scoped, tag = 'scoped memory for tpu_custom_call.1']
    #allocation7 [shape = 'u8[512]{0}', space=vmem, size = 0x400, scoped, tag = 'input window, operand 4, single buffered']
    #allocation8 [shape = 'u8[8192]{0}', space=vmem, size = 0x2000, scoped, tag = 'input window, operand 5, single buffered']
    #allocation9 [shape = 's32[1]{0}', space=sflag, size = 0x4, scoped, tag = 'scoped memory for tpu_custom_call.1']
    #allocation10 [shape = 'u8[512]{0}', space=vmem, size = 0x400, scoped, tag = 'input window, operand 6, single buffered']
    #allocation11 [shape = 'u8[8192]{0}', space=vmem, size = 0x2000, scoped, tag = 'input window, operand 7, single buffered']
    #allocation12 [shape = 's32[1]{0}', space=sflag, size = 0x4, scoped, tag = 'scoped memory for tpu_custom_call.1']
    #allocation13 [shape = 'u8[512]{0}', space=vmem, size = 0x400, scoped, tag = 'input window, operand 8, single buffered']
    #allocation14 [shape = 'u8[512]{0}', space=vmem, size = 0x400, scoped, tag = 'input window, operand 10, single buffered']
    #allocation15 [shape = 's32[1]{0}', space=sflag, size = 0x4, scoped, tag = 'scoped memory for tpu_custom_call.1']
    #allocation16 [shape = 'u8[512]{0}', space=vmem, size = 0x400, scoped, tag = 'input window, operand 12, single buffered']
    #allocation17 [shape = 'u8[512]{0}', space=vmem, size = 0x400, scoped, tag = 'input window, operand 13, single buffered']
    #allocation18 [shape = 's32[1]{0}', space=sflag, size = 0x4, scoped, tag = 'scoped memory for tpu_custom_call.1']
    #allocation19 [shape = 'u8[512]{0}', space=vmem, size = 0x400, scoped, tag = 'input window, operand 14, single buffered']
    #allocation20 [shape = 'u8[512]{0}', space=vmem, size = 0x400, scoped, tag = 'input window, operand 15, single buffered']
    #allocation21 [shape = 's32[1]{0}', space=sflag, size = 0x4, scoped, tag = 'scoped memory for tpu_custom_call.1']
    #allocation22 [shape = 'u8[512]{0}', space=vmem, size = 0x400, scoped, tag = 'input window, operand 16, single buffered']
    #allocation23 [shape = 'u8[8192]{0}', space=vmem, size = 0x2000, scoped, tag = 'input window, operand 19, single buffered']
    #allocation24 [shape = 's32[1]{0}', space=sflag, size = 0x4, scoped, tag = 'scoped memory for tpu_custom_call.1']
    #allocation25 [shape = 'u8[16384]{0}', space=vmem, size = 0x4000, scoped, tag = 'output window, operand 0']
    %25 = vsyncpa [#allocation3], 0
    %26 = vsyncpa [#allocation6], 0
    %27 = vsyncpa [#allocation9], 0
    %28 = vsyncpa [#allocation12], 0
    %29 = vsyncpa [#allocation15], 0
    %30 = vsyncpa [#allocation18], 0
    %31 = vsyncpa [#allocation21], 0
    %32 = vsyncpa [#allocation24], 0
    %33 = vsyncpa [#allocation4], 0
    %s34 = scalar_lea.sflag [#allocation4], 1
    %35 = vsyncpa %s34, 0
    loop: start=0, step=1, limit=4
    $region2: #{tpu_custom_call.1} parent=1 // loop_pre_header
      _
    $region3: #{tpu_custom_call.1} parent=1 // loop_header
      %s37 = sphi 0, %s41
      %p38 = scmp.ge.s32.totalorder %s37, 4
      %s47 = sphi 0, %s49
      %s50 = sphi 0, %s47
      %s51 = sphi 0, %s50
      %s67 = sphi 0, %s51
      %s71 = sphi 0, %s71
      %s73 = sphi 0, %s71
      %s74 = sphi 0, %s73
      %s88 = sphi 0, %s74
      %s92 = sphi 0, %s92
      %s94 = sphi 0, %s92
      %s95 = sphi 0, %s94
      %s109 = sphi 0, %s95
      %s113 = sphi 0, %s113
      %s115 = sphi 0, %s113
      %s116 = sphi 0, %s115
      %s130 = sphi 0, %s116
      %s134 = sphi 0, %s134
      %s136 = sphi 0, %s134
      %s137 = sphi 0, %s136
      %s151 = sphi 0, %s137
      %s155 = sphi 0, %s155
      %s157 = sphi 0, %s155
      %s158 = sphi 0, %s157
      %s172 = sphi 0, %s158
      %s176 = sphi 0, %s176
      %s178 = sphi 0, %s176
      %s179 = sphi 0, %s178
      %s193 = sphi 0, %s179
      %s197 = sphi 0, %s197
      %s199 = sphi 0, %s197
      %s200 = sphi 0, %s199
      %s214 = sphi 0, %s200
      %s218 = sphi 0, %s218
      %s220 = sphi 0, %s218
      %s221 = sphi 0, %s220
      %s235 = sphi 0, %s221
      %s239 = sphi 0, %s239
      %s241 = sphi 0, %s239
      %s242 = sphi 0, %s241
      %s256 = sphi 0, %s242
      %s260 = sphi 0, %s260
      %s262 = sphi 0, %s260
      %s263 = sphi 0, %s262
      %s277 = sphi 0, %s263
      %s281 = sphi 0, %s281
      %s283 = sphi 0, %s281
      %s284 = sphi 0, %s283
      %s298 = sphi 0, %s284
      %s302 = sphi 0, %s302
      %s304 = sphi 0, %s302
      %s305 = sphi 0, %s304
      %s319 = sphi 0, %s305
      %s323 = sphi 0, %s323
      %s325 = sphi 0, %s323
      %s326 = sphi 0, %s325
      %s340 = sphi 0, %s326
      %s344 = sphi 0, %s344
      %s346 = sphi 0, %s344
      %s347 = sphi 0, %s346
      %s361 = sphi 0, %s347
      %s365 = sphi 0, %s365
      %s367 = sphi 0, %s365
      %s368 = sphi 0, %s367
      %s382 = sphi 0, %s368
      %s386 = sphi 0, %s386
      %s388 = sphi 0, %s386
      %s389 = sphi 0, %s388
      %s403 = sphi 0, %s389
      %s407 = sphi 0, %s407
      %s409 = sphi 0, %s407
      %s410 = sphi 0, %s409
      %s424 = sphi 0, %s410
      %s428 = sphi 0, %s428
      %s430 = sphi 0, %s428
      %s431 = sphi 0, %s430
      %s445 = sphi 0, %s431
      %s449 = sphi 0, %s449
      %s451 = sphi 0, %s449
      %s452 = sphi 0, %s451
      %s466 = sphi 0, %s452
      %s472 = sphi 0, %s474
      %s475 = sphi 0, %s472
      %s476 = sphi 0, %s475
      %s492 = sphi 0, %s476
    $region4: #{tpu_custom_call.1} parent=1 // loop_header_branch
      %40 = sbr.rel (%p38) target = $region8
    $region5: #{tpu_custom_call.1} parent=1 // loop_body
      %s42 = ssub.s32 %s37, 1
      %s43 = ssub.s32 %s37, 2
      %s44 = sadd.s32 %s37, 1
      %s45 = ssub.s32 %s37, %s44
      %p46 = scmp.eq.s32.totalorder %s45, 0
      %s48 = sadd.s32 %s47, 1
      %s49 = scalar_select %p46, %s47, %s48
      %p52 = pneg %p46
      %p53 = scmp.eq.s32.totalorder %s37, 1
      %p54 = por %p52, %p53
      %p55 = scmp.ne.s32.totalorder %s47, %s50
      %p56 = scmp.eq.s32.totalorder %s37, 0
      %p57 = por %p55, %p56
      %p58 = scmp.ne.s32.totalorder %s47, %s50
      %p59 = scmp.eq.s32.totalorder %s42, 1
      %p60 = por %p58, %p59
      %p61 = scmp.ne.s32.totalorder %s50, %s51
      %p62 = scmp.eq.s32.totalorder %s42, 0
      %p63 = por %p61, %p62
      %p64 = scmp.ne.s32.totalorder %s50, %s51
      %p65 = scmp.eq.s32.totalorder %s43, 1
      %p66 = por %p64, %p65
      %p68 = scmp.ne.s32.totalorder %s51, %s67
      %p69 = scmp.eq.s32.totalorder %s43, 0
      %p70 = por %p68, %p69
      %s72 = sadd.s32 %s71, 1
      %p75 = scmp.eq.s32.totalorder %s37, 1
      %p76 = scmp.ne.s32.totalorder %s71, %s73
      %p77 = scmp.eq.s32.totalorder %s37, 0
      %p78 = por %p76, %p77
      %p79 = scmp.ne.s32.totalorder %s71, %s73
      %p80 = scmp.eq.s32.totalorder %s42, 1
      %p81 = por %p79, %p80
      %p82 = scmp.ne.s32.totalorder %s73, %s74
      %p83 = scmp.eq.s32.totalorder %s42, 0
      %p84 = por %p82, %p83
      %p85 = scmp.ne.s32.totalorder %s73, %s74
      %p86 = scmp.eq.s32.totalorder %s43, 1
      %p87 = por %p85, %p86
      %p89 = scmp.ne.s32.totalorder %s74, %s88
      %p90 = scmp.eq.s32.totalorder %s43, 0
      %p91 = por %p89, %p90
      %s93 = sadd.s32 %s92, 1
      %p96 = scmp.eq.s32.totalorder %s37, 1
      %p97 = scmp.ne.s32.totalorder %s92, %s94
      %p98 = scmp.eq.s32.totalorder %s37, 0
      %p99 = por %p97, %p98
      %p100 = scmp.ne.s32.totalorder %s92, %s94
      %p101 = scmp.eq.s32.totalorder %s42, 1
      %p102 = por %p100, %p101
      %p103 = scmp.ne.s32.totalorder %s94, %s95
      %p104 = scmp.eq.s32.totalorder %s42, 0
      %p105 = por %p103, %p104
      %p106 = scmp.ne.s32.totalorder %s94, %s95
      %p107 = scmp.eq.s32.totalorder %s43, 1
      %p108 = por %p106, %p107
      %p110 = scmp.ne.s32.totalorder %s95, %s109
      %p111 = scmp.eq.s32.totalorder %s43, 0
      %p112 = por %p110, %p111
      %s114 = sadd.s32 %s113, 1
      %p117 = scmp.eq.s32.totalorder %s37, 1
      %p118 = scmp.ne.s32.totalorder %s113, %s115
      %p119 = scmp.eq.s32.totalorder %s37, 0
      %p120 = por %p118, %p119
      %p121 = scmp.ne.s32.totalorder %s113, %s115
      %p122 = scmp.eq.s32.totalorder %s42, 1
      %p123 = por %p121, %p122
      %p124 = scmp.ne.s32.totalorder %s115, %s116
      %p125 = scmp.eq.s32.totalorder %s42, 0
      %p126 = por %p124, %p125
      %p127 = scmp.ne.s32.totalorder %s115, %s116
      %p128 = scmp.eq.s32.totalorder %s43, 1
      %p129 = por %p127, %p128
      %p131 = scmp.ne.s32.totalorder %s116, %s130
      %p132 = scmp.eq.s32.totalorder %s43, 0
      %p133 = por %p131, %p132
      %s135 = sadd.s32 %s134, 1
      %p138 = scmp.eq.s32.totalorder %s37, 1
      %p139 = scmp.ne.s32.totalorder %s134, %s136
      %p140 = scmp.eq.s32.totalorder %s37, 0
      %p141 = por %p139, %p140
      %p142 = scmp.ne.s32.totalorder %s134, %s136
      %p143 = scmp.eq.s32.totalorder %s42, 1
      %p144 = por %p142, %p143
      %p145 = scmp.ne.s32.totalorder %s136, %s137
      %p146 = scmp.eq.s32.totalorder %s42, 0
      %p147 = por %p145, %p146
      %p148 = scmp.ne.s32.totalorder %s136, %s137
      %p149 = scmp.eq.s32.totalorder %s43, 1
      %p150 = por %p148, %p149
      %p152 = scmp.ne.s32.totalorder %s137, %s151
      %p153 = scmp.eq.s32.totalorder %s43, 0
      %p154 = por %p152, %p153
      %s156 = sadd.s32 %s155, 1
      %p159 = scmp.eq.s32.totalorder %s37, 1
      %p160 = scmp.ne.s32.totalorder %s155, %s157
      %p161 = scmp.eq.s32.totalorder %s37, 0
      %p162 = por %p160, %p161
      %p163 = scmp.ne.s32.totalorder %s155, %s157
      %p164 = scmp.eq.s32.totalorder %s42, 1
      %p165 = por %p163, %p164
      %p166 = scmp.ne.s32.totalorder %s157, %s158
      %p167 = scmp.eq.s32.totalorder %s42, 0
      %p168 = por %p166, %p167
      %p169 = scmp.ne.s32.totalorder %s157, %s158
      %p170 = scmp.eq.s32.totalorder %s43, 1
      %p171 = por %p169, %p170
      %p173 = scmp.ne.s32.totalorder %s158, %s172
      %p174 = scmp.eq.s32.totalorder %s43, 0
      %p175 = por %p173, %p174
      %s177 = sadd.s32 %s176, 1
      %p180 = scmp.eq.s32.totalorder %s37, 1
      %p181 = scmp.ne.s32.totalorder %s176, %s178
      %p182 = scmp.eq.s32.totalorder %s37, 0
      %p183 = por %p181, %p182
      %p184 = scmp.ne.s32.totalorder %s176, %s178
      %p185 = scmp.eq.s32.totalorder %s42, 1
      %p186 = por %p184, %p185
      %p187 = scmp.ne.s32.totalorder %s178, %s179
      %p188 = scmp.eq.s32.totalorder %s42, 0
      %p189 = por %p187, %p188
      %p190 = scmp.ne.s32.totalorder %s178, %s179
      %p191 = scmp.eq.s32.totalorder %s43, 1
      %p192 = por %p190, %p191
      %p194 = scmp.ne.s32.totalorder %s179, %s193
      %p195 = scmp.eq.s32.totalorder %s43, 0
      %p196 = por %p194, %p195
      %s198 = sadd.s32 %s197, 1
      %p201 = scmp.eq.s32.totalorder %s37, 1
      %p202 = scmp.ne.s32.totalorder %s197, %s199
      %p203 = scmp.eq.s32.totalorder %s37, 0
      %p204 = por %p202, %p203
      %p205 = scmp.ne.s32.totalorder %s197, %s199
      %p206 = scmp.eq.s32.totalorder %s42, 1
      %p207 = por %p205, %p206
      %p208 = scmp.ne.s32.totalorder %s199, %s200
      %p209 = scmp.eq.s32.totalorder %s42, 0
      %p210 = por %p208, %p209
      %p211 = scmp.ne.s32.totalorder %s199, %s200
      %p212 = scmp.eq.s32.totalorder %s43, 1
      %p213 = por %p211, %p212
      %p215 = scmp.ne.s32.totalorder %s200, %s214
      %p216 = scmp.eq.s32.totalorder %s43, 0
      %p217 = por %p215, %p216
      %s219 = sadd.s32 %s218, 1
      %p222 = scmp.eq.s32.totalorder %s37, 1
      %p223 = scmp.ne.s32.totalorder %s218, %s220
      %p224 = scmp.eq.s32.totalorder %s37, 0
      %p225 = por %p223, %p224
      %p226 = scmp.ne.s32.totalorder %s218, %s220
      %p227 = scmp.eq.s32.totalorder %s42, 1
      %p228 = por %p226, %p227
      %p229 = scmp.ne.s32.totalorder %s220, %s221
      %p230 = scmp.eq.s32.totalorder %s42, 0
      %p231 = por %p229, %p230
      %p232 = scmp.ne.s32.totalorder %s220, %s221
      %p233 = scmp.eq.s32.totalorder %s43, 1
      %p234 = por %p232, %p233
      %p236 = scmp.ne.s32.totalorder %s221, %s235
      %p237 = scmp.eq.s32.totalorder %s43, 0
      %p238 = por %p236, %p237
      %s240 = sadd.s32 %s239, 1
      %p243 = scmp.eq.s32.totalorder %s37, 1
      %p244 = scmp.ne.s32.totalorder %s239, %s241
      %p245 = scmp.eq.s32.totalorder %s37, 0
      %p246 = por %p244, %p245
      %p247 = scmp.ne.s32.totalorder %s239, %s241
      %p248 = scmp.eq.s32.totalorder %s42, 1
      %p249 = por %p247, %p248
      %p250 = scmp.ne.s32.totalorder %s241, %s242
      %p251 = scmp.eq.s32.totalorder %s42, 0
      %p252 = por %p250, %p251
      %p253 = scmp.ne.s32.totalorder %s241, %s242
      %p254 = scmp.eq.s32.totalorder %s43, 1
      %p255 = por %p253, %p254
      %p257 = scmp.ne.s32.totalorder %s242, %s256
      %p258 = scmp.eq.s32.totalorder %s43, 0
      %p259 = por %p257, %p258
      %s261 = sadd.s32 %s260, 1
      %p264 = scmp.eq.s32.totalorder %s37, 1
      %p265 = scmp.ne.s32.totalorder %s260, %s262
      %p266 = scmp.eq.s32.totalorder %s37, 0
      %p267 = por %p265, %p266
      %p268 = scmp.ne.s32.totalorder %s260, %s262
      %p269 = scmp.eq.s32.totalorder %s42, 1
      %p270 = por %p268, %p269
      %p271 = scmp.ne.s32.totalorder %s262, %s263
      %p272 = scmp.eq.s32.totalorder %s42, 0
      %p273 = por %p271, %p272
      %p274 = scmp.ne.s32.totalorder %s262, %s263
      %p275 = scmp.eq.s32.totalorder %s43, 1
      %p276 = por %p274, %p275
      %p278 = scmp.ne.s32.totalorder %s263, %s277
      %p279 = scmp.eq.s32.totalorder %s43, 0
      %p280 = por %p278, %p279
      %s282 = sadd.s32 %s281, 1
      %p285 = scmp.eq.s32.totalorder %s37, 1
      %p286 = scmp.ne.s32.totalorder %s281, %s283
      %p287 = scmp.eq.s32.totalorder %s37, 0
      %p288 = por %p286, %p287
      %p289 = scmp.ne.s32.totalorder %s281, %s283
      %p290 = scmp.eq.s32.totalorder %s42, 1
      %p291 = por %p289, %p290
      %p292 = scmp.ne.s32.totalorder %s283, %s284
      %p293 = scmp.eq.s32.totalorder %s42, 0
      %p294 = por %p292, %p293
      %p295 = scmp.ne.s32.totalorder %s283, %s284
      %p296 = scmp.eq.s32.totalorder %s43, 1
      %p297 = por %p295, %p296
      %p299 = scmp.ne.s32.totalorder %s284, %s298
      %p300 = scmp.eq.s32.totalorder %s43, 0
      %p301 = por %p299, %p300
      %s303 = sadd.s32 %s302, 1
      %p306 = scmp.eq.s32.totalorder %s37, 1
      %p307 = scmp.ne.s32.totalorder %s302, %s304
      %p308 = scmp.eq.s32.totalorder %s37, 0
      %p309 = por %p307, %p308
      %p310 = scmp.ne.s32.totalorder %s302, %s304
      %p311 = scmp.eq.s32.totalorder %s42, 1
      %p312 = por %p310, %p311
      %p313 = scmp.ne.s32.totalorder %s304, %s305
      %p314 = scmp.eq.s32.totalorder %s42, 0
      %p315 = por %p313, %p314
      %p316 = scmp.ne.s32.totalorder %s304, %s305
      %p317 = scmp.eq.s32.totalorder %s43, 1
      %p318 = por %p316, %p317
      %p320 = scmp.ne.s32.totalorder %s305, %s319
      %p321 = scmp.eq.s32.totalorder %s43, 0
      %p322 = por %p320, %p321
      %s324 = sadd.s32 %s323, 1
      %p327 = scmp.eq.s32.totalorder %s37, 1
      %p328 = scmp.ne.s32.totalorder %s323, %s325
      %p329 = scmp.eq.s32.totalorder %s37, 0
      %p330 = por %p328, %p329
      %p331 = scmp.ne.s32.totalorder %s323, %s325
      %p332 = scmp.eq.s32.totalorder %s42, 1
      %p333 = por %p331, %p332
      %p334 = scmp.ne.s32.totalorder %s325, %s326
      %p335 = scmp.eq.s32.totalorder %s42, 0
      %p336 = por %p334, %p335
      %p337 = scmp.ne.s32.totalorder %s325, %s326
      %p338 = scmp.eq.s32.totalorder %s43, 1
      %p339 = por %p337, %p338
      %p341 = scmp.ne.s32.totalorder %s326, %s340
      %p342 = scmp.eq.s32.totalorder %s43, 0
      %p343 = por %p341, %p342
      %s345 = sadd.s32 %s344, 1
      %p348 = scmp.eq.s32.totalorder %s37, 1
      %p349 = scmp.ne.s32.totalorder %s344, %s346
      %p350 = scmp.eq.s32.totalorder %s37, 0
      %p351 = por %p349, %p350
      %p352 = scmp.ne.s32.totalorder %s344, %s346
      %p353 = scmp.eq.s32.totalorder %s42, 1
      %p354 = por %p352, %p353
      %p355 = scmp.ne.s32.totalorder %s346, %s347
      %p356 = scmp.eq.s32.totalorder %s42, 0
      %p357 = por %p355, %p356
      %p358 = scmp.ne.s32.totalorder %s346, %s347
      %p359 = scmp.eq.s32.totalorder %s43, 1
      %p360 = por %p358, %p359
      %p362 = scmp.ne.s32.totalorder %s347, %s361
      %p363 = scmp.eq.s32.totalorder %s43, 0
      %p364 = por %p362, %p363
      %s366 = sadd.s32 %s365, 1
      %p369 = scmp.eq.s32.totalorder %s37, 1
      %p370 = scmp.ne.s32.totalorder %s365, %s367
      %p371 = scmp.eq.s32.totalorder %s37, 0
      %p372 = por %p370, %p371
      %p373 = scmp.ne.s32.totalorder %s365, %s367
      %p374 = scmp.eq.s32.totalorder %s42, 1
      %p375 = por %p373, %p374
      %p376 = scmp.ne.s32.totalorder %s367, %s368
      %p377 = scmp.eq.s32.totalorder %s42, 0
      %p378 = por %p376, %p377
      %p379 = scmp.ne.s32.totalorder %s367, %s368
      %p380 = scmp.eq.s32.totalorder %s43, 1
      %p381 = por %p379, %p380
      %p383 = scmp.ne.s32.totalorder %s368, %s382
      %p384 = scmp.eq.s32.totalorder %s43, 0
      %p385 = por %p383, %p384
      %s387 = sadd.s32 %s386, 1
      %p390 = scmp.eq.s32.totalorder %s37, 1
      %p391 = scmp.ne.s32.totalorder %s386, %s388
      %p392 = scmp.eq.s32.totalorder %s37, 0
      %p393 = por %p391, %p392
      %p394 = scmp.ne.s32.totalorder %s386, %s388
      %p395 = scmp.eq.s32.totalorder %s42, 1
      %p396 = por %p394, %p395
      %p397 = scmp.ne.s32.totalorder %s388, %s389
      %p398 = scmp.eq.s32.totalorder %s42, 0
      %p399 = por %p397, %p398
      %p400 = scmp.ne.s32.totalorder %s388, %s389
      %p401 = scmp.eq.s32.totalorder %s43, 1
      %p402 = por %p400, %p401
      %p404 = scmp.ne.s32.totalorder %s389, %s403
      %p405 = scmp.eq.s32.totalorder %s43, 0
      %p406 = por %p404, %p405
      %s408 = sadd.s32 %s407, 1
      %p411 = scmp.eq.s32.totalorder %s37, 1
      %p412 = scmp.ne.s32.totalorder %s407, %s409
      %p413 = scmp.eq.s32.totalorder %s37, 0
      %p414 = por %p412, %p413
      %p415 = scmp.ne.s32.totalorder %s407, %s409
      %p416 = scmp.eq.s32.totalorder %s42, 1
      %p417 = por %p415, %p416
      %p418 = scmp.ne.s32.totalorder %s409, %s410
      %p419 = scmp.eq.s32.totalorder %s42, 0
      %p420 = por %p418, %p419
      %p421 = scmp.ne.s32.totalorder %s409, %s410
      %p422 = scmp.eq.s32.totalorder %s43, 1
      %p423 = por %p421, %p422
      %p425 = scmp.ne.s32.totalorder %s410, %s424
      %p426 = scmp.eq.s32.totalorder %s43, 0
      %p427 = por %p425, %p426
      %s429 = sadd.s32 %s428, 1
      %p432 = scmp.eq.s32.totalorder %s37, 1
      %p433 = scmp.ne.s32.totalorder %s428, %s430
      %p434 = scmp.eq.s32.totalorder %s37, 0
      %p435 = por %p433, %p434
      %p436 = scmp.ne.s32.totalorder %s428, %s430
      %p437 = scmp.eq.s32.totalorder %s42, 1
      %p438 = por %p436, %p437
      %p439 = scmp.ne.s32.totalorder %s430, %s431
      %p440 = scmp.eq.s32.totalorder %s42, 0
      %p441 = por %p439, %p440
      %p442 = scmp.ne.s32.totalorder %s430, %s431
      %p443 = scmp.eq.s32.totalorder %s43, 1
      %p444 = por %p442, %p443
      %p446 = scmp.ne.s32.totalorder %s431, %s445
      %p447 = scmp.eq.s32.totalorder %s43, 0
      %p448 = por %p446, %p447
      %s450 = sadd.s32 %s449, 1
      %p453 = scmp.eq.s32.totalorder %s37, 1
      %p454 = scmp.ne.s32.totalorder %s449, %s451
      %p455 = scmp.eq.s32.totalorder %s37, 0
      %p456 = por %p454, %p455
      %p457 = scmp.ne.s32.totalorder %s449, %s451
      %p458 = scmp.eq.s32.totalorder %s42, 1
      %p459 = por %p457, %p458
      %p460 = scmp.ne.s32.totalorder %s451, %s452
      %p461 = scmp.eq.s32.totalorder %s42, 0
      %p462 = por %p460, %p461
      %p463 = scmp.ne.s32.totalorder %s451, %s452
      %p464 = scmp.eq.s32.totalorder %s43, 1
      %p465 = por %p463, %p464
      %p467 = scmp.ne.s32.totalorder %s452, %s466
      %p468 = scmp.eq.s32.totalorder %s43, 0
      %p469 = por %p467, %p468
      %s470 = ssub.s32 %s37, %s44
      %p471 = scmp.eq.s32.totalorder %s470, 0
      %s473 = sadd.s32 %s472, 1
      %s474 = scalar_select %p471, %s472, %s473
      %p477 = pneg %p471
      %p478 = scmp.eq.s32.totalorder %s37, 1
      %p479 = por %p477, %p478
      %p480 = scmp.ne.s32.totalorder %s472, %s475
      %p481 = scmp.eq.s32.totalorder %s37, 0
      %p482 = por %p480, %p481
      %p483 = scmp.ne.s32.totalorder %s472, %s475
      %p484 = scmp.eq.s32.totalorder %s42, 1
      %p485 = por %p483, %p484
      %p486 = scmp.ne.s32.totalorder %s475, %s476
      %p487 = scmp.eq.s32.totalorder %s42, 0
      %p488 = por %p486, %p487
      %p489 = scmp.ne.s32.totalorder %s475, %s476
      %p490 = scmp.eq.s32.totalorder %s43, 1
      %p491 = por %p489, %p490
      %p493 = scmp.ne.s32.totalorder %s476, %s492
      %p494 = scmp.eq.s32.totalorder %s43, 0
      %p495 = por %p493, %p494
      %p496 = scmp.le.s32.totalorder 1, %s37
      %p497 = scmp.lt.s32.totalorder %s37, 3
      %p498 = pnand %p496, %p497
      %p499 = pneg %p498
      // Predicated region
      $region9: #{tpu_custom_call.1} parent=5 // pred_check
        _
      $region10: #{tpu_custom_call.1} parent=5 // pred_check_branch
        %501 = sbr.rel (%p498) target = $region12
      $region11: #{tpu_custom_call.1} parent=5 // pred_region
        %s502 = ssub.s32 %s37, 1
        // Predicated region
        $region13: #{tpu_custom_call.1} parent=11 // pred_check
          %p503 = pneg %p84
        $region14: #{tpu_custom_call.1} parent=11 // pred_check_branch
          %505 = sbr.rel (%p503) target = $region16
        $region15: #{tpu_custom_call.1} parent=11 // pred_region
          _
        $region16: #{tpu_custom_call.1} parent=11 // pred_fallthru
          _
        // Predicated region
        $region17: #{tpu_custom_call.1} parent=11 // pred_check
          %p506 = pneg %p105
        $region18: #{tpu_custom_call.1} parent=11 // pred_check_branch
          %508 = sbr.rel (%p506) target = $region20
        $region19: #{tpu_custom_call.1} parent=11 // pred_region
          %s510 = ssub.s32 16, 16
          %511 = vsyncadd [#allocation3], %s510
          %s513 = sshll.u32 [#allocation2], 4
          %s514 = int_to_ptr.vmem [resolvable:$true] %s513
          %516 = dma.hbm_to_vmem [thread:$0]  %s2, 16, %s514, [#allocation3]
        $region20: #{tpu_custom_call.1} parent=11 // pred_fallthru
          _
        // Predicated region
        $region21: #{tpu_custom_call.1} parent=11 // pred_check
          %p517 = pneg %p126
        $region22: #{tpu_custom_call.1} parent=11 // pred_check_branch
          %519 = sbr.rel (%p517) target = $region24
        $region23: #{tpu_custom_call.1} parent=11 // pred_region
          %s521 = ssub.s32 256, 256
          %522 = vsyncadd [#allocation6], %s521
          %s523 = sshll.u32 [#allocation5], 4
          %s524 = int_to_ptr.vmem [resolvable:$true] %s523
          %529 = dma.hbm_to_vmem [thread:$0]  %s3, 256, %s524, [#allocation6], 64, 64, 4
        $region24: #{tpu_custom_call.1} parent=11 // pred_fallthru
          _
        // Predicated region
        $region25: #{tpu_custom_call.1} parent=11 // pred_check
          %p530 = pneg %p147
        $region26: #{tpu_custom_call.1} parent=11 // pred_check_branch
          %532 = sbr.rel (%p530) target = $region28
        $region27: #{tpu_custom_call.1} parent=11 // pred_region
          %s534 = ssub.s32 16, 16
          %535 = vsyncadd [#allocation6], %s534
          %s537 = sshll.u32 [#allocation7], 4
          %s538 = int_to_ptr.vmem [resolvable:$true] %s537
          %540 = dma.hbm_to_vmem [thread:$0]  %s4, 16, %s538, [#allocation6]
        $region28: #{tpu_custom_call.1} parent=11 // pred_fallthru
          _
        // Predicated region
        $region29: #{tpu_custom_call.1} parent=11 // pred_check
          %p541 = pneg %p168
        $region30: #{tpu_custom_call.1} parent=11 // pred_check_branch
          %543 = sbr.rel (%p541) target = $region32
        $region31: #{tpu_custom_call.1} parent=11 // pred_region
          %s545 = ssub.s32 256, 256
          %546 = vsyncadd [#allocation9], %s545
          %s547 = sshll.u32 [#allocation8], 4
          %s548 = int_to_ptr.vmem [resolvable:$true] %s547
          %553 = dma.hbm_to_vmem [thread:$0]  %s5, 256, %s548, [#allocation9], 64, 64, 4
        $region32: #{tpu_custom_call.1} parent=11 // pred_fallthru
          _
        // Predicated region
        $region33: #{tpu_custom_call.1} parent=11 // pred_check
          %p554 = pneg %p189
        $region34: #{tpu_custom_call.1} parent=11 // pred_check_branch
          %556 = sbr.rel (%p554) target = $region36
        $region35: #{tpu_custom_call.1} parent=11 // pred_region
          %s558 = ssub.s32 16, 16
          %559 = vsyncadd [#allocation9], %s558
          %s561 = sshll.u32 [#allocation10], 4
          %s562 = int_to_ptr.vmem [resolvable:$true] %s561
          %564 = dma.hbm_to_vmem [thread:$0]  %s6, 16, %s562, [#allocation9]
        $region36: #{tpu_custom_call.1} parent=11 // pred_fallthru
          _
        // Predicated region
        $region37: #{tpu_custom_call.1} parent=11 // pred_check
          %p565 = pneg %p210
        $region38: #{tpu_custom_call.1} parent=11 // pred_check_branch
          %567 = sbr.rel (%p565) target = $region40
        $region39: #{tpu_custom_call.1} parent=11 // pred_region
          %s569 = ssub.s32 256, 256
          %570 = vsyncadd [#allocation12], %s569
          %s571 = sshll.u32 [#allocation11], 4
          %s572 = int_to_ptr.vmem [resolvable:$true] %s571
          %577 = dma.hbm_to_vmem [thread:$0]  %s7, 256, %s572, [#allocation12], 64, 64, 4
        $region40: #{tpu_custom_call.1} parent=11 // pred_fallthru
          _
        // Predicated region
        $region41: #{tpu_custom_call.1} parent=11 // pred_check
          %p578 = pneg %p231
        $region42: #{tpu_custom_call.1} parent=11 // pred_check_branch
          %580 = sbr.rel (%p578) target = $region44
        $region43: #{tpu_custom_call.1} parent=11 // pred_region
          %s582 = ssub.s32 16, 16
          %583 = vsyncadd [#allocation12], %s582
          %s585 = sshll.u32 [#allocation13], 4
          %s586 = int_to_ptr.vmem [resolvable:$true] %s585
          %588 = dma.hbm_to_vmem [thread:$0]  %s8, 16, %s586, [#allocation12]
        $region44: #{tpu_custom_call.1} parent=11 // pred_fallthru
          _
        // Predicated region
        $region45: #{tpu_custom_call.1} parent=11 // pred_check
          %p589 = pneg %p252
        $region46: #{tpu_custom_call.1} parent=11 // pred_check_branch
          %591 = sbr.rel (%p589) target = $region48
        $region47: #{tpu_custom_call.1} parent=11 // pred_region
          _
        $region48: #{tpu_custom_call.1} parent=11 // pred_fallthru
          _
        // Predicated region
        $region49: #{tpu_custom_call.1} parent=11 // pred_check
          %p592 = pneg %p273
        $region50: #{tpu_custom_call.1} parent=11 // pred_check_branch
          %594 = sbr.rel (%p592) target = $region52
        $region51: #{tpu_custom_call.1} parent=11 // pred_region
          %s596 = ssub.s32 16, 16
          %597 = vsyncadd [#allocation15], %s596
          %s599 = sshll.u32 [#allocation14], 4
          %s600 = int_to_ptr.vmem [resolvable:$true] %s599
          %602 = dma.hbm_to_vmem [thread:$0]  %s10, 16, %s600, [#allocation15]
        $region52: #{tpu_custom_call.1} parent=11 // pred_fallthru
          _
        // Predicated region
        $region53: #{tpu_custom_call.1} parent=11 // pred_check
          %p603 = pneg %p294
        $region54: #{tpu_custom_call.1} parent=11 // pred_check_branch
          %605 = sbr.rel (%p603) target = $region56
        $region55: #{tpu_custom_call.1} parent=11 // pred_region
          _
        $region56: #{tpu_custom_call.1} parent=11 // pred_fallthru
          _
        // Predicated region
        $region57: #{tpu_custom_call.1} parent=11 // pred_check
          %p606 = pneg %p315
        $region58: #{tpu_custom_call.1} parent=11 // pred_check_branch
          %608 = sbr.rel (%p606) target = $region60
        $region59: #{tpu_custom_call.1} parent=11 // pred_region
          %s610 = ssub.s32 16, 16
          %611 = vsyncadd [#allocation15], %s610
          %s613 = sshll.u32 [#allocation16], 4
          %s614 = int_to_ptr.vmem [resolvable:$true] %s613
          %616 = dma.hbm_to_vmem [thread:$0]  %s12, 16, %s614, [#allocation15]
        $region60: #{tpu_custom_call.1} parent=11 // pred_fallthru
          _
        // Predicated region
        $region61: #{tpu_custom_call.1} parent=11 // pred_check
          %p617 = pneg %p336
        $region62: #{tpu_custom_call.1} parent=11 // pred_check_branch
          %619 = sbr.rel (%p617) target = $region64
        $region63: #{tpu_custom_call.1} parent=11 // pred_region
          %s621 = ssub.s32 16, 16
          %622 = vsyncadd [#allocation18], %s621
          %s624 = sshll.u32 [#allocation17], 4
          %s625 = int_to_ptr.vmem [resolvable:$true] %s624
          %627 = dma.hbm_to_vmem [thread:$0]  %s13, 16, %s625, [#allocation18]
        $region64: #{tpu_custom_call.1} parent=11 // pred_fallthru
          _
        // Predicated region
        $region65: #{tpu_custom_call.1} parent=11 // pred_check
          %p628 = pneg %p357
        $region66: #{tpu_custom_call.1} parent=11 // pred_check_branch
          %630 = sbr.rel (%p628) target = $region68
        $region67: #{tpu_custom_call.1} parent=11 // pred_region
          %s632 = ssub.s32 16, 16
          %633 = vsyncadd [#allocation18], %s632
          %s635 = sshll.u32 [#allocation19], 4
          %s636 = int_to_ptr.vmem [resolvable:$true] %s635
          %638 = dma.hbm_to_vmem [thread:$0]  %s14, 16, %s636, [#allocation18]
        $region68: #{tpu_custom_call.1} parent=11 // pred_fallthru
          _
        // Predicated region
        $region69: #{tpu_custom_call.1} parent=11 // pred_check
          %p639 = pneg %p378
        $region70: #{tpu_custom_call.1} parent=11 // pred_check_branch
          %641 = sbr.rel (%p639) target = $region72
        $region71: #{tpu_custom_call.1} parent=11 // pred_region
          %s643 = ssub.s32 16, 16
          %644 = vsyncadd [#allocation21], %s643
          %s646 = sshll.u32 [#allocation20], 4
          %s647 = int_to_ptr.vmem [resolvable:$true] %s646
          %649 = dma.hbm_to_vmem [thread:$0]  %s15, 16, %s647, [#allocation21]
        $region72: #{tpu_custom_call.1} parent=11 // pred_fallthru
          _
        // Predicated region
        $region73: #{tpu_custom_call.1} parent=11 // pred_check
          %p650 = pneg %p399
        $region74: #{tpu_custom_call.1} parent=11 // pred_check_branch
          %652 = sbr.rel (%p650) target = $region76
        $region75: #{tpu_custom_call.1} parent=11 // pred_region
          %s654 = ssub.s32 16, 16
          %655 = vsyncadd [#allocation21], %s654
          %s657 = sshll.u32 [#allocation22], 4
          %s658 = int_to_ptr.vmem [resolvable:$true] %s657
          %660 = dma.hbm_to_vmem [thread:$0]  %s16, 16, %s658, [#allocation21]
        $region76: #{tpu_custom_call.1} parent=11 // pred_fallthru
          _
        // Predicated region
        $region77: #{tpu_custom_call.1} parent=11 // pred_check
          %p661 = pneg %p420
        $region78: #{tpu_custom_call.1} parent=11 // pred_check_branch
          %663 = sbr.rel (%p661) target = $region80
        $region79: #{tpu_custom_call.1} parent=11 // pred_region
          _
        $region80: #{tpu_custom_call.1} parent=11 // pred_fallthru
          _
        // Predicated region
        $region81: #{tpu_custom_call.1} parent=11 // pred_check
          %p664 = pneg %p441
        $region82: #{tpu_custom_call.1} parent=11 // pred_check_branch
          %666 = sbr.rel (%p664) target = $region84
        $region83: #{tpu_custom_call.1} parent=11 // pred_region
          _
        $region84: #{tpu_custom_call.1} parent=11 // pred_fallthru
          _
        // Predicated region
        $region85: #{tpu_custom_call.1} parent=11 // pred_check
          %p667 = pneg %p462
        $region86: #{tpu_custom_call.1} parent=11 // pred_check_branch
          %669 = sbr.rel (%p667) target = $region88
        $region87: #{tpu_custom_call.1} parent=11 // pred_region
          %s671 = ssub.s32 256, 256
          %672 = vsyncadd [#allocation24], %s671
          %s673 = sshll.u32 [#allocation23], 4
          %s674 = int_to_ptr.vmem [resolvable:$true] %s673
          %679 = dma.hbm_to_vmem [thread:$0]  %s19, 256, %s674, [#allocation24], 128, 128, 8
        $region88: #{tpu_custom_call.1} parent=11 // pred_fallthru
          _
      $region12: #{tpu_custom_call.1} parent=5 // pred_fallthru
        _
      %p680 = scmp.lt.s32.totalorder %s37, 2
      // Predicated region
      $region89: #{tpu_custom_call.1} parent=5 // pred_check
        %p681 = pneg %p680
      $region90: #{tpu_custom_call.1} parent=5 // pred_check_branch
        %683 = sbr.rel (%p681) target = $region92
      $region91: #{tpu_custom_call.1} parent=5 // pred_region
        // Predicated region
        $region93: #{tpu_custom_call.1} parent=91 // pred_check
          %p684 = pneg %p57
        $region94: #{tpu_custom_call.1} parent=91 // pred_check_branch
          %686 = sbr.rel (%p684) target = $region96
        $region95: #{tpu_custom_call.1} parent=91 // pred_region
          %s687 = smul.u32 2, %s37
          %p688 = scmp.lt.s32.totalorder %s687, 3
          %s689 = scalar_select %p688, %s687, 3
          %s690 = smul.addr %s689, 8
          %s691 = scalar_lea.vmem %s0, %s690
          %s692 = smul.u32 2, %s37
        $region96: #{tpu_custom_call.1} parent=91 // pred_fallthru
          _
      $region92: #{tpu_custom_call.1} parent=5 // pred_fallthru
        _
      %p693 = scmp.le.s32.totalorder 1, %s37
      %p694 = scmp.lt.s32.totalorder %s37, 3
      %p695 = pnand %p693, %p694
      %p696 = pneg %p695
      // Predicated region
      $region97: #{tpu_custom_call.1} parent=5 // pred_check
        _
      $region98: #{tpu_custom_call.1} parent=5 // pred_check_branch
        %698 = sbr.rel (%p695) target = $region100
      $region99: #{tpu_custom_call.1} parent=5 // pred_region
        %s699 = ssub.s32 %s37, 1
        // Predicated region
        $region101: #{tpu_custom_call.1} parent=99 // pred_check
          %p700 = pneg %p105
        $region102: #{tpu_custom_call.1} parent=99 // pred_check_branch
          %702 = sbr.rel (%p700) target = $region104
        $region103: #{tpu_custom_call.1} parent=99 // pred_region
          %703 = dma.done [#allocation3], 16
        $region104: #{tpu_custom_call.1} parent=99 // pred_fallthru
          _
        // Predicated region
        $region105: #{tpu_custom_call.1} parent=99 // pred_check
          %p704 = pneg %p126
        $region106: #{tpu_custom_call.1} parent=99 // pred_check_branch
          %706 = sbr.rel (%p704) target = $region108
        $region107: #{tpu_custom_call.1} parent=99 // pred_region
          %707 = dma.done [#allocation6], 256
        $region108: #{tpu_custom_call.1} parent=99 // pred_fallthru
          _
        // Predicated region
        $region109: #{tpu_custom_call.1} parent=99 // pred_check
          %p708 = pneg %p147
        $region110: #{tpu_custom_call.1} parent=99 // pred_check_branch
          %710 = sbr.rel (%p708) target = $region112
        $region111: #{tpu_custom_call.1} parent=99 // pred_region
          %711 = dma.done [#allocation6], 16
        $region112: #{tpu_custom_call.1} parent=99 // pred_fallthru
          _
        // Predicated region
        $region113: #{tpu_custom_call.1} parent=99 // pred_check
          %p712 = pneg %p168
        $region114: #{tpu_custom_call.1} parent=99 // pred_check_branch
          %714 = sbr.rel (%p712) target = $region116
        $region115: #{tpu_custom_call.1} parent=99 // pred_region
          %715 = dma.done [#allocation9], 256
        $region116: #{tpu_custom_call.1} parent=99 // pred_fallthru
          _
        // Predicated region
        $region117: #{tpu_custom_call.1} parent=99 // pred_check
          %p716 = pneg %p189
        $region118: #{tpu_custom_call.1} parent=99 // pred_check_branch
          %718 = sbr.rel (%p716) target = $region120
        $region119: #{tpu_custom_call.1} parent=99 // pred_region
          %719 = dma.done [#allocation9], 16
        $region120: #{tpu_custom_call.1} parent=99 // pred_fallthru
          _
        // Predicated region
        $region121: #{tpu_custom_call.1} parent=99 // pred_check
          %p720 = pneg %p210
        $region122: #{tpu_custom_call.1} parent=99 // pred_check_branch
          %722 = sbr.rel (%p720) target = $region124
        $region123: #{tpu_custom_call.1} parent=99 // pred_region
          %723 = dma.done [#allocation12], 256
        $region124: #{tpu_custom_call.1} parent=99 // pred_fallthru
          _
        // Predicated region
        $region125: #{tpu_custom_call.1} parent=99 // pred_check
          %p724 = pneg %p231
        $region126: #{tpu_custom_call.1} parent=99 // pred_check_branch
          %726 = sbr.rel (%p724) target = $region128
        $region127: #{tpu_custom_call.1} parent=99 // pred_region
          %727 = dma.done [#allocation12], 16
        $region128: #{tpu_custom_call.1} parent=99 // pred_fallthru
          _
        // Predicated region
        $region129: #{tpu_custom_call.1} parent=99 // pred_check
          %p728 = pneg %p273
        $region130: #{tpu_custom_call.1} parent=99 // pred_check_branch
          %730 = sbr.rel (%p728) target = $region132
        $region131: #{tpu_custom_call.1} parent=99 // pred_region
          %731 = dma.done [#allocation15], 16
        $region132: #{tpu_custom_call.1} parent=99 // pred_fallthru
          _
        // Predicated region
        $region133: #{tpu_custom_call.1} parent=99 // pred_check
          %p732 = pneg %p315
        $region134: #{tpu_custom_call.1} parent=99 // pred_check_branch
          %734 = sbr.rel (%p732) target = $region136
        $region135: #{tpu_custom_call.1} parent=99 // pred_region
          %735 = dma.done [#allocation15], 16
        $region136: #{tpu_custom_call.1} parent=99 // pred_fallthru
          _
        // Predicated region
        $region137: #{tpu_custom_call.1} parent=99 // pred_check
          %p736 = pneg %p336
        $region138: #{tpu_custom_call.1} parent=99 // pred_check_branch
          %738 = sbr.rel (%p736) target = $region140
        $region139: #{tpu_custom_call.1} parent=99 // pred_region
          %739 = dma.done [#allocation18], 16
        $region140: #{tpu_custom_call.1} parent=99 // pred_fallthru
          _
        // Predicated region
        $region141: #{tpu_custom_call.1} parent=99 // pred_check
          %p740 = pneg %p357
        $region142: #{tpu_custom_call.1} parent=99 // pred_check_branch
          %742 = sbr.rel (%p740) target = $region144
        $region143: #{tpu_custom_call.1} parent=99 // pred_region
          %743 = dma.done [#allocation18], 16
        $region144: #{tpu_custom_call.1} parent=99 // pred_fallthru
          _
        // Predicated region
        $region145: #{tpu_custom_call.1} parent=99 // pred_check
          %p744 = pneg %p378
        $region146: #{tpu_custom_call.1} parent=99 // pred_check_branch
          %746 = sbr.rel (%p744) target = $region148
        $region147: #{tpu_custom_call.1} parent=99 // pred_region
          %747 = dma.done [#allocation21], 16
        $region148: #{tpu_custom_call.1} parent=99 // pred_fallthru
          _
        // Predicated region
        $region149: #{tpu_custom_call.1} parent=99 // pred_check
          %p748 = pneg %p399
        $region150: #{tpu_custom_call.1} parent=99 // pred_check_branch
          %750 = sbr.rel (%p748) target = $region152
        $region151: #{tpu_custom_call.1} parent=99 // pred_region
          %751 = dma.done [#allocation21], 16
        $region152: #{tpu_custom_call.1} parent=99 // pred_fallthru
          _
        // Predicated region
        $region153: #{tpu_custom_call.1} parent=99 // pred_check
          %p752 = pneg %p462
        $region154: #{tpu_custom_call.1} parent=99 // pred_check_branch
          %754 = sbr.rel (%p752) target = $region156
        $region155: #{tpu_custom_call.1} parent=99 // pred_region
          %755 = dma.done [#allocation24], 256
        $region156: #{tpu_custom_call.1} parent=99 // pred_fallthru
          _
        %s756 = smul.u32 2, %s42
        %p757 = scmp.lt.s32.totalorder %s756, 3
        %s758 = scalar_select %p757, %s756, 3
        %s759 = smul.addr %s758, 8
        %s760 = scalar_lea.vmem %s0, %s759
        %p761 = pneg %p63
        %p762 = pneg %p60
        %p763 = pneg %p84
        %p764 = pneg %p81
        %p765 = pneg %p105
        %p766 = pneg %p102
        %p767 = pneg %p126
        %p768 = pneg %p123
        %p769 = pneg %p147
        %p770 = pneg %p144
        %p771 = pneg %p168
        %p772 = pneg %p165
        %p773 = pneg %p189
        %p774 = pneg %p186
        %p775 = pneg %p210
        %p776 = pneg %p207
        %p777 = pneg %p231
        %p778 = pneg %p228
        %p779 = pneg %p252
        %p780 = pneg %p249
        %p781 = pneg %p273
        %p782 = pneg %p270
        %p783 = pneg %p294
        %p784 = pneg %p291
        %p785 = pneg %p315
        %p786 = pneg %p312
        %p787 = pneg %p336
        %p788 = pneg %p333
        %p789 = pneg %p357
        %p790 = pneg %p354
        %p791 = pneg %p378
        %p792 = pneg %p375
        %p793 = pneg %p399
        %p794 = pneg %p396
        %p795 = pneg %p420
        %p796 = pneg %p417
        %p797 = pneg %p441
        %p798 = pneg %p438
        %p799 = pneg %p462
        %p800 = pneg %p459
        %p801 = pneg %p488
        %p802 = pneg %p485
        %s803 = sand.u32 %s475, 1
        %s804 = scalar_lea.sflag [#allocation4], %s803
        %s805 = sand.u32 %s475, 1
        %s806 = smul.addr %s805, 16
        %s807 = scalar_lea.vmem [#allocation25], %s806
        %s808 = smul.u32 2, %s42
        %p809 = scmp.lt.s32.totalorder %s808, 3
        %s810 = scalar_select %p809, %s808, 3
        %s811 = smul.addr %s810, 8
        %s812 = scalar_lea.vmem %s0, %s811
        %s813 = smul.u32 2, %s42
        %s814 = smul.u32 2, %s42
        %v816 = vld [vmem:[%s812] sm:$0xff]
        %v817 = vld [vmem:[%s812 + $0x8] sm:$0xff]
        %v818 = vpack.c.bf16 %v817, %v816
        %v819 = vld [vmem:[%s1] sm:$0xf]
        %v820 = vld [vmem:[%s1 + $0x4] sm:$0xf]
        %v821 = vld [vmem:[%s1 + $0x8] sm:$0xf]
        %v822 = vld [vmem:[%s1 + $0xc] sm:$0xf]
        %v823 = vld [vmem:[#allocation2] sm:$0x1]
        %v825 = vlaneseq
        %v826 = vshrl.u32 %v825, 7
        %v827 = vsub.s32 0, %v826
        %v828 = vrot.slane %v823, %v827
        %v834 = vunpack.c.l.b16 %v819
        %v835 = vunpack.c.l.b16 %v820
        %v836 = vunpack.c.l.b16 %v821
        %v837 = vunpack.c.l.b16 %v822
        %v838 = vpack.c.b16 %v835, %v834
        %v839 = vpack.c.b16 %v837, %v836
        %vm842 = vcmask 261120
        %v844 = vsel %vm842, %v818, 0
        %846 = vmatprep.subr.bf16.mxu0 0
        %847 = vmatpush1.bf16.msra.mxu0 %v838
        %848 = vmatprep.subr.bf16.mxu0 0
        %849 = vmatpush1.bf16.msra.mxu0 %v839
        %850 = vmatprep.subr.bf16.mxu0 0
        %851 = vmatpush1.bf16.msra.mxu0 0
        %852 = vmatprep.subr.bf16.mxu0 0
        %853 = vmatpush1.bf16.msra.mxu0 0
        %854 = vmatprep.subr.bf16.mxu0 0
        %855 = vmatpush1.bf16.msra.mxu0 0
        %856 = vmatprep.subr.bf16.mxu0 0
        %857 = vmatpush1.bf16.msra.mxu0 0
        %858 = vmatprep.subr.bf16.mxu0 0
        %859 = vmatpush1.bf16.msra.mxu0 0
        %860 = vmatprep.subr.bf16.mxu0 0
        %861 = vmatpush1.bf16.msra.mxu0 0
        %862 = vmatprep.subr.bf16.mxu0 0
        %863 = vmatpush1.bf16.msra.mxu0 0
        %864 = vmatprep.subr.bf16.mxu0 0
        %865 = vmatpush1.bf16.msra.mxu0 0
        %866 = vmatprep.subr.bf16.mxu0 0
        %867 = vmatpush1.bf16.msra.mxu0 0
        %868 = vmatprep.subr.bf16.mxu0 0
        %869 = vmatpush1.bf16.msra.mxu0 0
        %870 = vmatprep.subr.bf16.mxu0 0
        %871 = vmatpush1.bf16.msra.mxu0 0
        %872 = vmatprep.subr.bf16.mxu0 0
        %873 = vmatpush1.bf16.msra.mxu0 0
        %874 = vmatprep.subr.bf16.mxu0 0
        %875 = vmatpush1.bf16.msra.mxu0 0
        %876 = vmatprep.subr.bf16.mxu0 0
        %877 = vmatpush1.bf16.msra.mxu0 0
        %878 = vmatprep.mubr.bf16.mxu0 0
        %879 = vmatmul.mubr.bf16.gmra.mrb[0].mxu0 %v844
        %v880 = vpop.f32.mrb[0].mxu0
        %v881 = vadd.f32 %v828, %v880
        %v882 = vpop.f32.mrb[0].mxu0
        %v883 = vpop.f32.mrb[0].mxu0
        %v884 = vadd.f32 %v828, %v883
        %v885 = vpop.f32.mrb[0].mxu0
        %886 = vdwg.mxu0
        %v887 = vld [vmem:[#allocation5] sm:$0xf]
        %v888 = vld [vmem:[#allocation5 + $0x4] sm:$0xf]
        %v889 = vld [vmem:[#allocation5 + $0x8] sm:$0xf]
        %v890 = vld [vmem:[#allocation5 + $0xc] sm:$0xf]
        %v891 = vld [vmem:[#allocation7] sm:$0x1]
        %v893 = vlaneseq
        %v894 = vshrl.u32 %v893, 7
        %v895 = vsub.s32 0, %v894
        %v896 = vrot.slane %v891, %v895
        %v902 = vunpack.c.l.b16 %v887
        %v903 = vunpack.c.l.b16 %v888
        %v904 = vunpack.c.l.b16 %v889
        %v905 = vunpack.c.l.b16 %v890
        %v906 = vpack.c.b16 %v903, %v902
        %v907 = vpack.c.b16 %v905, %v904
        %910 = vmatprep.subr.bf16.mxu0 0
        %911 = vmatpush1.bf16.msra.mxu0 %v906
        %912 = vmatprep.subr.bf16.mxu0 0
        %913 = vmatpush1.bf16.msra.mxu0 %v907
        %914 = vmatprep.subr.bf16.mxu0 0
        %915 = vmatpush1.bf16.msra.mxu0 0
        %916 = vmatprep.subr.bf16.mxu0 0
        %917 = vmatpush1.bf16.msra.mxu0 0
        %918 = vmatprep.subr.bf16.mxu0 0
        %919 = vmatpush1.bf16.msra.mxu0 0
        %920 = vmatprep.subr.bf16.mxu0 0
        %921 = vmatpush1.bf16.msra.mxu0 0
        %922 = vmatprep.subr.bf16.mxu0 0
        %923 = vmatpush1.bf16.msra.mxu0 0
        %924 = vmatprep.subr.bf16.mxu0 0
        %925 = vmatpush1.bf16.msra.mxu0 0
        %926 = vmatprep.subr.bf16.mxu0 0
        %927 = vmatpush1.bf16.msra.mxu0 0
        %928 = vmatprep.subr.bf16.mxu0 0
        %929 = vmatpush1.bf16.msra.mxu0 0
        %930 = vmatprep.subr.bf16.mxu0 0
        %931 = vmatpush1.bf16.msra.mxu0 0
        %932 = vmatprep.subr.bf16.mxu0 0
        %933 = vmatpush1.bf16.msra.mxu0 0
        %934 = vmatprep.subr.bf16.mxu0 0
        %935 = vmatpush1.bf16.msra.mxu0 0
        %936 = vmatprep.subr.bf16.mxu0 0
        %937 = vmatpush1.bf16.msra.mxu0 0
        %938 = vmatprep.subr.bf16.mxu0 0
        %939 = vmatpush1.bf16.msra.mxu0 0
        %940 = vmatprep.subr.bf16.mxu0 0
        %941 = vmatpush1.bf16.msra.mxu0 0
        %942 = vmatprep.mubr.bf16.mxu0 0
        %943 = vmatmul.mubr.bf16.gmra.mrb[0].mxu0 %v844
        %v944 = vpop.f32.mrb[0].mxu0
        %v945 = vadd.f32 %v896, %v944
        %v946 = vpop.f32.mrb[0].mxu0
        %v947 = vpop.f32.mrb[0].mxu0
        %v948 = vadd.f32 %v896, %v947
        %v949 = vpop.f32.mrb[0].mxu0
        %950 = vdwg.mxu0
        %v951 = vld [vmem:[#allocation8] sm:$0xf]
        %v952 = vld [vmem:[#allocation8 + $0x4] sm:$0xf]
        %v953 = vld [vmem:[#allocation8 + $0x8] sm:$0xf]
        %v954 = vld [vmem:[#allocation8 + $0xc] sm:$0xf]
        %v955 = vld [vmem:[#allocation10] sm:$0x1]
        %v957 = vlaneseq
        %v958 = vshrl.u32 %v957, 7
        %v959 = vsub.s32 0, %v958
        %v960 = vrot.slane %v955, %v959
        %v966 = vunpack.c.l.b16 %v951
        %v967 = vunpack.c.l.b16 %v952
        %v968 = vunpack.c.l.b16 %v953
        %v969 = vunpack.c.l.b16 %v954
        %v970 = vpack.c.b16 %v967, %v966
        %v971 = vpack.c.b16 %v969, %v968
        %974 = vmatprep.subr.bf16.mxu0 0
        %975 = vmatpush1.bf16.msra.mxu0 %v970
        %976 = vmatprep.subr.bf16.mxu0 0
        %977 = vmatpush1.bf16.msra.mxu0 %v971
        %978 = vmatprep.subr.bf16.mxu0 0
        %979 = vmatpush1.bf16.msra.mxu0 0
        %980 = vmatprep.subr.bf16.mxu0 0
        %981 = vmatpush1.bf16.msra.mxu0 0
        %982 = vmatprep.subr.bf16.mxu0 0
        %983 = vmatpush1.bf16.msra.mxu0 0
        %984 = vmatprep.subr.bf16.mxu0 0
        %985 = vmatpush1.bf16.msra.mxu0 0
        %986 = vmatprep.subr.bf16.mxu0 0
        %987 = vmatpush1.bf16.msra.mxu0 0
        %988 = vmatprep.subr.bf16.mxu0 0
        %989 = vmatpush1.bf16.msra.mxu0 0
        %990 = vmatprep.subr.bf16.mxu0 0
        %991 = vmatpush1.bf16.msra.mxu0 0
        %992 = vmatprep.subr.bf16.mxu0 0
        %993 = vmatpush1.bf16.msra.mxu0 0
        %994 = vmatprep.subr.bf16.mxu0 0
        %995 = vmatpush1.bf16.msra.mxu0 0
        %996 = vmatprep.subr.bf16.mxu0 0
        %997 = vmatpush1.bf16.msra.mxu0 0
        %998 = vmatprep.subr.bf16.mxu0 0
        %999 = vmatpush1.bf16.msra.mxu0 0
        %1000 = vmatprep.subr.bf16.mxu0 0
        %1001 = vmatpush1.bf16.msra.mxu0 0
        %1002 = vmatprep.subr.bf16.mxu0 0
        %1003 = vmatpush1.bf16.msra.mxu0 0
        %1004 = vmatprep.subr.bf16.mxu0 0
        %1005 = vmatpush1.bf16.msra.mxu0 0
        %1006 = vmatprep.mubr.bf16.mxu0 0
        %1007 = vmatmul.mubr.bf16.gmra.mrb[0].mxu0 %v844
        %v1008 = vpop.f32.mrb[0].mxu0
        %v1009 = vadd.f32 %v960, %v1008
        %v1010 = vpop.f32.mrb[0].mxu0
        %v1011 = vpop.f32.mrb[0].mxu0
        %v1012 = vadd.f32 %v960, %v1011
        %v1013 = vpop.f32.mrb[0].mxu0
        %1014 = vdwg.mxu0
        %v1015 = vld [vmem:[%s17] sm:$0xff]
        %v1016 = vld [vmem:[%s17 + $0x8] sm:$0xff]
        %v1017 = vld [vmem:[%s18] sm:$0xff]
        %v1018 = vld [vmem:[%s18 + $0x8] sm:$0xff]
        %v1019 = vld [vmem:[#allocation23] sm:$0xff]
        %v1020 = vld [vmem:[#allocation23 + $0x8] sm:$0xff]
        %1023 = vrot.lane.b32.xlu0 %v881, 100
        %v1024 = vpop.permute.xlu0 %1023
        %1025 = vrot.lane.b32.xlu0 %v884, 100
        %v1026 = vpop.permute.xlu0 %1025
        %1029 = vrot.lane.b32.xlu0 %v881, 4
        %v1030 = vpop.permute.xlu0 %1029
        %1031 = vrot.lane.b32.xlu0 %v884, 4
        %v1032 = vpop.permute.xlu0 %1031
        %vm1035 = vcmask 31744
        %v1036 = vsel %vm1035, %v1024, %v1030
        %v1037 = vsel %vm1035, %v1026, %v1032
        %1038 = vrot.lane.b32.xlu0 %v881, 124
        %v1039 = vpop.permute.xlu0 %1038
        %1040 = vrot.lane.b32.xlu0 %v884, 124
        %v1041 = vpop.permute.xlu0 %1040
        %1044 = vrot.lane.b32.xlu0 %v881, 28
        %v1045 = vpop.permute.xlu0 %1044
        %1046 = vrot.lane.b32.xlu0 %v884, 28
        %v1047 = vpop.permute.xlu0 %1046
        %vm1050 = vcmask 228352
        %v1051 = vsel %vm1050, %v1039, %v1045
        %v1052 = vsel %vm1050, %v1041, %v1047
        %v1053 = vmul.f32 %v881, %v1015
        %v1054 = vmul.f32 %v884, %v1016
        %v1055 = vmul.f32 %v1051, %v1017
        %v1056 = vmul.f32 %v1052, %v1018
        %v1057 = vadd.f32 %v1053, %v1055
        %v1058 = vadd.f32 %v1054, %v1056
        %v1059 = vmul.f32 %v1036, %v1019
        %v1060 = vmul.f32 %v1037, %v1020
        %v1061 = vadd.f32 %v1057, %v1059
        %v1062 = vadd.f32 %v1058, %v1060
        %v1063 = vpack.c.bf16 %v1062, %v1061
        %1066 = vrot.lane.b32.xlu0 %v945, 100
        %v1067 = vpop.permute.xlu0 %1066
        %1068 = vrot.lane.b32.xlu0 %v948, 100
        %v1069 = vpop.permute.xlu0 %1068
        %1072 = vrot.lane.b32.xlu0 %v945, 4
        %v1073 = vpop.permute.xlu0 %1072
        %1074 = vrot.lane.b32.xlu0 %v948, 4
        %v1075 = vpop.permute.xlu0 %1074
        %v1078 = vsel %vm1035, %v1067, %v1073
        %v1079 = vsel %vm1035, %v1069, %v1075
        %1080 = vrot.lane.b32.xlu0 %v945, 124
        %v1081 = vpop.permute.xlu0 %1080
        %1082 = vrot.lane.b32.xlu0 %v948, 124
        %v1083 = vpop.permute.xlu0 %1082
        %1086 = vrot.lane.b32.xlu0 %v945, 28
        %v1087 = vpop.permute.xlu0 %1086
        %1088 = vrot.lane.b32.xlu0 %v948, 28
        %v1089 = vpop.permute.xlu0 %1088
        %v1092 = vsel %vm1050, %v1081, %v1087
        %v1093 = vsel %vm1050, %v1083, %v1089
        %v1094 = vmul.f32 %v945, %v1015
        %v1095 = vmul.f32 %v948, %v1016
        %v1096 = vmul.f32 %v1092, %v1017
        %v1097 = vmul.f32 %v1093, %v1018
        %v1098 = vadd.f32 %v1094, %v1096
        %v1099 = vadd.f32 %v1095, %v1097
        %v1100 = vmul.f32 %v1078, %v1019
        %v1101 = vmul.f32 %v1079, %v1020
        %v1102 = vadd.f32 %v1098, %v1100
        %v1103 = vadd.f32 %v1099, %v1101
        %v1104 = vpack.c.bf16 %v1103, %v1102
        %v1105 = vpack.c.bf16 %v1012, %v1009
        %vm1106 = vcmask 64512
        %v1108 = vsel %vm1106, %v1063, 0
        %v1111 = vsel %vm1106, %v1104, 0
        %1113 = vmatprep.subr.bf16.mxu0 0
        %1114 = vmatpush1.bf16.xpose.msra.mxu0 %v1111
        %1115 = vmatprep.subr.bf16.mxu0 0
        %1116 = vmatpush1.bf16.xpose.msra.mxu0 0
        %1117 = vmatprep.subr.bf16.mxu0 0
        %1118 = vmatpush1.bf16.xpose.msra.mxu0 0
        %1119 = vmatprep.subr.bf16.mxu0 0
        %1120 = vmatpush1.bf16.xpose.msra.mxu0 0
        %1121 = vmatprep.subr.bf16.mxu0 0
        %1122 = vmatpush1.bf16.xpose.msra.mxu0 0
        %1123 = vmatprep.subr.bf16.mxu0 0
        %1124 = vmatpush1.bf16.xpose.msra.mxu0 0
        %1125 = vmatprep.subr.bf16.mxu0 0
        %1126 = vmatpush1.bf16.xpose.msra.mxu0 0
        %1127 = vmatprep.subr.bf16.mxu0 0
        %1128 = vmatpush1.bf16.xpose.msra.mxu0 0
        %1129 = vmatprep.subr.bf16.mxu0 0
        %1130 = vmatpush1.bf16.xpose.msra.mxu0 0
        %1131 = vmatprep.subr.bf16.mxu0 0
        %1132 = vmatpush1.bf16.xpose.msra.mxu0 0
        %1133 = vmatprep.subr.bf16.mxu0 0
        %1134 = vmatpush1.bf16.xpose.msra.mxu0 0
        %1135 = vmatprep.subr.bf16.mxu0 0
        %1136 = vmatpush1.bf16.xpose.msra.mxu0 0
        %1137 = vmatprep.subr.bf16.mxu0 0
        %1138 = vmatpush1.bf16.xpose.msra.mxu0 0
        %1139 = vmatprep.subr.bf16.mxu0 0
        %1140 = vmatpush1.bf16.xpose.msra.mxu0 0
        %1141 = vmatprep.subr.bf16.mxu0 0
        %1142 = vmatpush1.bf16.xpose.msra.mxu0 0
        %1143 = vmatprep.subr.bf16.mxu0 0
        %1144 = vmatpush1.bf16.xpose.msra.mxu0 0
        %1145 = vmatprep.mubr.bf16.mxu0 0
        %1146 = vmatmul.mubr.bf16.gmra.mrb[0].mxu0 %v1108
        %v1147 = vpop.f32.mrb[0].mxu0
        %v1148 = vadd.f32 0.0, %v1147
        %v1149 = vpop.f32.mrb[0].mxu0
        %v1150 = vpop.f32.mrb[0].mxu0
        %v1151 = vpop.f32.mrb[0].mxu0
        %1152 = vdwg.mxu0
        %v1153 = vsel %vm1106, %v1148, -inf
        %1154 = vmax.xlane.f32.xlu0 %v1153
        %v1155 = vpop.xlane.xlu0 %1154
        %v1156 = vsub.f32 %v1148, %v1155
        %v1157 = vmul.f32 %v1156, 1.442695
        %v1158 = vpow.pop %v1157
        %v1159 = vsel %vm1106, %v1158, 0.0
        %1160 = vadd.xlane.f32.xlu0 %v1159
        %v1161 = vpop.xlane.xlu0 %1160
        %v1162 = vrcp.pop %v1161
        %v1163 = vmul.f32 %v1158, %v1162
        %v1164 = vpack.c.bf16 %v1163, %v1163
        %v1166 = vsel %vm1106, %v1164, 0
        %vm1168 = vcmask 1043456
        %v1170 = vsel %vm1168, %v1105, 0
        %1172 = vmatprep.subr.bf16.mxu0 0
        %1173 = vmatpush1.bf16.msra.mxu0 %v1170
        %1174 = vmatprep.subr.bf16.mxu0 0
        %1175 = vmatpush1.bf16.msra.mxu0 0
        %1176 = vmatprep.subr.bf16.mxu0 0
        %1177 = vmatpush1.bf16.msra.mxu0 0
        %1178 = vmatprep.subr.bf16.mxu0 0
        %1179 = vmatpush1.bf16.msra.mxu0 0
        %1180 = vmatprep.subr.bf16.mxu0 0
        %1181 = vmatpush1.bf16.msra.mxu0 0
        %1182 = vmatprep.subr.bf16.mxu0 0
        %1183 = vmatpush1.bf16.msra.mxu0 0
        %1184 = vmatprep.subr.bf16.mxu0 0
        %1185 = vmatpush1.bf16.msra.mxu0 0
        %1186 = vmatprep.subr.bf16.mxu0 0
        %1187 = vmatpush1.bf16.msra.mxu0 0
        %1188 = vmatprep.subr.bf16.mxu0 0
        %1189 = vmatpush1.bf16.msra.mxu0 0
        %1190 = vmatprep.subr.bf16.mxu0 0
        %1191 = vmatpush1.bf16.msra.mxu0 0
        %1192 = vmatprep.subr.bf16.mxu0 0
        %1193 = vmatpush1.bf16.msra.mxu0 0
        %1194 = vmatprep.subr.bf16.mxu0 0
        %1195 = vmatpush1.bf16.msra.mxu0 0
        %1196 = vmatprep.subr.bf16.mxu0 0
        %1197 = vmatpush1.bf16.msra.mxu0 0
        %1198 = vmatprep.subr.bf16.mxu0 0
        %1199 = vmatpush1.bf16.msra.mxu0 0
        %1200 = vmatprep.subr.bf16.mxu0 0
        %1201 = vmatpush1.bf16.msra.mxu0 0
        %1202 = vmatprep.subr.bf16.mxu0 0
        %1203 = vmatpush1.bf16.msra.mxu0 0
        %1204 = vmatprep.mubr.bf16.mxu0 0
        %1205 = vmatmul.mubr.bf16.gmra.mrb[0].mxu0 %v1166
        %v1206 = vpop.f32.mrb[0].mxu0
        %v1207 = vadd.f32 0.0, %v1206
        %v1208 = vpop.f32.mrb[0].mxu0
        %v1209 = vpop.f32.mrb[0].mxu0
        %v1210 = vpop.f32.mrb[0].mxu0
        %1211 = vdwg.mxu0
        %1213 = vrot.lane.b32.xlu0 %v1063, 120
        %v1214 = vpop.permute.xlu0 %1213
        %1216 = vrot.lane.b32.xlu0 %v1104, 120
        %v1217 = vpop.permute.xlu0 %1216
        %v1219 = vsel %vm1106, %v1214, 0
        %v1222 = vsel %vm1106, %v1217, 0
        %1224 = vmatprep.subr.bf16.mxu0 0
        %1225 = vmatpush1.bf16.xpose.msra.mxu0 %v1222
        %1226 = vmatprep.subr.bf16.mxu0 0
        %1227 = vmatpush1.bf16.xpose.msra.mxu0 0
        %1228 = vmatprep.subr.bf16.mxu0 0
        %1229 = vmatpush1.bf16.xpose.msra.mxu0 0
        %1230 = vmatprep.subr.bf16.mxu0 0
        %1231 = vmatpush1.bf16.xpose.msra.mxu0 0
        %1232 = vmatprep.subr.bf16.mxu0 0
        %1233 = vmatpush1.bf16.xpose.msra.mxu0 0
        %1234 = vmatprep.subr.bf16.mxu0 0
        %1235 = vmatpush1.bf16.xpose.msra.mxu0 0
        %1236 = vmatprep.subr.bf16.mxu0 0
        %1237 = vmatpush1.bf16.xpose.msra.mxu0 0
        %1238 = vmatprep.subr.bf16.mxu0 0
        %1239 = vmatpush1.bf16.xpose.msra.mxu0 0
        %1240 = vmatprep.subr.bf16.mxu0 0
        %1241 = vmatpush1.bf16.xpose.msra.mxu0 0
        %1242 = vmatprep.subr.bf16.mxu0 0
        %1243 = vmatpush1.bf16.xpose.msra.mxu0 0
        %1244 = vmatprep.subr.bf16.mxu0 0
        %1245 = vmatpush1.bf16.xpose.msra.mxu0 0
        %1246 = vmatprep.subr.bf16.mxu0 0
        %1247 = vmatpush1.bf16.xpose.msra.mxu0 0
        %1248 = vmatprep.subr.bf16.mxu0 0
        %1249 = vmatpush1.bf16.xpose.msra.mxu0 0
        %1250 = vmatprep.subr.bf16.mxu0 0
        %1251 = vmatpush1.bf16.xpose.msra.mxu0 0
        %1252 = vmatprep.subr.bf16.mxu0 0
        %1253 = vmatpush1.bf16.xpose.msra.mxu0 0
        %1254 = vmatprep.subr.bf16.mxu0 0
        %1255 = vmatpush1.bf16.xpose.msra.mxu0 0
        %1256 = vmatprep.mubr.bf16.mxu0 0
        %1257 = vmatmul.mubr.bf16.gmra.mrb[0].mxu0 %v1219
        %v1258 = vpop.f32.mrb[0].mxu0
        %v1259 = vadd.f32 0.0, %v1258
        %v1260 = vpop.f32.mrb[0].mxu0
        %v1261 = vpop.f32.mrb[0].mxu0
        %v1262 = vpop.f32.mrb[0].mxu0
        %1263 = vdwg.mxu0
        %v1264 = vsel %vm1106, %v1259, -inf
        %1265 = vmax.xlane.f32.xlu0 %v1264
        %v1266 = vpop.xlane.xlu0 %1265
        %v1267 = vsub.f32 %v1259, %v1266
        %v1268 = vmul.f32 %v1267, 1.442695
        %v1269 = vpow.pop %v1268
        %v1270 = vsel %vm1106, %v1269, 0.0
        %1271 = vadd.xlane.f32.xlu0 %v1270
        %v1272 = vpop.xlane.xlu0 %1271
        %v1273 = vrcp.pop %v1272
        %v1274 = vmul.f32 %v1269, %v1273
        %v1275 = vpack.c.bf16 %v1274, %v1274
        %1277 = vrot.lane.b32.xlu0 %v1105, 120
        %v1278 = vpop.permute.xlu0 %1277
        %v1280 = vsel %vm1106, %v1275, 0
        %v1283 = vsel %vm1168, %v1278, 0
        %1285 = vmatprep.subr.bf16.mxu0 0
        %1286 = vmatpush1.bf16.msra.mxu0 %v1283
        %1287 = vmatprep.subr.bf16.mxu0 0
        %1288 = vmatpush1.bf16.msra.mxu0 0
        %1289 = vmatprep.subr.bf16.mxu0 0
        %1290 = vmatpush1.bf16.msra.mxu0 0
        %1291 = vmatprep.subr.bf16.mxu0 0
        %1292 = vmatpush1.bf16.msra.mxu0 0
        %1293 = vmatprep.subr.bf16.mxu0 0
        %1294 = vmatpush1.bf16.msra.mxu0 0
        %1295 = vmatprep.subr.bf16.mxu0 0
        %1296 = vmatpush1.bf16.msra.mxu0 0
        %1297 = vmatprep.subr.bf16.mxu0 0
        %1298 = vmatpush1.bf16.msra.mxu0 0
        %1299 = vmatprep.subr.bf16.mxu0 0
        %1300 = vmatpush1.bf16.msra.mxu0 0
        %1301 = vmatprep.subr.bf16.mxu0 0
        %1302 = vmatpush1.bf16.msra.mxu0 0
        %1303 = vmatprep.subr.bf16.mxu0 0
        %1304 = vmatpush1.bf16.msra.mxu0 0
        %1305 = vmatprep.subr.bf16.mxu0 0
        %1306 = vmatpush1.bf16.msra.mxu0 0
        %1307 = vmatprep.subr.bf16.mxu0 0
        %1308 = vmatpush1.bf16.msra.mxu0 0
        %1309 = vmatprep.subr.bf16.mxu0 0
        %1310 = vmatpush1.bf16.msra.mxu0 0
        %1311 = vmatprep.subr.bf16.mxu0 0
        %1312 = vmatpush1.bf16.msra.mxu0 0
        %1313 = vmatprep.subr.bf16.mxu0 0
        %1314 = vmatpush1.bf16.msra.mxu0 0
        %1315 = vmatprep.subr.bf16.mxu0 0
        %1316 = vmatpush1.bf16.msra.mxu0 0
        %1317 = vmatprep.mubr.bf16.mxu0 0
        %1318 = vmatmul.mubr.bf16.gmra.mrb[0].mxu0 %v1280
        %v1319 = vpop.f32.mrb[0].mxu0
        %v1320 = vadd.f32 0.0, %v1319
        %v1321 = vpop.f32.mrb[0].mxu0
        %v1322 = vpop.f32.mrb[0].mxu0
        %v1323 = vpop.f32.mrb[0].mxu0
        %1324 = vdwg.mxu0
        %1325 = vrot.lane.b32.xlu0 %v1063, 112
        %v1326 = vpop.permute.xlu0 %1325
        %1327 = vrot.lane.b32.xlu0 %v1104, 112
        %v1328 = vpop.permute.xlu0 %1327
        %v1330 = vsel %vm1106, %v1326, 0
        %v1333 = vsel %vm1106, %v1328, 0
        %1335 = vmatprep.subr.bf16.mxu0 0
        %1336 = vmatpush1.bf16.xpose.msra.mxu0 %v1333
        %1337 = vmatprep.subr.bf16.mxu0 0
        %1338 = vmatpush1.bf16.xpose.msra.mxu0 0
        %1339 = vmatprep.subr.bf16.mxu0 0
        %1340 = vmatpush1.bf16.xpose.msra.mxu0 0
        %1341 = vmatprep.subr.bf16.mxu0 0
        %1342 = vmatpush1.bf16.xpose.msra.mxu0 0
        %1343 = vmatprep.subr.bf16.mxu0 0
        %1344 = vmatpush1.bf16.xpose.msra.mxu0 0
        %1345 = vmatprep.subr.bf16.mxu0 0
        %1346 = vmatpush1.bf16.xpose.msra.mxu0 0
        %1347 = vmatprep.subr.bf16.mxu0 0
        %1348 = vmatpush1.bf16.xpose.msra.mxu0 0
        %1349 = vmatprep.subr.bf16.mxu0 0
        %1350 = vmatpush1.bf16.xpose.msra.mxu0 0
        %1351 = vmatprep.subr.bf16.mxu0 0
        %1352 = vmatpush1.bf16.xpose.msra.mxu0 0
        %1353 = vmatprep.subr.bf16.mxu0 0
        %1354 = vmatpush1.bf16.xpose.msra.mxu0 0
        %1355 = vmatprep.subr.bf16.mxu0 0
        %1356 = vmatpush1.bf16.xpose.msra.mxu0 0
        %1357 = vmatprep.subr.bf16.mxu0 0
        %1358 = vmatpush1.bf16.xpose.msra.mxu0 0
        %1359 = vmatprep.subr.bf16.mxu0 0
        %1360 = vmatpush1.bf16.xpose.msra.mxu0 0
        %1361 = vmatprep.subr.bf16.mxu0 0
        %1362 = vmatpush1.bf16.xpose.msra.mxu0 0
        %1363 = vmatprep.subr.bf16.mxu0 0
        %1364 = vmatpush1.bf16.xpose.msra.mxu0 0
        %1365 = vmatprep.subr.bf16.mxu0 0
        %1366 = vmatpush1.bf16.xpose.msra.mxu0 0
        %1367 = vmatprep.mubr.bf16.mxu0 0
        %1368 = vmatmul.mubr.bf16.gmra.mrb[0].mxu0 %v1330
        %v1369 = vpop.f32.mrb[0].mxu0
        %v1370 = vadd.f32 0.0, %v1369
        %v1371 = vpop.f32.mrb[0].mxu0
        %v1372 = vpop.f32.mrb[0].mxu0
        %v1373 = vpop.f32.mrb[0].mxu0
        %1374 = vdwg.mxu0
        %v1375 = vsel %vm1106, %v1370, -inf
        %1376 = vmax.xlane.f32.xlu0 %v1375
        %v1377 = vpop.xlane.xlu0 %1376
        %v1378 = vsub.f32 %v1370, %v1377
        %v1379 = vmul.f32 %v1378, 1.442695
        %v1380 = vpow.pop %v1379
        %v1381 = vsel %vm1106, %v1380, 0.0
        %1382 = vadd.xlane.f32.xlu0 %v1381
        %v1383 = vpop.xlane.xlu0 %1382
        %v1384 = vrcp.pop %v1383
        %v1385 = vmul.f32 %v1380, %v1384
        %v1386 = vpack.c.bf16 %v1385, %v1385
        %1387 = vrot.lane.b32.xlu0 %v1105, 112
        %v1388 = vpop.permute.xlu0 %1387
        %v1390 = vsel %vm1106, %v1386, 0
        %v1393 = vsel %vm1168, %v1388, 0
        %1395 = vmatprep.subr.bf16.mxu0 0
        %1396 = vmatpush1.bf16.msra.mxu0 %v1393
        %1397 = vmatprep.subr.bf16.mxu0 0
        %1398 = vmatpush1.bf16.msra.mxu0 0
        %1399 = vmatprep.subr.bf16.mxu0 0
        %1400 = vmatpush1.bf16.msra.mxu0 0
        %1401 = vmatprep.subr.bf16.mxu0 0
        %1402 = vmatpush1.bf16.msra.mxu0 0
        %1403 = vmatprep.subr.bf16.mxu0 0
        %1404 = vmatpush1.bf16.msra.mxu0 0
        %1405 = vmatprep.subr.bf16.mxu0 0
        %1406 = vmatpush1.bf16.msra.mxu0 0
        %1407 = vmatprep.subr.bf16.mxu0 0
        %1408 = vmatpush1.bf16.msra.mxu0 0
        %1409 = vmatprep.subr.bf16.mxu0 0
        %1410 = vmatpush1.bf16.msra.mxu0 0
        %1411 = vmatprep.subr.bf16.mxu0 0
        %1412 = vmatpush1.bf16.msra.mxu0 0
        %1413 = vmatprep.subr.bf16.mxu0 0
        %1414 = vmatpush1.bf16.msra.mxu0 0
        %1415 = vmatprep.subr.bf16.mxu0 0
        %1416 = vmatpush1.bf16.msra.mxu0 0
        %1417 = vmatprep.subr.bf16.mxu0 0
        %1418 = vmatpush1.bf16.msra.mxu0 0
        %1419 = vmatprep.subr.bf16.mxu0 0
        %1420 = vmatpush1.bf16.msra.mxu0 0
        %1421 = vmatprep.subr.bf16.mxu0 0
        %1422 = vmatpush1.bf16.msra.mxu0 0
        %1423 = vmatprep.subr.bf16.mxu0 0
        %1424 = vmatpush1.bf16.msra.mxu0 0
        %1425 = vmatprep.subr.bf16.mxu0 0
        %1426 = vmatpush1.bf16.msra.mxu0 0
        %1427 = vmatprep.mubr.bf16.mxu0 0
        %1428 = vmatmul.mubr.bf16.gmra.mrb[0].mxu0 %v1390
        %v1429 = vpop.f32.mrb[0].mxu0
        %v1430 = vadd.f32 0.0, %v1429
        %v1431 = vpop.f32.mrb[0].mxu0
        %v1432 = vpop.f32.mrb[0].mxu0
        %v1433 = vpop.f32.mrb[0].mxu0
        %1434 = vdwg.mxu0
        %1435 = vrot.lane.b32.xlu0 %v1063, 104
        %v1436 = vpop.permute.xlu0 %1435
        %1437 = vrot.lane.b32.xlu0 %v1104, 104
        %v1438 = vpop.permute.xlu0 %1437
        %v1440 = vsel %vm1106, %v1436, 0
        %v1443 = vsel %vm1106, %v1438, 0
        %1445 = vmatprep.subr.bf16.mxu0 0
        %1446 = vmatpush1.bf16.xpose.msra.mxu0 %v1443
        %1447 = vmatprep.subr.bf16.mxu0 0
        %1448 = vmatpush1.bf16.xpose.msra.mxu0 0
        %1449 = vmatprep.subr.bf16.mxu0 0
        %1450 = vmatpush1.bf16.xpose.msra.mxu0 0
        %1451 = vmatprep.subr.bf16.mxu0 0
        %1452 = vmatpush1.bf16.xpose.msra.mxu0 0
        %1453 = vmatprep.subr.bf16.mxu0 0
        %1454 = vmatpush1.bf16.xpose.msra.mxu0 0
        %1455 = vmatprep.subr.bf16.mxu0 0
        %1456 = vmatpush1.bf16.xpose.msra.mxu0 0
        %1457 = vmatprep.subr.bf16.mxu0 0
        %1458 = vmatpush1.bf16.xpose.msra.mxu0 0
        %1459 = vmatprep.subr.bf16.mxu0 0
        %1460 = vmatpush1.bf16.xpose.msra.mxu0 0
        %1461 = vmatprep.subr.bf16.mxu0 0
        %1462 = vmatpush1.bf16.xpose.msra.mxu0 0
        %1463 = vmatprep.subr.bf16.mxu0 0
        %1464 = vmatpush1.bf16.xpose.msra.mxu0 0
        %1465 = vmatprep.subr.bf16.mxu0 0
        %1466 = vmatpush1.bf16.xpose.msra.mxu0 0
        %1467 = vmatprep.subr.bf16.mxu0 0
        %1468 = vmatpush1.bf16.xpose.msra.mxu0 0
        %1469 = vmatprep.subr.bf16.mxu0 0
        %1470 = vmatpush1.bf16.xpose.msra.mxu0 0
        %1471 = vmatprep.subr.bf16.mxu0 0
        %1472 = vmatpush1.bf16.xpose.msra.mxu0 0
        %1473 = vmatprep.subr.bf16.mxu0 0
        %1474 = vmatpush1.bf16.xpose.msra.mxu0 0
        %1475 = vmatprep.subr.bf16.mxu0 0
        %1476 = vmatpush1.bf16.xpose.msra.mxu0 0
        %1477 = vmatprep.mubr.bf16.mxu0 0
        %1478 = vmatmul.mubr.bf16.gmra.mrb[0].mxu0 %v1440
        %v1479 = vpop.f32.mrb[0].mxu0
        %v1480 = vadd.f32 0.0, %v1479
        %v1481 = vpop.f32.mrb[0].mxu0
        %v1482 = vpop.f32.mrb[0].mxu0
        %v1483 = vpop.f32.mrb[0].mxu0
        %1484 = vdwg.mxu0
        %v1485 = vsel %vm1106, %v1480, -inf
        %1486 = vmax.xlane.f32.xlu0 %v1485
        %v1487 = vpop.xlane.xlu0 %1486
        %v1488 = vsub.f32 %v1480, %v1487
        %v1489 = vmul.f32 %v1488, 1.442695
        %v1490 = vpow.pop %v1489
        %v1491 = vsel %vm1106, %v1490, 0.0
        %1492 = vadd.xlane.f32.xlu0 %v1491
        %v1493 = vpop.xlane.xlu0 %1492
        %v1494 = vrcp.pop %v1493
        %v1495 = vmul.f32 %v1490, %v1494
        %v1496 = vpack.c.bf16 %v1495, %v1495
        %1497 = vrot.lane.b32.xlu0 %v1105, 104
        %v1498 = vpop.permute.xlu0 %1497
        %v1500 = vsel %vm1106, %v1496, 0
        %v1503 = vsel %vm1168, %v1498, 0
        %1505 = vmatprep.subr.bf16.mxu0 0
        %1506 = vmatpush1.bf16.msra.mxu0 %v1503
        %1507 = vmatprep.subr.bf16.mxu0 0
        %1508 = vmatpush1.bf16.msra.mxu0 0
        %1509 = vmatprep.subr.bf16.mxu0 0
        %1510 = vmatpush1.bf16.msra.mxu0 0
        %1511 = vmatprep.subr.bf16.mxu0 0
        %1512 = vmatpush1.bf16.msra.mxu0 0
        %1513 = vmatprep.subr.bf16.mxu0 0
        %1514 = vmatpush1.bf16.msra.mxu0 0
        %1515 = vmatprep.subr.bf16.mxu0 0
        %1516 = vmatpush1.bf16.msra.mxu0 0
        %1517 = vmatprep.subr.bf16.mxu0 0
        %1518 = vmatpush1.bf16.msra.mxu0 0
        %1519 = vmatprep.subr.bf16.mxu0 0
        %1520 = vmatpush1.bf16.msra.mxu0 0
        %1521 = vmatprep.subr.bf16.mxu0 0
        %1522 = vmatpush1.bf16.msra.mxu0 0
        %1523 = vmatprep.subr.bf16.mxu0 0
        %1524 = vmatpush1.bf16.msra.mxu0 0
        %1525 = vmatprep.subr.bf16.mxu0 0
        %1526 = vmatpush1.bf16.msra.mxu0 0
        %1527 = vmatprep.subr.bf16.mxu0 0
        %1528 = vmatpush1.bf16.msra.mxu0 0
        %1529 = vmatprep.subr.bf16.mxu0 0
        %1530 = vmatpush1.bf16.msra.mxu0 0
        %1531 = vmatprep.subr.bf16.mxu0 0
        %1532 = vmatpush1.bf16.msra.mxu0 0
        %1533 = vmatprep.subr.bf16.mxu0 0
        %1534 = vmatpush1.bf16.msra.mxu0 0
        %1535 = vmatprep.subr.bf16.mxu0 0
        %1536 = vmatpush1.bf16.msra.mxu0 0
        %1537 = vmatprep.mubr.bf16.mxu0 0
        %1538 = vmatmul.mubr.bf16.gmra.mrb[0].mxu0 %v1500
        %v1539 = vpop.f32.mrb[0].mxu0
        %v1540 = vadd.f32 0.0, %v1539
        %v1541 = vpop.f32.mrb[0].mxu0
        %v1542 = vpop.f32.mrb[0].mxu0
        %v1543 = vpop.f32.mrb[0].mxu0
        %1544 = vdwg.mxu0
        %1546 = vrot.lane.b32.xlu0 %v1320, 8
        %v1547 = vpop.permute.xlu0 %1546
        %1550 = vrot.lane.b32.xlu0 %v1430, 16
        %v1551 = vpop.permute.xlu0 %1550
        %1554 = vrot.lane.b32.xlu0 %v1540, 24
        %v1555 = vpop.permute.xlu0 %1554
        %v1557 = vsel %vm1106, %v1207, %v1547
        %vm1558 = vcmask 130048
        %v1559 = vsel %vm1558, %v1557, %v1551
        %vm1560 = vcmask 195584
        %v1561 = vsel %vm1560, %v1559, %v1555
        %v1562 = vrot.slane %v1063, 4
        %v1563 = vrot.slane %v1104, 4
        %v1565 = vsel %vm1106, %v1562, 0
        %v1568 = vsel %vm1106, %v1563, 0
        %1570 = vmatprep.subr.bf16.mxu0 0
        %1571 = vmatpush1.bf16.xpose.msra.mxu0 %v1568
        %1572 = vmatprep.subr.bf16.mxu0 0
        %1573 = vmatpush1.bf16.xpose.msra.mxu0 0
        %1574 = vmatprep.subr.bf16.mxu0 0
        %1575 = vmatpush1.bf16.xpose.msra.mxu0 0
        %1576 = vmatprep.subr.bf16.mxu0 0
        %1577 = vmatpush1.bf16.xpose.msra.mxu0 0
        %1578 = vmatprep.subr.bf16.mxu0 0
        %1579 = vmatpush1.bf16.xpose.msra.mxu0 0
        %1580 = vmatprep.subr.bf16.mxu0 0
        %1581 = vmatpush1.bf16.xpose.msra.mxu0 0
        %1582 = vmatprep.subr.bf16.mxu0 0
        %1583 = vmatpush1.bf16.xpose.msra.mxu0 0
        %1584 = vmatprep.subr.bf16.mxu0 0
        %1585 = vmatpush1.bf16.xpose.msra.mxu0 0
        %1586 = vmatprep.subr.bf16.mxu0 0
        %1587 = vmatpush1.bf16.xpose.msra.mxu0 0
        %1588 = vmatprep.subr.bf16.mxu0 0
        %1589 = vmatpush1.bf16.xpose.msra.mxu0 0
        %1590 = vmatprep.subr.bf16.mxu0 0
        %1591 = vmatpush1.bf16.xpose.msra.mxu0 0
        %1592 = vmatprep.subr.bf16.mxu0 0
        %1593 = vmatpush1.bf16.xpose.msra.mxu0 0
        %1594 = vmatprep.subr.bf16.mxu0 0
        %1595 = vmatpush1.bf16.xpose.msra.mxu0 0
        %1596 = vmatprep.subr.bf16.mxu0 0
        %1597 = vmatpush1.bf16.xpose.msra.mxu0 0
        %1598 = vmatprep.subr.bf16.mxu0 0
        %1599 = vmatpush1.bf16.xpose.msra.mxu0 0
        %1600 = vmatprep.subr.bf16.mxu0 0
        %1601 = vmatpush1.bf16.xpose.msra.mxu0 0
        %1602 = vmatprep.mubr.bf16.mxu0 0
        %1603 = vmatmul.mubr.bf16.gmra.mrb[0].mxu0 %v1565
        %v1604 = vpop.f32.mrb[0].mxu0
        %v1605 = vadd.f32 0.0, %v1604
        %v1606 = vpop.f32.mrb[0].mxu0
        %v1607 = vpop.f32.mrb[0].mxu0
        %v1608 = vpop.f32.mrb[0].mxu0
        %1609 = vdwg.mxu0
        %v1610 = vsel %vm1106, %v1605, -inf
        %1611 = vmax.xlane.f32.xlu0 %v1610
        %v1612 = vpop.xlane.xlu0 %1611
        %v1613 = vsub.f32 %v1605, %v1612
        %v1614 = vmul.f32 %v1613, 1.442695
        %v1615 = vpow.pop %v1614
        %v1616 = vsel %vm1106, %v1615, 0.0
        %1617 = vadd.xlane.f32.xlu0 %v1616
        %v1618 = vpop.xlane.xlu0 %1617
        %v1619 = vrcp.pop %v1618
        %v1620 = vmul.f32 %v1615, %v1619
        %v1621 = vpack.c.bf16 %v1620, %v1620
        %v1622 = vrot.slane %v1105, 4
        %v1624 = vsel %vm1106, %v1621, 0
        %v1627 = vsel %vm1168, %v1622, 0
        %1629 = vmatprep.subr.bf16.mxu0 0
        %1630 = vmatpush1.bf16.msra.mxu0 %v1627
        %1631 = vmatprep.subr.bf16.mxu0 0
        %1632 = vmatpush1.bf16.msra.mxu0 0
        %1633 = vmatprep.subr.bf16.mxu0 0
        %1634 = vmatpush1.bf16.msra.mxu0 0
        %1635 = vmatprep.subr.bf16.mxu0 0
        %1636 = vmatpush1.bf16.msra.mxu0 0
        %1637 = vmatprep.subr.bf16.mxu0 0
        %1638 = vmatpush1.bf16.msra.mxu0 0
        %1639 = vmatprep.subr.bf16.mxu0 0
        %1640 = vmatpush1.bf16.msra.mxu0 0
        %1641 = vmatprep.subr.bf16.mxu0 0
        %1642 = vmatpush1.bf16.msra.mxu0 0
        %1643 = vmatprep.subr.bf16.mxu0 0
        %1644 = vmatpush1.bf16.msra.mxu0 0
        %1645 = vmatprep.subr.bf16.mxu0 0
        %1646 = vmatpush1.bf16.msra.mxu0 0
        %1647 = vmatprep.subr.bf16.mxu0 0
        %1648 = vmatpush1.bf16.msra.mxu0 0
        %1649 = vmatprep.subr.bf16.mxu0 0
        %1650 = vmatpush1.bf16.msra.mxu0 0
        %1651 = vmatprep.subr.bf16.mxu0 0
        %1652 = vmatpush1.bf16.msra.mxu0 0
        %1653 = vmatprep.subr.bf16.mxu0 0
        %1654 = vmatpush1.bf16.msra.mxu0 0
        %1655 = vmatprep.subr.bf16.mxu0 0
        %1656 = vmatpush1.bf16.msra.mxu0 0
        %1657 = vmatprep.subr.bf16.mxu0 0
        %1658 = vmatpush1.bf16.msra.mxu0 0
        %1659 = vmatprep.subr.bf16.mxu0 0
        %1660 = vmatpush1.bf16.msra.mxu0 0
        %1661 = vmatprep.mubr.bf16.mxu0 0
        %1662 = vmatmul.mubr.bf16.gmra.mrb[0].mxu0 %v1624
        %v1663 = vpop.f32.mrb[0].mxu0
        %v1664 = vadd.f32 0.0, %v1663
        %v1665 = vpop.f32.mrb[0].mxu0
        %v1666 = vpop.f32.mrb[0].mxu0
        %v1667 = vpop.f32.mrb[0].mxu0
        %1668 = vdwg.mxu0
        %1669 = vrot.lane.b32.xlu0 %v1562, 120
        %v1670 = vpop.permute.xlu0 %1669
        %1671 = vrot.lane.b32.xlu0 %v1563, 120
        %v1672 = vpop.permute.xlu0 %1671
        %v1674 = vsel %vm1106, %v1670, 0
        %v1677 = vsel %vm1106, %v1672, 0
        %1679 = vmatprep.subr.bf16.mxu0 0
        %1680 = vmatpush1.bf16.xpose.msra.mxu0 %v1677
        %1681 = vmatprep.subr.bf16.mxu0 0
        %1682 = vmatpush1.bf16.xpose.msra.mxu0 0
        %1683 = vmatprep.subr.bf16.mxu0 0
        %1684 = vmatpush1.bf16.xpose.msra.mxu0 0
        %1685 = vmatprep.subr.bf16.mxu0 0
        %1686 = vmatpush1.bf16.xpose.msra.mxu0 0
        %1687 = vmatprep.subr.bf16.mxu0 0
        %1688 = vmatpush1.bf16.xpose.msra.mxu0 0
        %1689 = vmatprep.subr.bf16.mxu0 0
        %1690 = vmatpush1.bf16.xpose.msra.mxu0 0
        %1691 = vmatprep.subr.bf16.mxu0 0
        %1692 = vmatpush1.bf16.xpose.msra.mxu0 0
        %1693 = vmatprep.subr.bf16.mxu0 0
        %1694 = vmatpush1.bf16.xpose.msra.mxu0 0
        %1695 = vmatprep.subr.bf16.mxu0 0
        %1696 = vmatpush1.bf16.xpose.msra.mxu0 0
        %1697 = vmatprep.subr.bf16.mxu0 0
        %1698 = vmatpush1.bf16.xpose.msra.mxu0 0
        %1699 = vmatprep.subr.bf16.mxu0 0
        %1700 = vmatpush1.bf16.xpose.msra.mxu0 0
        %1701 = vmatprep.subr.bf16.mxu0 0
        %1702 = vmatpush1.bf16.xpose.msra.mxu0 0
        %1703 = vmatprep.subr.bf16.mxu0 0
        %1704 = vmatpush1.bf16.xpose.msra.mxu0 0
        %1705 = vmatprep.subr.bf16.mxu0 0
        %1706 = vmatpush1.bf16.xpose.msra.mxu0 0
        %1707 = vmatprep.subr.bf16.mxu0 0
        %1708 = vmatpush1.bf16.xpose.msra.mxu0 0
        %1709 = vmatprep.subr.bf16.mxu0 0
        %1710 = vmatpush1.bf16.xpose.msra.mxu0 0
        %1711 = vmatprep.mubr.bf16.mxu0 0
        %1712 = vmatmul.mubr.bf16.gmra.mrb[0].mxu0 %v1674
        %v1713 = vpop.f32.mrb[0].mxu0
        %v1714 = vadd.f32 0.0, %v1713
        %v1715 = vpop.f32.mrb[0].mxu0
        %v1716 = vpop.f32.mrb[0].mxu0
        %v1717 = vpop.f32.mrb[0].mxu0
        %1718 = vdwg.mxu0
        %v1719 = vsel %vm1106, %v1714, -inf
        %1720 = vmax.xlane.f32.xlu0 %v1719
        %v1721 = vpop.xlane.xlu0 %1720
        %v1722 = vsub.f32 %v1714, %v1721
        %v1723 = vmul.f32 %v1722, 1.442695
        %v1724 = vpow.pop %v1723
        %v1725 = vsel %vm1106, %v1724, 0.0
        %1726 = vadd.xlane.f32.xlu0 %v1725
        %v1727 = vpop.xlane.xlu0 %1726
        %v1728 = vrcp.pop %v1727
        %v1729 = vmul.f32 %v1724, %v1728
        %v1730 = vpack.c.bf16 %v1729, %v1729
        %1731 = vrot.lane.b32.xlu0 %v1622, 120
        %v1732 = vpop.permute.xlu0 %1731
        %v1734 = vsel %vm1106, %v1730, 0
        %v1737 = vsel %vm1168, %v1732, 0
        %1739 = vmatprep.subr.bf16.mxu0 0
        %1740 = vmatpush1.bf16.msra.mxu0 %v1737
        %1741 = vmatprep.subr.bf16.mxu0 0
        %1742 = vmatpush1.bf16.msra.mxu0 0
        %1743 = vmatprep.subr.bf16.mxu0 0
        %1744 = vmatpush1.bf16.msra.mxu0 0
        %1745 = vmatprep.subr.bf16.mxu0 0
        %1746 = vmatpush1.bf16.msra.mxu0 0
        %1747 = vmatprep.subr.bf16.mxu0 0
        %1748 = vmatpush1.bf16.msra.mxu0 0
        %1749 = vmatprep.subr.bf16.mxu0 0
        %1750 = vmatpush1.bf16.msra.mxu0 0
        %1751 = vmatprep.subr.bf16.mxu0 0
        %1752 = vmatpush1.bf16.msra.mxu0 0
        %1753 = vmatprep.subr.bf16.mxu0 0
        %1754 = vmatpush1.bf16.msra.mxu0 0
        %1755 = vmatprep.subr.bf16.mxu0 0
        %1756 = vmatpush1.bf16.msra.mxu0 0
        %1757 = vmatprep.subr.bf16.mxu0 0
        %1758 = vmatpush1.bf16.msra.mxu0 0
        %1759 = vmatprep.subr.bf16.mxu0 0
        %1760 = vmatpush1.bf16.msra.mxu0 0
        %1761 = vmatprep.subr.bf16.mxu0 0
        %1762 = vmatpush1.bf16.msra.mxu0 0
        %1763 = vmatprep.subr.bf16.mxu0 0
        %1764 = vmatpush1.bf16.msra.mxu0 0
        %1765 = vmatprep.subr.bf16.mxu0 0
        %1766 = vmatpush1.bf16.msra.mxu0 0
        %1767 = vmatprep.subr.bf16.mxu0 0
        %1768 = vmatpush1.bf16.msra.mxu0 0
        %1769 = vmatprep.subr.bf16.mxu0 0
        %1770 = vmatpush1.bf16.msra.mxu0 0
        %1771 = vmatprep.mubr.bf16.mxu0 0
        %1772 = vmatmul.mubr.bf16.gmra.mrb[0].mxu0 %v1734
        %v1773 = vpop.f32.mrb[0].mxu0
        %v1774 = vadd.f32 0.0, %v1773
        %v1775 = vpop.f32.mrb[0].mxu0
        %v1776 = vpop.f32.mrb[0].mxu0
        %v1777 = vpop.f32.mrb[0].mxu0
        %1778 = vdwg.mxu0
        %1779 = vrot.lane.b32.xlu0 %v1562, 112
        %v1780 = vpop.permute.xlu0 %1779
        %1781 = vrot.lane.b32.xlu0 %v1563, 112
        %v1782 = vpop.permute.xlu0 %1781
        %v1784 = vsel %vm1106, %v1780, 0
        %v1787 = vsel %vm1106, %v1782, 0
        %1789 = vmatprep.subr.bf16.mxu0 0
        %1790 = vmatpush1.bf16.xpose.msra.mxu0 %v1787
        %1791 = vmatprep.subr.bf16.mxu0 0
        %1792 = vmatpush1.bf16.xpose.msra.mxu0 0
        %1793 = vmatprep.subr.bf16.mxu0 0
        %1794 = vmatpush1.bf16.xpose.msra.mxu0 0
        %1795 = vmatprep.subr.bf16.mxu0 0
        %1796 = vmatpush1.bf16.xpose.msra.mxu0 0
        %1797 = vmatprep.subr.bf16.mxu0 0
        %1798 = vmatpush1.bf16.xpose.msra.mxu0 0
        %1799 = vmatprep.subr.bf16.mxu0 0
        %1800 = vmatpush1.bf16.xpose.msra.mxu0 0
        %1801 = vmatprep.subr.bf16.mxu0 0
        %1802 = vmatpush1.bf16.xpose.msra.mxu0 0
        %1803 = vmatprep.subr.bf16.mxu0 0
        %1804 = vmatpush1.bf16.xpose.msra.mxu0 0
        %1805 = vmatprep.subr.bf16.mxu0 0
        %1806 = vmatpush1.bf16.xpose.msra.mxu0 0
        %1807 = vmatprep.subr.bf16.mxu0 0
        %1808 = vmatpush1.bf16.xpose.msra.mxu0 0
        %1809 = vmatprep.subr.bf16.mxu0 0
        %1810 = vmatpush1.bf16.xpose.msra.mxu0 0
        %1811 = vmatprep.subr.bf16.mxu0 0
        %1812 = vmatpush1.bf16.xpose.msra.mxu0 0
        %1813 = vmatprep.subr.bf16.mxu0 0
        %1814 = vmatpush1.bf16.xpose.msra.mxu0 0
        %1815 = vmatprep.subr.bf16.mxu0 0
        %1816 = vmatpush1.bf16.xpose.msra.mxu0 0
        %1817 = vmatprep.subr.bf16.mxu0 0
        %1818 = vmatpush1.bf16.xpose.msra.mxu0 0
        %1819 = vmatprep.subr.bf16.mxu0 0
        %1820 = vmatpush1.bf16.xpose.msra.mxu0 0
        %1821 = vmatprep.mubr.bf16.mxu0 0
        %1822 = vmatmul.mubr.bf16.gmra.mrb[0].mxu0 %v1784
        %v1823 = vpop.f32.mrb[0].mxu0
        %v1824 = vadd.f32 0.0, %v1823
        %v1825 = vpop.f32.mrb[0].mxu0
        %v1826 = vpop.f32.mrb[0].mxu0
        %v1827 = vpop.f32.mrb[0].mxu0
        %1828 = vdwg.mxu0
        %v1829 = vsel %vm1106, %v1824, -inf
        %1830 = vmax.xlane.f32.xlu0 %v1829
        %v1831 = vpop.xlane.xlu0 %1830
        %v1832 = vsub.f32 %v1824, %v1831
        %v1833 = vmul.f32 %v1832, 1.442695
        %v1834 = vpow.pop %v1833
        %v1835 = vsel %vm1106, %v1834, 0.0
        %1836 = vadd.xlane.f32.xlu0 %v1835
        %v1837 = vpop.xlane.xlu0 %1836
        %v1838 = vrcp.pop %v1837
        %v1839 = vmul.f32 %v1834, %v1838
        %v1840 = vpack.c.bf16 %v1839, %v1839
        %1841 = vrot.lane.b32.xlu0 %v1622, 112
        %v1842 = vpop.permute.xlu0 %1841
        %v1844 = vsel %vm1106, %v1840, 0
        %v1847 = vsel %vm1168, %v1842, 0
        %1849 = vmatprep.subr.bf16.mxu0 0
        %1850 = vmatpush1.bf16.msra.mxu0 %v1847
        %1851 = vmatprep.subr.bf16.mxu0 0
        %1852 = vmatpush1.bf16.msra.mxu0 0
        %1853 = vmatprep.subr.bf16.mxu0 0
        %1854 = vmatpush1.bf16.msra.mxu0 0
        %1855 = vmatprep.subr.bf16.mxu0 0
        %1856 = vmatpush1.bf16.msra.mxu0 0
        %1857 = vmatprep.subr.bf16.mxu0 0
        %1858 = vmatpush1.bf16.msra.mxu0 0
        %1859 = vmatprep.subr.bf16.mxu0 0
        %1860 = vmatpush1.bf16.msra.mxu0 0
        %1861 = vmatprep.subr.bf16.mxu0 0
        %1862 = vmatpush1.bf16.msra.mxu0 0
        %1863 = vmatprep.subr.bf16.mxu0 0
        %1864 = vmatpush1.bf16.msra.mxu0 0
        %1865 = vmatprep.subr.bf16.mxu0 0
        %1866 = vmatpush1.bf16.msra.mxu0 0
        %1867 = vmatprep.subr.bf16.mxu0 0
        %1868 = vmatpush1.bf16.msra.mxu0 0
        %1869 = vmatprep.subr.bf16.mxu0 0
        %1870 = vmatpush1.bf16.msra.mxu0 0
        %1871 = vmatprep.subr.bf16.mxu0 0
        %1872 = vmatpush1.bf16.msra.mxu0 0
        %1873 = vmatprep.subr.bf16.mxu0 0
        %1874 = vmatpush1.bf16.msra.mxu0 0
        %1875 = vmatprep.subr.bf16.mxu0 0
        %1876 = vmatpush1.bf16.msra.mxu0 0
        %1877 = vmatprep.subr.bf16.mxu0 0
        %1878 = vmatpush1.bf16.msra.mxu0 0
        %1879 = vmatprep.subr.bf16.mxu0 0
        %1880 = vmatpush1.bf16.msra.mxu0 0
        %1881 = vmatprep.mubr.bf16.mxu0 0
        %1882 = vmatmul.mubr.bf16.gmra.mrb[0].mxu0 %v1844
        %v1883 = vpop.f32.mrb[0].mxu0
        %v1884 = vadd.f32 0.0, %v1883
        %v1885 = vpop.f32.mrb[0].mxu0
        %v1886 = vpop.f32.mrb[0].mxu0
        %v1887 = vpop.f32.mrb[0].mxu0
        %1888 = vdwg.mxu0
        %1889 = vrot.lane.b32.xlu0 %v1562, 104
        %v1890 = vpop.permute.xlu0 %1889
        %1891 = vrot.lane.b32.xlu0 %v1563, 104
        %v1892 = vpop.permute.xlu0 %1891
        %v1894 = vsel %vm1106, %v1890, 0
        %v1897 = vsel %vm1106, %v1892, 0
        %1899 = vmatprep.subr.bf16.mxu0 0
        %1900 = vmatpush1.bf16.xpose.msra.mxu0 %v1897
        %1901 = vmatprep.subr.bf16.mxu0 0
        %1902 = vmatpush1.bf16.xpose.msra.mxu0 0
        %1903 = vmatprep.subr.bf16.mxu0 0
        %1904 = vmatpush1.bf16.xpose.msra.mxu0 0
        %1905 = vmatprep.subr.bf16.mxu0 0
        %1906 = vmatpush1.bf16.xpose.msra.mxu0 0
        %1907 = vmatprep.subr.bf16.mxu0 0
        %1908 = vmatpush1.bf16.xpose.msra.mxu0 0
        %1909 = vmatprep.subr.bf16.mxu0 0
        %1910 = vmatpush1.bf16.xpose.msra.mxu0 0
        %1911 = vmatprep.subr.bf16.mxu0 0
        %1912 = vmatpush1.bf16.xpose.msra.mxu0 0
        %1913 = vmatprep.subr.bf16.mxu0 0
        %1914 = vmatpush1.bf16.xpose.msra.mxu0 0
        %1915 = vmatprep.subr.bf16.mxu0 0
        %1916 = vmatpush1.bf16.xpose.msra.mxu0 0
        %1917 = vmatprep.subr.bf16.mxu0 0
        %1918 = vmatpush1.bf16.xpose.msra.mxu0 0
        %1919 = vmatprep.subr.bf16.mxu0 0
        %1920 = vmatpush1.bf16.xpose.msra.mxu0 0
        %1921 = vmatprep.subr.bf16.mxu0 0
        %1922 = vmatpush1.bf16.xpose.msra.mxu0 0
        %1923 = vmatprep.subr.bf16.mxu0 0
        %1924 = vmatpush1.bf16.xpose.msra.mxu0 0
        %1925 = vmatprep.subr.bf16.mxu0 0
        %1926 = vmatpush1.bf16.xpose.msra.mxu0 0
        %1927 = vmatprep.subr.bf16.mxu0 0
        %1928 = vmatpush1.bf16.xpose.msra.mxu0 0
        %1929 = vmatprep.subr.bf16.mxu0 0
        %1930 = vmatpush1.bf16.xpose.msra.mxu0 0
        %1931 = vmatprep.mubr.bf16.mxu0 0
        %1932 = vmatmul.mubr.bf16.gmra.mrb[0].mxu0 %v1894
        %v1933 = vpop.f32.mrb[0].mxu0
        %v1934 = vadd.f32 0.0, %v1933
        %v1935 = vpop.f32.mrb[0].mxu0
        %v1936 = vpop.f32.mrb[0].mxu0
        %v1937 = vpop.f32.mrb[0].mxu0
        %1938 = vdwg.mxu0
        %v1939 = vsel %vm1106, %v1934, -inf
        %1940 = vmax.xlane.f32.xlu0 %v1939
        %v1941 = vpop.xlane.xlu0 %1940
        %v1942 = vsub.f32 %v1934, %v1941
        %v1943 = vmul.f32 %v1942, 1.442695
        %v1944 = vpow.pop %v1943
        %v1945 = vsel %vm1106, %v1944, 0.0
        %1946 = vadd.xlane.f32.xlu0 %v1945
        %v1947 = vpop.xlane.xlu0 %1946
        %v1948 = vrcp.pop %v1947
        %v1949 = vmul.f32 %v1944, %v1948
        %v1950 = vpack.c.bf16 %v1949, %v1949
        %1951 = vrot.lane.b32.xlu0 %v1622, 104
        %v1952 = vpop.permute.xlu0 %1951
        %v1954 = vsel %vm1106, %v1950, 0
        %v1957 = vsel %vm1168, %v1952, 0
        %1959 = vmatprep.subr.bf16.mxu0 0
        %1960 = vmatpush1.bf16.msra.mxu0 %v1957
        %1961 = vmatprep.subr.bf16.mxu0 0
        %1962 = vmatpush1.bf16.msra.mxu0 0
        %1963 = vmatprep.subr.bf16.mxu0 0
        %1964 = vmatpush1.bf16.msra.mxu0 0
        %1965 = vmatprep.subr.bf16.mxu0 0
        %1966 = vmatpush1.bf16.msra.mxu0 0
        %1967 = vmatprep.subr.bf16.mxu0 0
        %1968 = vmatpush1.bf16.msra.mxu0 0
        %1969 = vmatprep.subr.bf16.mxu0 0
        %1970 = vmatpush1.bf16.msra.mxu0 0
        %1971 = vmatprep.subr.bf16.mxu0 0
        %1972 = vmatpush1.bf16.msra.mxu0 0
        %1973 = vmatprep.subr.bf16.mxu0 0
        %1974 = vmatpush1.bf16.msra.mxu0 0
        %1975 = vmatprep.subr.bf16.mxu0 0
        %1976 = vmatpush1.bf16.msra.mxu0 0
        %1977 = vmatprep.subr.bf16.mxu0 0
        %1978 = vmatpush1.bf16.msra.mxu0 0
        %1979 = vmatprep.subr.bf16.mxu0 0
        %1980 = vmatpush1.bf16.msra.mxu0 0
        %1981 = vmatprep.subr.bf16.mxu0 0
        %1982 = vmatpush1.bf16.msra.mxu0 0
        %1983 = vmatprep.subr.bf16.mxu0 0
        %1984 = vmatpush1.bf16.msra.mxu0 0
        %1985 = vmatprep.subr.bf16.mxu0 0
        %1986 = vmatpush1.bf16.msra.mxu0 0
        %1987 = vmatprep.subr.bf16.mxu0 0
        %1988 = vmatpush1.bf16.msra.mxu0 0
        %1989 = vmatprep.subr.bf16.mxu0 0
        %1990 = vmatpush1.bf16.msra.mxu0 0
        %1991 = vmatprep.mubr.bf16.mxu0 0
        %1992 = vmatmul.mubr.bf16.gmra.mrb[0].mxu0 %v1954
        %v1993 = vpop.f32.mrb[0].mxu0
        %v1994 = vadd.f32 0.0, %v1993
        %v1995 = vpop.f32.mrb[0].mxu0
        %v1996 = vpop.f32.mrb[0].mxu0
        %v1997 = vpop.f32.mrb[0].mxu0
        %1998 = vdwg.mxu0
        %2000 = vrot.lane.b32.xlu0 %v1774, 8
        %v2001 = vpop.permute.xlu0 %2000
        %2004 = vrot.lane.b32.xlu0 %v1884, 16
        %v2005 = vpop.permute.xlu0 %2004
        %2008 = vrot.lane.b32.xlu0 %v1994, 24
        %v2009 = vpop.permute.xlu0 %2008
        %v2011 = vsel %vm1106, %v1664, %v2001
        %v2012 = vsel %vm1558, %v2011, %v2005
        %v2013 = vsel %vm1560, %v2012, %v2009
        %v2014 = vpack.c.bf16 %v2013, %v1561
        %v2015 = vld [vmem:[#allocation11] sm:$0xf]
        %v2016 = vld [vmem:[#allocation11 + $0x4] sm:$0xf]
        %v2017 = vld [vmem:[#allocation11 + $0x8] sm:$0xf]
        %v2018 = vld [vmem:[#allocation11 + $0xc] sm:$0xf]
        %v2019 = vld [vmem:[#allocation13] sm:$0x1]
        %v2021 = vlaneseq
        %v2022 = vshrl.u32 %v2021, 7
        %v2023 = vsub.s32 0, %v2022
        %v2024 = vrot.slane %v2019, %v2023
        %v2030 = vunpack.c.l.b16 %v2015
        %v2031 = vunpack.c.l.b16 %v2016
        %v2032 = vunpack.c.l.b16 %v2017
        %v2033 = vunpack.c.l.b16 %v2018
        %v2034 = vpack.c.b16 %v2031, %v2030
        %v2035 = vpack.c.b16 %v2033, %v2032
        %v2039 = vsel %vm842, %v2014, 0
        %2041 = vmatprep.subr.bf16.mxu0 0
        %2042 = vmatpush1.bf16.msra.mxu0 %v2034
        %2043 = vmatprep.subr.bf16.mxu0 0
        %2044 = vmatpush1.bf16.msra.mxu0 %v2035
        %2045 = vmatprep.subr.bf16.mxu0 0
        %2046 = vmatpush1.bf16.msra.mxu0 0
        %2047 = vmatprep.subr.bf16.mxu0 0
        %2048 = vmatpush1.bf16.msra.mxu0 0
        %2049 = vmatprep.subr.bf16.mxu0 0
        %2050 = vmatpush1.bf16.msra.mxu0 0
        %2051 = vmatprep.subr.bf16.mxu0 0
        %2052 = vmatpush1.bf16.msra.mxu0 0
        %2053 = vmatprep.subr.bf16.mxu0 0
        %2054 = vmatpush1.bf16.msra.mxu0 0
        %2055 = vmatprep.subr.bf16.mxu0 0
        %2056 = vmatpush1.bf16.msra.mxu0 0
        %2057 = vmatprep.subr.bf16.mxu0 0
        %2058 = vmatpush1.bf16.msra.mxu0 0
        %2059 = vmatprep.subr.bf16.mxu0 0
        %2060 = vmatpush1.bf16.msra.mxu0 0
        %2061 = vmatprep.subr.bf16.mxu0 0
        %2062 = vmatpush1.bf16.msra.mxu0 0
        %2063 = vmatprep.subr.bf16.mxu0 0
        %2064 = vmatpush1.bf16.msra.mxu0 0
        %2065 = vmatprep.subr.bf16.mxu0 0
        %2066 = vmatpush1.bf16.msra.mxu0 0
        %2067 = vmatprep.subr.bf16.mxu0 0
        %2068 = vmatpush1.bf16.msra.mxu0 0
        %2069 = vmatprep.subr.bf16.mxu0 0
        %2070 = vmatpush1.bf16.msra.mxu0 0
        %2071 = vmatprep.subr.bf16.mxu0 0
        %2072 = vmatpush1.bf16.msra.mxu0 0
        %2073 = vmatprep.mubr.bf16.mxu0 0
        %2074 = vmatmul.mubr.bf16.gmra.mrb[0].mxu0 %v2039
        %v2075 = vpop.f32.mrb[0].mxu0
        %v2076 = vadd.f32 %v2024, %v2075
        %v2077 = vpop.f32.mrb[0].mxu0
        %v2078 = vpop.f32.mrb[0].mxu0
        %v2079 = vadd.f32 %v2024, %v2078
        %v2080 = vpop.f32.mrb[0].mxu0
        %2081 = vdwg.mxu0
        %v2082 = vadd.f32 %v816, %v2076
        %v2083 = vadd.f32 %v817, %v2079
        %v2084 = vsel %vm842, %v2082, 0.0
        %2085 = vadd.xlane.f32.xlu0 %v2084
        %v2086 = vpop.xlane.xlu0 %2085
        %v2087 = vsel %vm842, %v2083, 0.0
        %2088 = vadd.xlane.f32.xlu0 %v2087
        %v2089 = vpop.xlane.xlu0 %2088
        %v2090 = vrcp.pop 32.0
        %v2091 = vmul.f32 %v2086, %v2090
        %v2092 = vmul.f32 %v2089, %v2090
        %v2093 = vsub.f32 %v2082, %v2091
        %v2094 = vsub.f32 %v2083, %v2092
        %v2095 = vmul.f32 %v2093, %v2093
        %v2096 = vmul.f32 %v2094, %v2094
        %v2097 = vsel %vm842, %v2095, 0.0
        %2098 = vadd.xlane.f32.xlu0 %v2097
        %v2099 = vpop.xlane.xlu0 %2098
        %v2100 = vsel %vm842, %v2096, 0.0
        %2101 = vadd.xlane.f32.xlu0 %v2100
        %v2102 = vpop.xlane.xlu0 %2101
        %v2103 = vmul.f32 %v2099, %v2090
        %v2104 = vmul.f32 %v2102, %v2090
        %v2105 = vadd.f32 %v2103, 1e-05
        %v2106 = vadd.f32 %v2104, 1e-05
        %v2107 = vrsqrt.pop %v2105
        %v2108 = vrsqrt.pop %v2106
        %v2109 = vmul.f32 %v2093, %v2107
        %v2110 = vmul.f32 %v2094, %v2108
        %v2111 = vld [vmem:[#allocation17] sm:$0x1]
        %v2113 = vlaneseq
        %v2114 = vshrl.u32 %v2113, 7
        %v2115 = vsub.s32 0, %v2114
        %v2116 = vrot.slane %v2111, %v2115
        %v2118 = vmul.f32 %v2109, %v2116
        %v2119 = vmul.f32 %v2110, %v2116
        %v2120 = vld [vmem:[#allocation19] sm:$0x1]
        %v2122 = vlaneseq
        %v2123 = vshrl.u32 %v2122, 7
        %v2124 = vsub.s32 0, %v2123
        %v2125 = vrot.slane %v2120, %v2124
        %v2127 = vadd.f32 %v2118, %v2125
        %v2128 = vadd.f32 %v2119, %v2125
        %v2129 = vpack.c.bf16 %v2128, %v2127
        %v2130 = vld [vmem:[%s9] sm:$0xf]
        %v2131 = vld [vmem:[%s9 + $0x4] sm:$0xf]
        %v2132 = vld [vmem:[%s9 + $0x8] sm:$0xf]
        %v2133 = vld [vmem:[%s9 + $0xc] sm:$0xf]
        %v2134 = vld [vmem:[#allocation14] sm:$0x1]
        %v2136 = vlaneseq
        %v2137 = vshrl.u32 %v2136, 7
        %v2138 = vsub.s32 0, %v2137
        %v2139 = vrot.slane %v2134, %v2138
        %v2145 = vunpack.c.l.b16 %v2130
        %v2146 = vunpack.c.l.b16 %v2131
        %v2147 = vunpack.c.l.b16 %v2132
        %v2148 = vunpack.c.l.b16 %v2133
        %v2149 = vpack.c.b16 %v2146, %v2145
        %v2150 = vpack.c.b16 %v2148, %v2147
        %v2154 = vsel %vm842, %v2129, 0
        %2156 = vmatprep.subr.bf16.mxu0 0
        %2157 = vmatpush1.bf16.msra.mxu0 %v2149
        %2158 = vmatprep.subr.bf16.mxu0 0
        %2159 = vmatpush1.bf16.msra.mxu0 %v2150
        %2160 = vmatprep.subr.bf16.mxu0 0
        %2161 = vmatpush1.bf16.msra.mxu0 0
        %2162 = vmatprep.subr.bf16.mxu0 0
        %2163 = vmatpush1.bf16.msra.mxu0 0
        %2164 = vmatprep.subr.bf16.mxu0 0
        %2165 = vmatpush1.bf16.msra.mxu0 0
        %2166 = vmatprep.subr.bf16.mxu0 0
        %2167 = vmatpush1.bf16.msra.mxu0 0
        %2168 = vmatprep.subr.bf16.mxu0 0
        %2169 = vmatpush1.bf16.msra.mxu0 0
        %2170 = vmatprep.subr.bf16.mxu0 0
        %2171 = vmatpush1.bf16.msra.mxu0 0
        %2172 = vmatprep.subr.bf16.mxu0 0
        %2173 = vmatpush1.bf16.msra.mxu0 0
        %2174 = vmatprep.subr.bf16.mxu0 0
        %2175 = vmatpush1.bf16.msra.mxu0 0
        %2176 = vmatprep.subr.bf16.mxu0 0
        %2177 = vmatpush1.bf16.msra.mxu0 0
        %2178 = vmatprep.subr.bf16.mxu0 0
        %2179 = vmatpush1.bf16.msra.mxu0 0
        %2180 = vmatprep.subr.bf16.mxu0 0
        %2181 = vmatpush1.bf16.msra.mxu0 0
        %2182 = vmatprep.subr.bf16.mxu0 0
        %2183 = vmatpush1.bf16.msra.mxu0 0
        %2184 = vmatprep.subr.bf16.mxu0 0
        %2185 = vmatpush1.bf16.msra.mxu0 0
        %2186 = vmatprep.subr.bf16.mxu0 0
        %2187 = vmatpush1.bf16.msra.mxu0 0
        %2188 = vmatprep.mubr.bf16.mxu0 0
        %2189 = vmatmul.mubr.bf16.gmra.mrb[0].mxu0 %v2154
        %v2190 = vpop.f32.mrb[0].mxu0
        %v2191 = vadd.f32 %v2139, %v2190
        %v2192 = vpop.f32.mrb[0].mxu0
        %v2193 = vpop.f32.mrb[0].mxu0
        %v2194 = vadd.f32 %v2139, %v2193
        %v2195 = vpop.f32.mrb[0].mxu0
        %2196 = vdwg.mxu0
        %v2197 = vmax.f32 %v2191, 0.0
        %v2198 = vmax.f32 %v2194, 0.0
        %v2199 = vpack.c.bf16 %v2198, %v2197
        %v2200 = vld [vmem:[%s11] sm:$0xf]
        %v2201 = vld [vmem:[%s11 + $0x4] sm:$0xf]
        %v2202 = vld [vmem:[%s11 + $0x8] sm:$0xf]
        %v2203 = vld [vmem:[%s11 + $0xc] sm:$0xf]
        %v2204 = vld [vmem:[%s11 + $0x10] sm:$0xf]
        %v2205 = vld [vmem:[%s11 + $0x14] sm:$0xf]
        %v2206 = vld [vmem:[%s11 + $0x18] sm:$0xf]
        %v2207 = vld [vmem:[%s11 + $0x1c] sm:$0xf]
        %v2208 = vld [vmem:[#allocation16] sm:$0x1]
        %v2210 = vlaneseq
        %v2211 = vshrl.u32 %v2210, 7
        %v2212 = vsub.s32 0, %v2211
        %v2213 = vrot.slane %v2208, %v2212
        %v2223 = vunpack.c.l.b16 %v2200
        %v2224 = vunpack.c.l.b16 %v2201
        %v2225 = vunpack.c.l.b16 %v2202
        %v2226 = vunpack.c.l.b16 %v2203
        %v2227 = vunpack.c.l.b16 %v2204
        %v2228 = vunpack.c.l.b16 %v2205
        %v2229 = vunpack.c.l.b16 %v2206
        %v2230 = vunpack.c.l.b16 %v2207
        %v2231 = vpack.c.b16 %v2224, %v2223
        %v2232 = vpack.c.b16 %v2226, %v2225
        %v2233 = vpack.c.b16 %v2228, %v2227
        %v2234 = vpack.c.b16 %v2230, %v2229
        %vm2239 = vcmask 523264
        %v2241 = vsel %vm2239, %v2199, 0
        %2243 = vmatprep.subr.bf16.mxu0 0
        %2244 = vmatpush1.bf16.msra.mxu0 %v2231
        %2245 = vmatprep.subr.bf16.mxu0 0
        %2246 = vmatpush1.bf16.msra.mxu0 %v2232
        %2247 = vmatprep.subr.bf16.mxu0 0
        %2248 = vmatpush1.bf16.msra.mxu0 %v2233
        %2249 = vmatprep.subr.bf16.mxu0 0
        %2250 = vmatpush1.bf16.msra.mxu0 %v2234
        %2251 = vmatprep.subr.bf16.mxu0 0
        %2252 = vmatpush1.bf16.msra.mxu0 0
        %2253 = vmatprep.subr.bf16.mxu0 0
        %2254 = vmatpush1.bf16.msra.mxu0 0
        %2255 = vmatprep.subr.bf16.mxu0 0
        %2256 = vmatpush1.bf16.msra.mxu0 0
        %2257 = vmatprep.subr.bf16.mxu0 0
        %2258 = vmatpush1.bf16.msra.mxu0 0
        %2259 = vmatprep.subr.bf16.mxu0 0
        %2260 = vmatpush1.bf16.msra.mxu0 0
        %2261 = vmatprep.subr.bf16.mxu0 0
        %2262 = vmatpush1.bf16.msra.mxu0 0
        %2263 = vmatprep.subr.bf16.mxu0 0
        %2264 = vmatpush1.bf16.msra.mxu0 0
        %2265 = vmatprep.subr.bf16.mxu0 0
        %2266 = vmatpush1.bf16.msra.mxu0 0
        %2267 = vmatprep.subr.bf16.mxu0 0
        %2268 = vmatpush1.bf16.msra.mxu0 0
        %2269 = vmatprep.subr.bf16.mxu0 0
        %2270 = vmatpush1.bf16.msra.mxu0 0
        %2271 = vmatprep.subr.bf16.mxu0 0
        %2272 = vmatpush1.bf16.msra.mxu0 0
        %2273 = vmatprep.subr.bf16.mxu0 0
        %2274 = vmatpush1.bf16.msra.mxu0 0
        %2275 = vmatprep.mubr.bf16.mxu0 0
        %2276 = vmatmul.mubr.bf16.gmra.mrb[0].mxu0 %v2241
        %v2277 = vpop.f32.mrb[0].mxu0
        %v2278 = vadd.f32 %v2213, %v2277
        %v2279 = vpop.f32.mrb[0].mxu0
        %v2280 = vpop.f32.mrb[0].mxu0
        %v2281 = vadd.f32 %v2213, %v2280
        %v2282 = vpop.f32.mrb[0].mxu0
        %2283 = vdwg.mxu0
        %v2284 = vadd.f32 %v2127, %v2278
        %v2285 = vadd.f32 %v2128, %v2281
        %v2286 = vsel %vm842, %v2284, 0.0
        %2287 = vadd.xlane.f32.xlu0 %v2286
        %v2288 = vpop.xlane.xlu0 %2287
        %v2289 = vsel %vm842, %v2285, 0.0
        %2290 = vadd.xlane.f32.xlu0 %v2289
        %v2291 = vpop.xlane.xlu0 %2290
        %v2292 = vmul.f32 %v2288, %v2090
        %v2293 = vmul.f32 %v2291, %v2090
        %v2294 = vsub.f32 %v2284, %v2292
        %v2295 = vsub.f32 %v2285, %v2293
        %v2296 = vmul.f32 %v2294, %v2294
        %v2297 = vmul.f32 %v2295, %v2295
        %v2298 = vsel %vm842, %v2296, 0.0
        %2299 = vadd.xlane.f32.xlu0 %v2298
        %v2300 = vpop.xlane.xlu0 %2299
        %v2301 = vsel %vm842, %v2297, 0.0
        %2302 = vadd.xlane.f32.xlu0 %v2301
        %v2303 = vpop.xlane.xlu0 %2302
        %v2304 = vmul.f32 %v2300, %v2090
        %v2305 = vmul.f32 %v2303, %v2090
        %v2306 = vadd.f32 %v2304, 1e-05
        %v2307 = vadd.f32 %v2305, 1e-05
        %v2308 = vrsqrt.pop %v2306
        %v2309 = vrsqrt.pop %v2307
        %v2310 = vmul.f32 %v2294, %v2308
        %v2311 = vmul.f32 %v2295, %v2309
        %v2312 = vld [vmem:[#allocation20] sm:$0x1]
        %v2314 = vlaneseq
        %v2315 = vshrl.u32 %v2314, 7
        %v2316 = vsub.s32 0, %v2315
        %v2317 = vrot.slane %v2312, %v2316
        %v2319 = vmul.f32 %v2310, %v2317
        %v2320 = vmul.f32 %v2311, %v2317
        %v2321 = vld [vmem:[#allocation22] sm:$0x1]
        %v2323 = vlaneseq
        %v2324 = vshrl.u32 %v2323, 7
        %v2325 = vsub.s32 0, %v2324
        %v2326 = vrot.slane %v2321, %v2325
        %v2328 = vadd.f32 %v2319, %v2326
        %v2329 = vadd.f32 %v2320, %v2326
        %2330 = vst.msk [vmem:[%s807] sm:$0xff] %vm842, %v2328
        %2331 = vst.msk [vmem:[%s807 + $0x8] sm:$0xff] %vm842, %v2329
        %s2332 = sand.u32 %s475, 1
        %s2333 = scalar_lea.sflag [#allocation4], %s2332
        %s2334 = sand.u32 %s475, 1
        %s2335 = smul.addr %s2334, 16
        %s2336 = scalar_lea.vmem [#allocation25], %s2335
        // Predicated region
        $region157: #{tpu_custom_call.1} parent=99 // pred_check
          %p2337 = pneg %p485
        $region158: #{tpu_custom_call.1} parent=99 // pred_check_branch
          %2339 = sbr.rel (%p2337) target = $region160
        $region159: #{tpu_custom_call.1} parent=99 // pred_region
          %s2340 = smul.u32 2, %s42
          %s2342 = ssub.s32 256, 256
          %2343 = vsyncadd %s2333, %s2342
          %s2344 = smul.addr %s2340, 128
          %s2345 = scalar_lea.hbm %s20, %s2344
          %s2346 = sshll.u32 %s2336, 4
          %s2347 = int_to_ptr.vmem [resolvable:$true] %s2346
          %2352 = dma.vmem_to_hbm [thread:$0]  %s2347, 256, %s2345, %s2333, 128, 128, 8
        $region160: #{tpu_custom_call.1} parent=99 // pred_fallthru
          _
      $region100: #{tpu_custom_call.1} parent=5 // pred_fallthru
        _
      %p2353 = scmp.le.s32.totalorder 2, %s37
      // Predicated region
      $region161: #{tpu_custom_call.1} parent=5 // pred_check
        %p2354 = pneg %p2353
      $region162: #{tpu_custom_call.1} parent=5 // pred_check_branch
        %2356 = sbr.rel (%p2354) target = $region164
      $region163: #{tpu_custom_call.1} parent=5 // pred_region
        %s2357 = ssub.s32 %s37, 2
        // Predicated region
        $region165: #{tpu_custom_call.1} parent=163 // pred_check
          %p2358 = pneg %p491
        $region166: #{tpu_custom_call.1} parent=163 // pred_check_branch
          %2360 = sbr.rel (%p2358) target = $region168
        $region167: #{tpu_custom_call.1} parent=163 // pred_region
          %s2361 = sand.u32 %s476, 1
          %s2362 = scalar_lea.sflag [#allocation4], %s2361
          %s2363 = sand.u32 %s476, 1
          %s2364 = smul.addr %s2363, 16
          %s2365 = scalar_lea.vmem [#allocation25], %s2364
          %2366 = dma.done %s2362, 256
        $region168: #{tpu_custom_call.1} parent=163 // pred_fallthru
          _
      $region164: #{tpu_custom_call.1} parent=5 // pred_fallthru
        _
    $region6: #{tpu_custom_call.1} parent=1 // loop_footer
      %s41 = sadd.s32 1, %s37
    $region7: #{tpu_custom_call.1} parent=1 // loop_footer_branch
      %36 = sbr.rel target = $region3
    $region8: #{tpu_custom_call.1} parent=1 // loop_exit
      _
    %2367 = vsyncpa [#allocation3], 1
    %s2368 = scalar_lea.sflag [#allocation3], 1
    %2369 = vsyncpa %s2368, 1
    %2370 = vsyncpa [#allocation6], 1
    %2371 = vsyncpa [#allocation9], 1
    %2372 = vsyncpa [#allocation12], 1
    %2373 = vsyncpa [#allocation15], 1
    %2374 = vsyncpa [#allocation18], 1
    %2375 = vsyncpa [#allocation21], 1
    %2376 = vsyncpa [#allocation24], 1
    %2377 = vsyncpa [#allocation4], 1
    %s2378 = scalar_lea.sflag [#allocation4], 1
    %2379 = vsyncpa %s2378, 1

</llo_original>
